<compile_context>
chip_gen: v7x
topology: tpu7x:2x2x1
jax: 0.10.0
libtpu: 0.0.40
codegen_flags: <defaults>
</compile_context>

<pallas_src>
import functools

import jax
import jax.numpy as jnp
from jax import lax
from jax.experimental import pallas as pl
from jax.experimental.pallas import tpu as pltpu


def _up_conv_kernel(x_ref, w_ref, b_ref, o_ref, acc_ref, *, wp):
    """Fused nearest-2x-upsample + 3x3 conv (pad=1) for one (batch, H-tile) block.

    x_ref  : (1, 1, (TH+3)*Wp, Cin)  bf16, spatially flattened padded input tile
    w_ref  : (16, Cin, Cout)         bf16, collapsed 2x2 taps per output parity phase
                                     tap index = ((pi*2+pj)*2 + u)*2 + v
    b_ref  : (1, Cout)               f32 bias
    o_ref  : (1, 2, 2, TH*Wp, Cout)  f32 phase-separated output (junk cols included)
    acc_ref: (TH*Wp, Cout)           f32 VMEM accumulator scratch
    """
    m = o_ref.shape[3]                       # TH * Wp
    bias = b_ref[...]                        # (1, Cout), hoisted out of all loops
    for pi in range(2):                      # output row parity
        for pj in range(2):                  # output col parity
            for u in range(2):               # collapsed kernel row tap
                for v in range(2):           # collapsed kernel col tap
                    off = (pi + u) * wp + (pj + v)
                    patch = x_ref[0, 0, pl.ds(off, m), :]                # (m, Cin)
                    tap = w_ref[(pi * 2 + pj) * 4 + u * 2 + v, :, :]     # (Cin, Cout)
                    contrib = jnp.dot(patch, tap,
                                      preferred_element_type=jnp.float32)
                    if u == 0 and v == 0:
                        acc_ref[...] = contrib
                    else:
                        acc_ref[...] += contrib
            o_ref[0, pi, pj, :, :] = (acc_ref[...] + bias).astype(o_ref.dtype)


def up_block_forward(x_nchw, weight_oihw, bias, *, tile_rows=None):
    """UpBlock(with_conv=True, mode='nearest').forward for NCHW input, OIHW weight."""
    N, C, H, W = x_nchw.shape
    Cout = weight_oihw.shape[0]
    Wp = W + 2                                   # padded width (left/right zero pad)

    TH = H if tile_rows is None else tile_rows
    assert H % TH == 0, "tile_rows must divide H"
    n_t = H // TH
    assert TH == H or (TH * Wp) % 8 == 0, "tiled output block must be sublane-aligned"

    # ---- weight prep: collapse upsample+3x3 into 4 phase-specific 2x2 kernels -------
    w_hwio = jnp.transpose(weight_oihw, (2, 3, 1, 0)).astype(jnp.float32)  # (3,3,Ci,Co)
    rows = [
        jnp.stack([w_hwio[0], w_hwio[1] + w_hwio[2]], axis=0),   # pi=0: u -> {kh0},{kh1+kh2}
        jnp.stack([w_hwio[0] + w_hwio[1], w_hwio[2]], axis=0),   # pi=1: u -> {kh0+kh1},{kh2}
    ]
    phase_w = []
    for pi in range(2):
        a = rows[pi]                                             # (2, 3, Cin, Cout) = (u, kw, ...)
        phase_w.append(jnp.stack([a[:, 0], a[:, 1] + a[:, 2]], axis=1))   # pj=0
        phase_w.append(jnp.stack([a[:, 0] + a[:, 1], a[:, 2]], axis=1))   # pj=1
    w_taps = jnp.stack(phase_w, axis=0).reshape(16, C, Cout).astype(jnp.bfloat16)
    b2 = bias.reshape(1, Cout).astype(jnp.float32)

    # ---- input prep: NCHW -> NHWC, zero-pad, bf16, H-tiles with a 3-row halo --------
    x_nhwc = jnp.transpose(x_nchw, (0, 2, 3, 1))                            # (N, H, W, C)
    xp = jnp.pad(x_nhwc, ((0, 0), (1, 2), (1, 1), (0, 0))).astype(jnp.bfloat16)  # (N,H+3,Wp,C)
    row_idx = jnp.arange(n_t)[:, None] * TH + jnp.arange(TH + 3)[None, :]   # (n_t, TH+3)
    x_tiles = xp[:, row_idx]                                                # (N, n_t, TH+3, Wp, C)
    m_in = (TH + 3) * Wp
    m_out = TH * Wp
    x_flat = x_tiles.reshape(N, n_t, m_in, C)

    kernel = functools.partial(_up_conv_kernel, wp=Wp)

    # ---- hot path: Pallas kernel, grid over (batch, H-tile) -------------------------
    out_flat = pl.pallas_call(
        kernel,
        out_shape=jax.ShapeDtypeStruct((N, 2, 2, H * Wp, Cout), jnp.float32),
        grid_spec=pltpu.PrefetchScalarGridSpec(
            num_scalar_prefetch=0,
            grid=(N, n_t),
            in_specs=[
                pl.BlockSpec((1, 1, m_in, C), lambda n, t: (n, t, 0, 0)),
                pl.BlockSpec((16, C, Cout), lambda n, t: (0, 0, 0)),
                pl.BlockSpec((1, Cout), lambda n, t: (0, 0)),
            ],
            out_specs=pl.BlockSpec((1, 2, 2, m_out, Cout),
                                   lambda n, t: (n, 0, 0, t, 0)),
            scratch_shapes=[pltpu.VMEM((m_out, Cout), jnp.float32)],
        ),
        compiler_params=pltpu.CompilerParams(
            dimension_semantics=("parallel", "parallel")),
    )(x_flat, w_taps, b2)

    # ---- glue: drop junk columns, interleave phases, back to NCHW -------------------
    out = out_flat.reshape(N, 2, 2, H, Wp, Cout)[:, :, :, :, :W, :]  # (N,pi,pj,R,s,c)
    out = jnp.transpose(out, (0, 5, 3, 1, 4, 2)).reshape(N, Cout, 2 * H, 2 * W)
    return out


def _reference(x_nchw, weight_oihw, bias):
    """Pure-JAX reference: nearest 2x upsample then Conv2d(3x3, padding=1)."""
    up = jnp.repeat(jnp.repeat(x_nchw, 2, axis=2), 2, axis=3)
    y = lax.conv_general_dilated(
        up, weight_oihw, window_strides=(1, 1), padding=((1, 1), (1, 1)),
        dimension_numbers=("NCHW", "OIHW", "NCHW"),
        precision=lax.Precision.HIGHEST)
    return y + bias[None, :, None, None]


if __name__ == "__main__":
    # Small shapes consistent with the module's forward: NCHW input.
    N, C, H, W = 2, 4, 16, 16

    key = jax.random.PRNGKey(0)
    kx, kw, kb = jax.random.split(key, 3)

    x = jax.random.normal(kx, (N, C, H, W), dtype=jnp.float32)

    # Deterministic Conv2d(C, C, 3) parameter init (Kaiming-uniform-like bounds).
    fan_in = C * 3 * 3
    bound = 1.0 / (fan_in ** 0.5)
    weight = jax.random.uniform(kw, (C, C, 3, 3), jnp.float32, -bound, bound)
    bias = jax.random.uniform(kb, (C,), jnp.float32, -bound, bound)

    # tile_rows=8 exercises the H-tiled (multi-step) grid path on the small demo.
    out = up_block_forward(x, weight, bias, tile_rows=8)
    out = jax.block_until_ready(out)

    ref = jax.block_until_ready(_reference(x, weight, bias))
    assert out.shape == (N, C, 2 * H, 2 * W), out.shape
    # bf16 MXU operands with f32 accumulation -> relaxed (but still tight) tolerance.
    assert jnp.allclose(out, ref, rtol=2e-2, atol=2e-2), (
        "Pallas UpBlock output mismatch vs reference")

    print("KERNEL_OK")
</pallas_src>

<mosaic_0001>
module attributes {stable_mosaic.version = 11 : i64} {
  func.func @_up_conv_kernel(%arg0: i32, %arg1: i32, %arg2: memref<1x1x198x4xbf16, #tpu.memory_space<vmem>>, %arg3: memref<16x4x4xbf16, #tpu.memory_space<vmem>>, %arg4: memref<1x4xf32, #tpu.memory_space<vmem>>, %arg5: memref<1x2x2x144x4xf32, #tpu.memory_space<vmem>>, %arg6: memref<144x4xf32, #tpu.memory_space<vmem>>) attributes {dimension_semantics = [#tpu.dimension_semantics<parallel>, #tpu.dimension_semantics<parallel>], iteration_bounds = array<i64: 2, 2>, scalar_prefetch = 0 : i64, scratch_operands = 1 : i64, tpu.core_type = #tpu.core_type<tc>, window_params = [{transform_indices = @transform_0, window_bounds = array<i64: 1, 1, 198, 4>}, {pipeline_mode = #tpu.pipeline_mode<synchronous>, transform_indices = @transform_1, window_bounds = array<i64: 16, 4, 4>}, {pipeline_mode = #tpu.pipeline_mode<synchronous>, transform_indices = @transform_2, window_bounds = array<i64: 1, 4>}, {transform_indices = @transform_3, window_bounds = array<i64: 1, 2, 2, 144, 4>}]} {
    %c0 = arith.constant 0 : index
    %c0_0 = arith.constant 0 : index
    %0 = vector.load %arg4[%c0, %c0_0] : memref<1x4xf32, #tpu.memory_space<vmem>>, vector<1x4xf32>
    %c0_1 = arith.constant 0 : index
    %c0_2 = arith.constant 0 : index
    %c0_3 = arith.constant 0 : index
    %c0_4 = arith.constant 0 : index
    %1 = vector.load %arg2[%c0_1, %c0_2, %c0_3, %c0_4] : memref<1x1x198x4xbf16, #tpu.memory_space<vmem>>, vector<1x1x144x4xbf16>
    %2 = vector.shape_cast %1 : vector<1x1x144x4xbf16> to vector<144x4xbf16>
    %c0_5 = arith.constant 0 : index
    %c0_6 = arith.constant 0 : index
    %c0_7 = arith.constant 0 : index
    %3 = vector.load %arg3[%c0_5, %c0_6, %c0_7] : memref<16x4x4xbf16, #tpu.memory_space<vmem>>, vector<1x4x4xbf16>
    %4 = vector.shape_cast %3 : vector<1x4x4xbf16> to vector<4x4xbf16>
    %cst = arith.constant dense<0.000000e+00> : vector<144x4xf32>
    %5 = tpu.matmul %2, %4, %cst {dimension_numbers = #tpu.dot_dimension_numbers<[1], [0], [0], [1], [0, 0, 1, 1], [], []>} : vector<144x4xbf16>, vector<4x4xbf16>, vector<144x4xf32> -> vector<144x4xf32>
    %c0_8 = arith.constant 0 : index
    %c0_9 = arith.constant 0 : index
    %6 = vector.load %arg6[%c0_8, %c0_9] : memref<144x4xf32, #tpu.memory_space<vmem>>, vector<144x4xf32>
    tpu.vector_store %arg6[%c0_8, %c0_9], %5 {strides = array<i32>} : memref<144x4xf32, #tpu.memory_space<vmem>>, vector<144x4xf32>,
    %c0_10 = arith.constant 0 : index
    %c0_11 = arith.constant 0 : index
    %c1 = arith.constant 1 : index
    %c0_12 = arith.constant 0 : index
    %7 = vector.load %arg2[%c0_10, %c0_11, %c1, %c0_12] : memref<1x1x198x4xbf16, #tpu.memory_space<vmem>>, vector<1x1x144x4xbf16>
    %8 = vector.shape_cast %7 : vector<1x1x144x4xbf16> to vector<144x4xbf16>
    %c1_13 = arith.constant 1 : index
    %c0_14 = arith.constant 0 : index
    %c0_15 = arith.constant 0 : index
    %9 = vector.load %arg3[%c1_13, %c0_14, %c0_15] : memref<16x4x4xbf16, #tpu.memory_space<vmem>>, vector<1x4x4xbf16>
    %10 = vector.shape_cast %9 : vector<1x4x4xbf16> to vector<4x4xbf16>
    %cst_16 = arith.constant dense<0.000000e+00> : vector<144x4xf32>
    %11 = tpu.matmul %8, %10, %cst_16 {dimension_numbers = #tpu.dot_dimension_numbers<[1], [0], [0], [1], [0, 0, 1, 1], [], []>} : vector<144x4xbf16>, vector<4x4xbf16>, vector<144x4xf32> -> vector<144x4xf32>
    %c0_17 = arith.constant 0 : index
    %c0_18 = arith.constant 0 : index
    %12 = vector.load %arg6[%c0_17, %c0_18] : memref<144x4xf32, #tpu.memory_space<vmem>>, vector<144x4xf32>
    %13 = arith.addf %12, %11 : vector<144x4xf32>
    %c0_19 = arith.constant 0 : index
    %c0_20 = arith.constant 0 : index
    %14 = vector.load %arg6[%c0_19, %c0_20] : memref<144x4xf32, #tpu.memory_space<vmem>>, vector<144x4xf32>
    tpu.vector_store %arg6[%c0_19, %c0_20], %13 {strides = array<i32>} : memref<144x4xf32, #tpu.memory_space<vmem>>, vector<144x4xf32>,
    %c0_21 = arith.constant 0 : index
    %c0_22 = arith.constant 0 : index
    %c18 = arith.constant 18 : index
    %c0_23 = arith.constant 0 : index
    %15 = vector.load %arg2[%c0_21, %c0_22, %c18, %c0_23] : memref<1x1x198x4xbf16, #tpu.memory_space<vmem>>, vector<1x1x144x4xbf16>
    %16 = vector.shape_cast %15 : vector<1x1x144x4xbf16> to vector<144x4xbf16>
    %c2 = arith.constant 2 : index
    %c0_24 = arith.constant 0 : index
    %c0_25 = arith.constant 0 : index
    %17 = vector.load %arg3[%c2, %c0_24, %c0_25] : memref<16x4x4xbf16, #tpu.memory_space<vmem>>, vector<1x4x4xbf16>
    %18 = vector.shape_cast %17 : vector<1x4x4xbf16> to vector<4x4xbf16>
    %cst_26 = arith.constant dense<0.000000e+00> : vector<144x4xf32>
    %19 = tpu.matmul %16, %18, %cst_26 {dimension_numbers = #tpu.dot_dimension_numbers<[1], [0], [0], [1], [0, 0, 1, 1], [], []>} : vector<144x4xbf16>, vector<4x4xbf16>, vector<144x4xf32> -> vector<144x4xf32>
    %c0_27 = arith.constant 0 : index
    %c0_28 = arith.constant 0 : index
    %20 = vector.load %arg6[%c0_27, %c0_28] : memref<144x4xf32, #tpu.memory_space<vmem>>, vector<144x4xf32>
    %21 = arith.addf %20, %19 : vector<144x4xf32>
    %c0_29 = arith.constant 0 : index
    %c0_30 = arith.constant 0 : index
    %22 = vector.load %arg6[%c0_29, %c0_30] : memref<144x4xf32, #tpu.memory_space<vmem>>, vector<144x4xf32>
    tpu.vector_store %arg6[%c0_29, %c0_30], %21 {strides = array<i32>} : memref<144x4xf32, #tpu.memory_space<vmem>>, vector<144x4xf32>,
    %c0_31 = arith.constant 0 : index
    %c0_32 = arith.constant 0 : index
    %c19 = arith.constant 19 : index
    %c0_33 = arith.constant 0 : index
    %23 = vector.load %arg2[%c0_31, %c0_32, %c19, %c0_33] : memref<1x1x198x4xbf16, #tpu.memory_space<vmem>>, vector<1x1x144x4xbf16>
    %24 = vector.shape_cast %23 : vector<1x1x144x4xbf16> to vector<144x4xbf16>
    %c3 = arith.constant 3 : index
    %c0_34 = arith.constant 0 : index
    %c0_35 = arith.constant 0 : index
    %25 = vector.load %arg3[%c3, %c0_34, %c0_35] : memref<16x4x4xbf16, #tpu.memory_space<vmem>>, vector<1x4x4xbf16>
    %26 = vector.shape_cast %25 : vector<1x4x4xbf16> to vector<4x4xbf16>
    %cst_36 = arith.constant dense<0.000000e+00> : vector<144x4xf32>
    %27 = tpu.matmul %24, %26, %cst_36 {dimension_numbers = #tpu.dot_dimension_numbers<[1], [0], [0], [1], [0, 0, 1, 1], [], []>} : vector<144x4xbf16>, vector<4x4xbf16>, vector<144x4xf32> -> vector<144x4xf32>
    %c0_37 = arith.constant 0 : index
    %c0_38 = arith.constant 0 : index
    %28 = vector.load %arg6[%c0_37, %c0_38] : memref<144x4xf32, #tpu.memory_space<vmem>>, vector<144x4xf32>
    %29 = arith.addf %28, %27 : vector<144x4xf32>
    %c0_39 = arith.constant 0 : index
    %c0_40 = arith.constant 0 : index
    %30 = vector.load %arg6[%c0_39, %c0_40] : memref<144x4xf32, #tpu.memory_space<vmem>>, vector<144x4xf32>
    tpu.vector_store %arg6[%c0_39, %c0_40], %29 {strides = array<i32>} : memref<144x4xf32, #tpu.memory_space<vmem>>, vector<144x4xf32>,
    %c0_41 = arith.constant 0 : index
    %c0_42 = arith.constant 0 : index
    %31 = vector.load %arg6[%c0_41, %c0_42] : memref<144x4xf32, #tpu.memory_space<vmem>>, vector<144x4xf32>
    %32 = vector.broadcast %0 : vector<1x4xf32> to vector<144x4xf32>
    %33 = arith.addf %31, %32 : vector<144x4xf32>
    %c0_43 = arith.constant 0 : index
    %c0_44 = arith.constant 0 : index
    %c0_45 = arith.constant 0 : index
    %c0_46 = arith.constant 0 : index
    %c0_47 = arith.constant 0 : index
    %34 = vector.load %arg5[%c0_43, %c0_44, %c0_45, %c0_46, %c0_47] : memref<1x2x2x144x4xf32, #tpu.memory_space<vmem>>, vector<1x1x1x144x4xf32>
    %35 = vector.shape_cast %34 : vector<1x1x1x144x4xf32> to vector<144x4xf32>
    %36 = vector.shape_cast %33 : vector<144x4xf32> to vector<1x1x1x144x4xf32>
    tpu.vector_store %arg5[%c0_43, %c0_44, %c0_45, %c0_46, %c0_47], %36 {strides = array<i32>} : memref<1x2x2x144x4xf32, #tpu.memory_space<vmem>>, vector<1x1x1x144x4xf32>,
    %c0_48 = arith.constant 0 : index
    %c0_49 = arith.constant 0 : index
    %c1_50 = arith.constant 1 : index
    %c0_51 = arith.constant 0 : index
    %37 = vector.load %arg2[%c0_48, %c0_49, %c1_50, %c0_51] : memref<1x1x198x4xbf16, #tpu.memory_space<vmem>>, vector<1x1x144x4xbf16>
    %38 = vector.shape_cast %37 : vector<1x1x144x4xbf16> to vector<144x4xbf16>
    %c4 = arith.constant 4 : index
    %c0_52 = arith.constant 0 : index
    %c0_53 = arith.constant 0 : index
    %39 = vector.load %arg3[%c4, %c0_52, %c0_53] : memref<16x4x4xbf16, #tpu.memory_space<vmem>>, vector<1x4x4xbf16>
    %40 = vector.shape_cast %39 : vector<1x4x4xbf16> to vector<4x4xbf16>
    %cst_54 = arith.constant dense<0.000000e+00> : vector<144x4xf32>
    %41 = tpu.matmul %38, %40, %cst_54 {dimension_numbers = #tpu.dot_dimension_numbers<[1], [0], [0], [1], [0, 0, 1, 1], [], []>} : vector<144x4xbf16>, vector<4x4xbf16>, vector<144x4xf32> -> vector<144x4xf32>
    %c0_55 = arith.constant 0 : index
    %c0_56 = arith.constant 0 : index
    %42 = vector.load %arg6[%c0_55, %c0_56] : memref<144x4xf32, #tpu.memory_space<vmem>>, vector<144x4xf32>
    tpu.vector_store %arg6[%c0_55, %c0_56], %41 {strides = array<i32>} : memref<144x4xf32, #tpu.memory_space<vmem>>, vector<144x4xf32>,
    %c0_57 = arith.constant 0 : index
    %c0_58 = arith.constant 0 : index
    %c2_59 = arith.constant 2 : index
    %c0_60 = arith.constant 0 : index
    %43 = vector.load %arg2[%c0_57, %c0_58, %c2_59, %c0_60] : memref<1x1x198x4xbf16, #tpu.memory_space<vmem>>, vector<1x1x144x4xbf16>
    %44 = vector.shape_cast %43 : vector<1x1x144x4xbf16> to vector<144x4xbf16>
    %c5 = arith.constant 5 : index
    %c0_61 = arith.constant 0 : index
    %c0_62 = arith.constant 0 : index
    %45 = vector.load %arg3[%c5, %c0_61, %c0_62] : memref<16x4x4xbf16, #tpu.memory_space<vmem>>, vector<1x4x4xbf16>
    %46 = vector.shape_cast %45 : vector<1x4x4xbf16> to vector<4x4xbf16>
    %cst_63 = arith.constant dense<0.000000e+00> : vector<144x4xf32>
    %47 = tpu.matmul %44, %46, %cst_63 {dimension_numbers = #tpu.dot_dimension_numbers<[1], [0], [0], [1], [0, 0, 1, 1], [], []>} : vector<144x4xbf16>, vector<4x4xbf16>, vector<144x4xf32> -> vector<144x4xf32>
    %c0_64 = arith.constant 0 : index
    %c0_65 = arith.constant 0 : index
    %48 = vector.load %arg6[%c0_64, %c0_65] : memref<144x4xf32, #tpu.memory_space<vmem>>, vector<144x4xf32>
    %49 = arith.addf %48, %47 : vector<144x4xf32>
    %c0_66 = arith.constant 0 : index
    %c0_67 = arith.constant 0 : index
    %50 = vector.load %arg6[%c0_66, %c0_67] : memref<144x4xf32, #tpu.memory_space<vmem>>, vector<144x4xf32>
    tpu.vector_store %arg6[%c0_66, %c0_67], %49 {strides = array<i32>} : memref<144x4xf32, #tpu.memory_space<vmem>>, vector<144x4xf32>,
    %c0_68 = arith.constant 0 : index
    %c0_69 = arith.constant 0 : index
    %c19_70 = arith.constant 19 : index
    %c0_71 = arith.constant 0 : index
    %51 = vector.load %arg2[%c0_68, %c0_69, %c19_70, %c0_71] : memref<1x1x198x4xbf16, #tpu.memory_space<vmem>>, vector<1x1x144x4xbf16>
    %52 = vector.shape_cast %51 : vector<1x1x144x4xbf16> to vector<144x4xbf16>
    %c6 = arith.constant 6 : index
    %c0_72 = arith.constant 0 : index
    %c0_73 = arith.constant 0 : index
    %53 = vector.load %arg3[%c6, %c0_72, %c0_73] : memref<16x4x4xbf16, #tpu.memory_space<vmem>>, vector<1x4x4xbf16>
    %54 = vector.shape_cast %53 : vector<1x4x4xbf16> to vector<4x4xbf16>
    %cst_74 = arith.constant dense<0.000000e+00> : vector<144x4xf32>
    %55 = tpu.matmul %52, %54, %cst_74 {dimension_numbers = #tpu.dot_dimension_numbers<[1], [0], [0], [1], [0, 0, 1, 1], [], []>} : vector<144x4xbf16>, vector<4x4xbf16>, vector<144x4xf32> -> vector<144x4xf32>
    %c0_75 = arith.constant 0 : index
    %c0_76 = arith.constant 0 : index
    %56 = vector.load %arg6[%c0_75, %c0_76] : memref<144x4xf32, #tpu.memory_space<vmem>>, vector<144x4xf32>
    %57 = arith.addf %56, %55 : vector<144x4xf32>
    %c0_77 = arith.constant 0 : index
    %c0_78 = arith.constant 0 : index
    %58 = vector.load %arg6[%c0_77, %c0_78] : memref<144x4xf32, #tpu.memory_space<vmem>>, vector<144x4xf32>
    tpu.vector_store %arg6[%c0_77, %c0_78], %57 {strides = array<i32>} : memref<144x4xf32, #tpu.memory_space<vmem>>, vector<144x4xf32>,
    %c0_79 = arith.constant 0 : index
    %c0_80 = arith.constant 0 : index
    %c20 = arith.constant 20 : index
    %c0_81 = arith.constant 0 : index
    %59 = vector.load %arg2[%c0_79, %c0_80, %c20, %c0_81] : memref<1x1x198x4xbf16, #tpu.memory_space<vmem>>, vector<1x1x144x4xbf16>
    %60 = vector.shape_cast %59 : vector<1x1x144x4xbf16> to vector<144x4xbf16>
    %c7 = arith.constant 7 : index
    %c0_82 = arith.constant 0 : index
    %c0_83 = arith.constant 0 : index
    %61 = vector.load %arg3[%c7, %c0_82, %c0_83] : memref<16x4x4xbf16, #tpu.memory_space<vmem>>, vector<1x4x4xbf16>
    %62 = vector.shape_cast %61 : vector<1x4x4xbf16> to vector<4x4xbf16>
    %cst_84 = arith.constant dense<0.000000e+00> : vector<144x4xf32>
    %63 = tpu.matmul %60, %62, %cst_84 {dimension_numbers = #tpu.dot_dimension_numbers<[1], [0], [0], [1], [0, 0, 1, 1], [], []>} : vector<144x4xbf16>, vector<4x4xbf16>, vector<144x4xf32> -> vector<144x4xf32>
    %c0_85 = arith.constant 0 : index
    %c0_86 = arith.constant 0 : index
    %64 = vector.load %arg6[%c0_85, %c0_86] : memref<144x4xf32, #tpu.memory_space<vmem>>, vector<144x4xf32>
    %65 = arith.addf %64, %63 : vector<144x4xf32>
    %c0_87 = arith.constant 0 : index
    %c0_88 = arith.constant 0 : index
    %66 = vector.load %arg6[%c0_87, %c0_88] : memref<144x4xf32, #tpu.memory_space<vmem>>, vector<144x4xf32>
    tpu.vector_store %arg6[%c0_87, %c0_88], %65 {strides = array<i32>} : memref<144x4xf32, #tpu.memory_space<vmem>>, vector<144x4xf32>,
    %c0_89 = arith.constant 0 : index
    %c0_90 = arith.constant 0 : index
    %67 = vector.load %arg6[%c0_89, %c0_90] : memref<144x4xf32, #tpu.memory_space<vmem>>, vector<144x4xf32>
    %68 = vector.broadcast %0 : vector<1x4xf32> to vector<144x4xf32>
    %69 = arith.addf %67, %68 : vector<144x4xf32>
    %c0_91 = arith.constant 0 : index
    %c0_92 = arith.constant 0 : index
    %c1_93 = arith.constant 1 : index
    %c0_94 = arith.constant 0 : index
    %c0_95 = arith.constant 0 : index
    %70 = vector.load %arg5[%c0_91, %c0_92, %c1_93, %c0_94, %c0_95] : memref<1x2x2x144x4xf32, #tpu.memory_space<vmem>>, vector<1x1x1x144x4xf32>
    %71 = vector.shape_cast %70 : vector<1x1x1x144x4xf32> to vector<144x4xf32>
    %72 = vector.shape_cast %69 : vector<144x4xf32> to vector<1x1x1x144x4xf32>
    tpu.vector_store %arg5[%c0_91, %c0_92, %c1_93, %c0_94, %c0_95], %72 {strides = array<i32>} : memref<1x2x2x144x4xf32, #tpu.memory_space<vmem>>, vector<1x1x1x144x4xf32>,
    %c0_96 = arith.constant 0 : index
    %c0_97 = arith.constant 0 : index
    %c18_98 = arith.constant 18 : index
    %c0_99 = arith.constant 0 : index
    %73 = vector.load %arg2[%c0_96, %c0_97, %c18_98, %c0_99] : memref<1x1x198x4xbf16, #tpu.memory_space<vmem>>, vector<1x1x144x4xbf16>
    %74 = vector.shape_cast %73 : vector<1x1x144x4xbf16> to vector<144x4xbf16>
    %c8 = arith.constant 8 : index
    %c0_100 = arith.constant 0 : index
    %c0_101 = arith.constant 0 : index
    %75 = vector.load %arg3[%c8, %c0_100, %c0_101] : memref<16x4x4xbf16, #tpu.memory_space<vmem>>, vector<1x4x4xbf16>
    %76 = vector.shape_cast %75 : vector<1x4x4xbf16> to vector<4x4xbf16>
    %cst_102 = arith.constant dense<0.000000e+00> : vector<144x4xf32>
    %77 = tpu.matmul %74, %76, %cst_102 {dimension_numbers = #tpu.dot_dimension_numbers<[1], [0], [0], [1], [0, 0, 1, 1], [], []>} : vector<144x4xbf16>, vector<4x4xbf16>, vector<144x4xf32> -> vector<144x4xf32>
    %c0_103 = arith.constant 0 : index
    %c0_104 = arith.constant 0 : index
    %78 = vector.load %arg6[%c0_103, %c0_104] : memref<144x4xf32, #tpu.memory_space<vmem>>, vector<144x4xf32>
    tpu.vector_store %arg6[%c0_103, %c0_104], %77 {strides = array<i32>} : memref<144x4xf32, #tpu.memory_space<vmem>>, vector<144x4xf32>,
    %c0_105 = arith.constant 0 : index
    %c0_106 = arith.constant 0 : index
    %c19_107 = arith.constant 19 : index
    %c0_108 = arith.constant 0 : index
    %79 = vector.load %arg2[%c0_105, %c0_106, %c19_107, %c0_108] : memref<1x1x198x4xbf16, #tpu.memory_space<vmem>>, vector<1x1x144x4xbf16>
    %80 = vector.shape_cast %79 : vector<1x1x144x4xbf16> to vector<144x4xbf16>
    %c9 = arith.constant 9 : index
    %c0_109 = arith.constant 0 : index
    %c0_110 = arith.constant 0 : index
    %81 = vector.load %arg3[%c9, %c0_109, %c0_110] : memref<16x4x4xbf16, #tpu.memory_space<vmem>>, vector<1x4x4xbf16>
    %82 = vector.shape_cast %81 : vector<1x4x4xbf16> to vector<4x4xbf16>
    %cst_111 = arith.constant dense<0.000000e+00> : vector<144x4xf32>
    %83 = tpu.matmul %80, %82, %cst_111 {dimension_numbers = #tpu.dot_dimension_numbers<[1], [0], [0], [1], [0, 0, 1, 1], [], []>} : vector<144x4xbf16>, vector<4x4xbf16>, vector<144x4xf32> -> vector<144x4xf32>
    %c0_112 = arith.constant 0 : index
    %c0_113 = arith.constant 0 : index
    %84 = vector.load %arg6[%c0_112, %c0_113] : memref<144x4xf32, #tpu.memory_space<vmem>>, vector<144x4xf32>
    %85 = arith.addf %84, %83 : vector<144x4xf32>
    %c0_114 = arith.constant 0 : index
    %c0_115 = arith.constant 0 : index
    %86 = vector.load %arg6[%c0_114, %c0_115] : memref<144x4xf32, #tpu.memory_space<vmem>>, vector<144x4xf32>
    tpu.vector_store %arg6[%c0_114, %c0_115], %85 {strides = array<i32>} : memref<144x4xf32, #tpu.memory_space<vmem>>, vector<144x4xf32>,
    %c0_116 = arith.constant 0 : index
    %c0_117 = arith.constant 0 : index
    %c36 = arith.constant 36 : index
    %c0_118 = arith.constant 0 : index
    %87 = vector.load %arg2[%c0_116, %c0_117, %c36, %c0_118] : memref<1x1x198x4xbf16, #tpu.memory_space<vmem>>, vector<1x1x144x4xbf16>
    %88 = vector.shape_cast %87 : vector<1x1x144x4xbf16> to vector<144x4xbf16>
    %c10 = arith.constant 10 : index
    %c0_119 = arith.constant 0 : index
    %c0_120 = arith.constant 0 : index
    %89 = vector.load %arg3[%c10, %c0_119, %c0_120] : memref<16x4x4xbf16, #tpu.memory_space<vmem>>, vector<1x4x4xbf16>
    %90 = vector.shape_cast %89 : vector<1x4x4xbf16> to vector<4x4xbf16>
    %cst_121 = arith.constant dense<0.000000e+00> : vector<144x4xf32>
    %91 = tpu.matmul %88, %90, %cst_121 {dimension_numbers = #tpu.dot_dimension_numbers<[1], [0], [0], [1], [0, 0, 1, 1], [], []>} : vector<144x4xbf16>, vector<4x4xbf16>, vector<144x4xf32> -> vector<144x4xf32>
    %c0_122 = arith.constant 0 : index
    %c0_123 = arith.constant 0 : index
    %92 = vector.load %arg6[%c0_122, %c0_123] : memref<144x4xf32, #tpu.memory_space<vmem>>, vector<144x4xf32>
    %93 = arith.addf %92, %91 : vector<144x4xf32>
    %c0_124 = arith.constant 0 : index
    %c0_125 = arith.constant 0 : index
    %94 = vector.load %arg6[%c0_124, %c0_125] : memref<144x4xf32, #tpu.memory_space<vmem>>, vector<144x4xf32>
    tpu.vector_store %arg6[%c0_124, %c0_125], %93 {strides = array<i32>} : memref<144x4xf32, #tpu.memory_space<vmem>>, vector<144x4xf32>,
    %c0_126 = arith.constant 0 : index
    %c0_127 = arith.constant 0 : index
    %c37 = arith.constant 37 : index
    %c0_128 = arith.constant 0 : index
    %95 = vector.load %arg2[%c0_126, %c0_127, %c37, %c0_128] : memref<1x1x198x4xbf16, #tpu.memory_space<vmem>>, vector<1x1x144x4xbf16>
    %96 = vector.shape_cast %95 : vector<1x1x144x4xbf16> to vector<144x4xbf16>
    %c11 = arith.constant 11 : index
    %c0_129 = arith.constant 0 : index
    %c0_130 = arith.constant 0 : index
    %97 = vector.load %arg3[%c11, %c0_129, %c0_130] : memref<16x4x4xbf16, #tpu.memory_space<vmem>>, vector<1x4x4xbf16>
    %98 = vector.shape_cast %97 : vector<1x4x4xbf16> to vector<4x4xbf16>
    %cst_131 = arith.constant dense<0.000000e+00> : vector<144x4xf32>
    %99 = tpu.matmul %96, %98, %cst_131 {dimension_numbers = #tpu.dot_dimension_numbers<[1], [0], [0], [1], [0, 0, 1, 1], [], []>} : vector<144x4xbf16>, vector<4x4xbf16>, vector<144x4xf32> -> vector<144x4xf32>
    %c0_132 = arith.constant 0 : index
    %c0_133 = arith.constant 0 : index
    %100 = vector.load %arg6[%c0_132, %c0_133] : memref<144x4xf32, #tpu.memory_space<vmem>>, vector<144x4xf32>
    %101 = arith.addf %100, %99 : vector<144x4xf32>
    %c0_134 = arith.constant 0 : index
    %c0_135 = arith.constant 0 : index
    %102 = vector.load %arg6[%c0_134, %c0_135] : memref<144x4xf32, #tpu.memory_space<vmem>>, vector<144x4xf32>
    tpu.vector_store %arg6[%c0_134, %c0_135], %101 {strides = array<i32>} : memref<144x4xf32, #tpu.memory_space<vmem>>, vector<144x4xf32>,
    %c0_136 = arith.constant 0 : index
    %c0_137 = arith.constant 0 : index
    %103 = vector.load %arg6[%c0_136, %c0_137] : memref<144x4xf32, #tpu.memory_space<vmem>>, vector<144x4xf32>
    %104 = vector.broadcast %0 : vector<1x4xf32> to vector<144x4xf32>
    %105 = arith.addf %103, %104 : vector<144x4xf32>
    %c0_138 = arith.constant 0 : index
    %c1_139 = arith.constant 1 : index
    %c0_140 = arith.constant 0 : index
    %c0_141 = arith.constant 0 : index
    %c0_142 = arith.constant 0 : index
    %106 = vector.load %arg5[%c0_138, %c1_139, %c0_140, %c0_141, %c0_142] : memref<1x2x2x144x4xf32, #tpu.memory_space<vmem>>, vector<1x1x1x144x4xf32>
    %107 = vector.shape_cast %106 : vector<1x1x1x144x4xf32> to vector<144x4xf32>
    %108 = vector.shape_cast %105 : vector<144x4xf32> to vector<1x1x1x144x4xf32>
    tpu.vector_store %arg5[%c0_138, %c1_139, %c0_140, %c0_141, %c0_142], %108 {strides = array<i32>} : memref<1x2x2x144x4xf32, #tpu.memory_space<vmem>>, vector<1x1x1x144x4xf32>,
    %c0_143 = arith.constant 0 : index
    %c0_144 = arith.constant 0 : index
    %c19_145 = arith.constant 19 : index
    %c0_146 = arith.constant 0 : index
    %109 = vector.load %arg2[%c0_143, %c0_144, %c19_145, %c0_146] : memref<1x1x198x4xbf16, #tpu.memory_space<vmem>>, vector<1x1x144x4xbf16>
    %110 = vector.shape_cast %109 : vector<1x1x144x4xbf16> to vector<144x4xbf16>
    %c12 = arith.constant 12 : index
    %c0_147 = arith.constant 0 : index
    %c0_148 = arith.constant 0 : index
    %111 = vector.load %arg3[%c12, %c0_147, %c0_148] : memref<16x4x4xbf16, #tpu.memory_space<vmem>>, vector<1x4x4xbf16>
    %112 = vector.shape_cast %111 : vector<1x4x4xbf16> to vector<4x4xbf16>
    %cst_149 = arith.constant dense<0.000000e+00> : vector<144x4xf32>
    %113 = tpu.matmul %110, %112, %cst_149 {dimension_numbers = #tpu.dot_dimension_numbers<[1], [0], [0], [1], [0, 0, 1, 1], [], []>} : vector<144x4xbf16>, vector<4x4xbf16>, vector<144x4xf32> -> vector<144x4xf32>
    %c0_150 = arith.constant 0 : index
    %c0_151 = arith.constant 0 : index
    %114 = vector.load %arg6[%c0_150, %c0_151] : memref<144x4xf32, #tpu.memory_space<vmem>>, vector<144x4xf32>
    tpu.vector_store %arg6[%c0_150, %c0_151], %113 {strides = array<i32>} : memref<144x4xf32, #tpu.memory_space<vmem>>, vector<144x4xf32>,
    %c0_152 = arith.constant 0 : index
    %c0_153 = arith.constant 0 : index
    %c20_154 = arith.constant 20 : index
    %c0_155 = arith.constant 0 : index
    %115 = vector.load %arg2[%c0_152, %c0_153, %c20_154, %c0_155] : memref<1x1x198x4xbf16, #tpu.memory_space<vmem>>, vector<1x1x144x4xbf16>
    %116 = vector.shape_cast %115 : vector<1x1x144x4xbf16> to vector<144x4xbf16>
    %c13 = arith.constant 13 : index
    %c0_156 = arith.constant 0 : index
    %c0_157 = arith.constant 0 : index
    %117 = vector.load %arg3[%c13, %c0_156, %c0_157] : memref<16x4x4xbf16, #tpu.memory_space<vmem>>, vector<1x4x4xbf16>
    %118 = vector.shape_cast %117 : vector<1x4x4xbf16> to vector<4x4xbf16>
    %cst_158 = arith.constant dense<0.000000e+00> : vector<144x4xf32>
    %119 = tpu.matmul %116, %118, %cst_158 {dimension_numbers = #tpu.dot_dimension_numbers<[1], [0], [0], [1], [0, 0, 1, 1], [], []>} : vector<144x4xbf16>, vector<4x4xbf16>, vector<144x4xf32> -> vector<144x4xf32>
    %c0_159 = arith.constant 0 : index
    %c0_160 = arith.constant 0 : index
    %120 = vector.load %arg6[%c0_159, %c0_160] : memref<144x4xf32, #tpu.memory_space<vmem>>, vector<144x4xf32>
    %121 = arith.addf %120, %119 : vector<144x4xf32>
    %c0_161 = arith.constant 0 : index
    %c0_162 = arith.constant 0 : index
    %122 = vector.load %arg6[%c0_161, %c0_162] : memref<144x4xf32, #tpu.memory_space<vmem>>, vector<144x4xf32>
    tpu.vector_store %arg6[%c0_161, %c0_162], %121 {strides = array<i32>} : memref<144x4xf32, #tpu.memory_space<vmem>>, vector<144x4xf32>,
    %c0_163 = arith.constant 0 : index
    %c0_164 = arith.constant 0 : index
    %c37_165 = arith.constant 37 : index
    %c0_166 = arith.constant 0 : index
    %123 = vector.load %arg2[%c0_163, %c0_164, %c37_165, %c0_166] : memref<1x1x198x4xbf16, #tpu.memory_space<vmem>>, vector<1x1x144x4xbf16>
    %124 = vector.shape_cast %123 : vector<1x1x144x4xbf16> to vector<144x4xbf16>
    %c14 = arith.constant 14 : index
    %c0_167 = arith.constant 0 : index
    %c0_168 = arith.constant 0 : index
    %125 = vector.load %arg3[%c14, %c0_167, %c0_168] : memref<16x4x4xbf16, #tpu.memory_space<vmem>>, vector<1x4x4xbf16>
    %126 = vector.shape_cast %125 : vector<1x4x4xbf16> to vector<4x4xbf16>
    %cst_169 = arith.constant dense<0.000000e+00> : vector<144x4xf32>
    %127 = tpu.matmul %124, %126, %cst_169 {dimension_numbers = #tpu.dot_dimension_numbers<[1], [0], [0], [1], [0, 0, 1, 1], [], []>} : vector<144x4xbf16>, vector<4x4xbf16>, vector<144x4xf32> -> vector<144x4xf32>
    %c0_170 = arith.constant 0 : index
    %c0_171 = arith.constant 0 : index
    %128 = vector.load %arg6[%c0_170, %c0_171] : memref<144x4xf32, #tpu.memory_space<vmem>>, vector<144x4xf32>
    %129 = arith.addf %128, %127 : vector<144x4xf32>
    %c0_172 = arith.constant 0 : index
    %c0_173 = arith.constant 0 : index
    %130 = vector.load %arg6[%c0_172, %c0_173] : memref<144x4xf32, #tpu.memory_space<vmem>>, vector<144x4xf32>
    tpu.vector_store %arg6[%c0_172, %c0_173], %129 {strides = array<i32>} : memref<144x4xf32, #tpu.memory_space<vmem>>, vector<144x4xf32>,
    %c0_174 = arith.constant 0 : index
    %c0_175 = arith.constant 0 : index
    %c38 = arith.constant 38 : index
    %c0_176 = arith.constant 0 : index
    %131 = vector.load %arg2[%c0_174, %c0_175, %c38, %c0_176] : memref<1x1x198x4xbf16, #tpu.memory_space<vmem>>, vector<1x1x144x4xbf16>
    %132 = vector.shape_cast %131 : vector<1x1x144x4xbf16> to vector<144x4xbf16>
    %c15 = arith.constant 15 : index
    %c0_177 = arith.constant 0 : index
    %c0_178 = arith.constant 0 : index
    %133 = vector.load %arg3[%c15, %c0_177, %c0_178] : memref<16x4x4xbf16, #tpu.memory_space<vmem>>, vector<1x4x4xbf16>
    %134 = vector.shape_cast %133 : vector<1x4x4xbf16> to vector<4x4xbf16>
    %cst_179 = arith.constant dense<0.000000e+00> : vector<144x4xf32>
    %135 = tpu.matmul %132, %134, %cst_179 {dimension_numbers = #tpu.dot_dimension_numbers<[1], [0], [0], [1], [0, 0, 1, 1], [], []>} : vector<144x4xbf16>, vector<4x4xbf16>, vector<144x4xf32> -> vector<144x4xf32>
    %c0_180 = arith.constant 0 : index
    %c0_181 = arith.constant 0 : index
    %136 = vector.load %arg6[%c0_180, %c0_181] : memref<144x4xf32, #tpu.memory_space<vmem>>, vector<144x4xf32>
    %137 = arith.addf %136, %135 : vector<144x4xf32>
    %c0_182 = arith.constant 0 : index
    %c0_183 = arith.constant 0 : index
    %138 = vector.load %arg6[%c0_182, %c0_183] : memref<144x4xf32, #tpu.memory_space<vmem>>, vector<144x4xf32>
    tpu.vector_store %arg6[%c0_182, %c0_183], %137 {strides = array<i32>} : memref<144x4xf32, #tpu.memory_space<vmem>>, vector<144x4xf32>,
    %c0_184 = arith.constant 0 : index
    %c0_185 = arith.constant 0 : index
    %139 = vector.load %arg6[%c0_184, %c0_185] : memref<144x4xf32, #tpu.memory_space<vmem>>, vector<144x4xf32>
    %140 = vector.broadcast %0 : vector<1x4xf32> to vector<144x4xf32>
    %141 = arith.addf %139, %140 : vector<144x4xf32>
    %c0_186 = arith.constant 0 : index
    %c1_187 = arith.constant 1 : index
    %c1_188 = arith.constant 1 : index
    %c0_189 = arith.constant 0 : index
    %c0_190 = arith.constant 0 : index
    %142 = vector.load %arg5[%c0_186, %c1_187, %c1_188, %c0_189, %c0_190] : memref<1x2x2x144x4xf32, #tpu.memory_space<vmem>>, vector<1x1x1x144x4xf32>
    %143 = vector.shape_cast %142 : vector<1x1x1x144x4xf32> to vector<144x4xf32>
    %144 = vector.shape_cast %141 : vector<144x4xf32> to vector<1x1x1x144x4xf32>
    tpu.vector_store %arg5[%c0_186, %c1_187, %c1_188, %c0_189, %c0_190], %144 {strides = array<i32>} : memref<1x2x2x144x4xf32, #tpu.memory_space<vmem>>, vector<1x1x1x144x4xf32>,
    return
  }
  func.func @transform_0(%arg0: i32, %arg1: i32) -> (i32, i32, i32, i32) {
    %c0_i32 = arith.constant 0 : i32
    %c0_i32_0 = arith.constant 0 : i32
    %c0_i32_1 = arith.constant 0 : i32
    return %arg0, %arg1, %c0_i32, %c0_i32_0 : i32, i32, i32, i32
  }
  func.func @transform_1(%arg0: i32, %arg1: i32) -> (i32, i32, i32) {
    %c0_i32 = arith.constant 0 : i32
    %c0_i32_0 = arith.constant 0 : i32
    %c0_i32_1 = arith.constant 0 : i32
    %c0_i32_2 = arith.constant 0 : i32
    return %c0_i32, %c0_i32_0, %c0_i32_1 : i32, i32, i32
  }
  func.func @transform_2(%arg0: i32, %arg1: i32) -> (i32, i32) {
    %c0_i32 = arith.constant 0 : i32
    %c0_i32_0 = arith.constant 0 : i32
    %c0_i32_1 = arith.constant 0 : i32
    return %c0_i32, %c0_i32_0 : i32, i32
  }
  func.func @transform_3(%arg0: i32, %arg1: i32) -> (i32, i32, i32, i32, i32) {
    %c0_i32 = arith.constant 0 : i32
    %c0_i32_0 = arith.constant 0 : i32
    %c0_i32_1 = arith.constant 0 : i32
    %c0_i32_2 = arith.constant 0 : i32
    return %arg0, %c0_i32, %c0_i32_0, %arg1, %c0_i32_1 : i32, i32, i32, i32, i32
  }
}

</mosaic_0001>

<llo_original>
// kernel: tpu_custom_call.1
$region0: #{tpu_custom_call.1}
  #allocation0 [shape = 'u32[]', space=smem, size = 0x4, offset = 0x4, fixed_abs, tag = 'smem constant byte address 0x4 - core index']
  #allocation1 [shape = 'u32[144,128]{1,0:T(1,128)}', space=vmem, size = 0x12000, scoped, tag = 'internal scratch']
  #allocation2 [shape = 'f32[144,4]{1,0:T(8,128)}', space=vmem, size = 0x12000, scoped, tag = 'scratch operand']
  %s0 = inlined_call_operand.vmem [shape: bf16[2,2,198,4], index: 0, kind: input, shape index: {}]
  %s1 = inlined_call_operand.vmem [shape: bf16[16,4,4], index: 1, kind: input, shape index: {}]
  %s2 = inlined_call_operand.hbm [shape: f32[1,4], index: 2, kind: input, shape index: {}]
  %s3 = inlined_call_operand.vmem [shape: f32[2,2,2,288,4], index: 3, kind: output, shape index: {}]
  %s4 = sld [smem:[#allocation0]]
  $region83: #{tpu_custom_call.1} parent=0
    _
  %s6 = ssub.s32 1, %s4
  %s7 = scalar_select 0, %s6, %s4
  $region1: #{tpu_custom_call.1} parent=0
    #allocation3 [shape = 'u8[512]{0}', space=vmem, size = 0x400, scoped, tag = 'input window, operand 2, single buffered']
    #allocation4 [shape = 's32[2]{0}', space=sflag, size = 0x8, scoped, tag = 'scoped memory for tpu_custom_call.1']
    #allocation5 [shape = 'u8[589824]{0}', space=vmem, size = 0x90000, scoped, tag = 'output window, operand 0']
    %8 = vsyncpa [#allocation4], 0
    loop: start=0, step=1, limit=6
    $region2: #{tpu_custom_call.1} parent=1 // loop_pre_header
      _
    $region3: #{tpu_custom_call.1} parent=1 // loop_header
      %s10 = sphi 0, %s14
      %p11 = scmp.ge.s32.totalorder %s10, 6
      %s17 = sphi 0, %s29
      %s18 = sphi 0, %s25
      %s19 = sphi 0, %s17
      %s20 = sphi 0, %s18
      %s21 = sphi 0, %s19
      %s22 = sphi 0, %s20
      %s34 = sphi 0, %s36
      %s37 = sphi 0, %s34
      %s38 = sphi 0, %s37
      %s54 = sphi 0, %s38
      %s58 = sphi 0, %s58
      %s60 = sphi 0, %s58
      %s61 = sphi 0, %s60
      %s75 = sphi 0, %s61
      %s79 = sphi 0, %s79
      %s81 = sphi 0, %s79
      %s82 = sphi 0, %s81
      %s96 = sphi 0, %s82
      %s104 = sphi 0, %s106
      %s107 = sphi 0, %s104
      %s108 = sphi 0, %s107
      %s124 = sphi 0, %s108
    $region4: #{tpu_custom_call.1} parent=1 // loop_header_branch
      %13 = sbr.rel (%p11) target = $region8
    $region5: #{tpu_custom_call.1} parent=1 // loop_body
      %s15 = ssub.s32 %s10, 1
      %s16 = ssub.s32 %s10, 2
      %s23 = sadd.s32 1, %s18
      %p24 = scmp.ge.s32.totalorder %s23, 2
      %s25 = scalar_select %p24, 0, %s23
      %s26 = sadd.s32 1, %s17
      %s27 = scalar_select %p24, %s26, %s17
      %p28 = scmp.ge.s32.totalorder %s27, 2
      %s29 = scalar_select %p28, 0, %s27
      %s30 = ssub.s32 %s17, %s29
      %s31 = ssub.s32 %s18, %s25
      %s32 = sor.u32 %s30, %s31
      %p33 = scmp.eq.s32.totalorder %s32, 0
      %s35 = sadd.s32 %s34, 1
      %s36 = scalar_select %p33, %s34, %s35
      %p39 = pneg %p33
      %p40 = scmp.eq.s32.totalorder %s10, 3
      %p41 = por %p39, %p40
      %p42 = scmp.ne.s32.totalorder %s34, %s37
      %p43 = scmp.eq.s32.totalorder %s10, 0
      %p44 = por %p42, %p43
      %p45 = scmp.ne.s32.totalorder %s34, %s37
      %p46 = scmp.eq.s32.totalorder %s15, 3
      %p47 = por %p45, %p46
      %p48 = scmp.ne.s32.totalorder %s37, %s38
      %p49 = scmp.eq.s32.totalorder %s15, 0
      %p50 = por %p48, %p49
      %p51 = scmp.ne.s32.totalorder %s37, %s38
      %p52 = scmp.eq.s32.totalorder %s16, 3
      %p53 = por %p51, %p52
      %p55 = scmp.ne.s32.totalorder %s38, %s54
      %p56 = scmp.eq.s32.totalorder %s16, 0
      %p57 = por %p55, %p56
      %s59 = sadd.s32 %s58, 1
      %p62 = scmp.eq.s32.totalorder %s10, 3
      %p63 = scmp.ne.s32.totalorder %s58, %s60
      %p64 = scmp.eq.s32.totalorder %s10, 0
      %p65 = por %p63, %p64
      %p66 = scmp.ne.s32.totalorder %s58, %s60
      %p67 = scmp.eq.s32.totalorder %s15, 3
      %p68 = por %p66, %p67
      %p69 = scmp.ne.s32.totalorder %s60, %s61
      %p70 = scmp.eq.s32.totalorder %s15, 0
      %p71 = por %p69, %p70
      %p72 = scmp.ne.s32.totalorder %s60, %s61
      %p73 = scmp.eq.s32.totalorder %s16, 3
      %p74 = por %p72, %p73
      %p76 = scmp.ne.s32.totalorder %s61, %s75
      %p77 = scmp.eq.s32.totalorder %s16, 0
      %p78 = por %p76, %p77
      %s80 = sadd.s32 %s79, 1
      %p83 = scmp.eq.s32.totalorder %s10, 3
      %p84 = scmp.ne.s32.totalorder %s79, %s81
      %p85 = scmp.eq.s32.totalorder %s10, 0
      %p86 = por %p84, %p85
      %p87 = scmp.ne.s32.totalorder %s79, %s81
      %p88 = scmp.eq.s32.totalorder %s15, 3
      %p89 = por %p87, %p88
      %p90 = scmp.ne.s32.totalorder %s81, %s82
      %p91 = scmp.eq.s32.totalorder %s15, 0
      %p92 = por %p90, %p91
      %p93 = scmp.ne.s32.totalorder %s81, %s82
      %p94 = scmp.eq.s32.totalorder %s16, 3
      %p95 = por %p93, %p94
      %p97 = scmp.ne.s32.totalorder %s82, %s96
      %p98 = scmp.eq.s32.totalorder %s16, 0
      %p99 = por %p97, %p98
      %s100 = ssub.s32 %s17, %s29
      %s101 = ssub.s32 %s18, %s25
      %s102 = sor.u32 %s100, %s101
      %p103 = scmp.eq.s32.totalorder %s102, 0
      %s105 = sadd.s32 %s104, 1
      %s106 = scalar_select %p103, %s104, %s105
      %p109 = pneg %p103
      %p110 = scmp.eq.s32.totalorder %s10, 3
      %p111 = por %p109, %p110
      %p112 = scmp.ne.s32.totalorder %s104, %s107
      %p113 = scmp.eq.s32.totalorder %s10, 0
      %p114 = por %p112, %p113
      %p115 = scmp.ne.s32.totalorder %s104, %s107
      %p116 = scmp.eq.s32.totalorder %s15, 3
      %p117 = por %p115, %p116
      %p118 = scmp.ne.s32.totalorder %s107, %s108
      %p119 = scmp.eq.s32.totalorder %s15, 0
      %p120 = por %p118, %p119
      %p121 = scmp.ne.s32.totalorder %s107, %s108
      %p122 = scmp.eq.s32.totalorder %s16, 3
      %p123 = por %p121, %p122
      %p125 = scmp.ne.s32.totalorder %s108, %s124
      %p126 = scmp.eq.s32.totalorder %s16, 0
      %p127 = por %p125, %p126
      %p128 = scmp.le.s32.totalorder 1, %s10
      %p129 = scmp.lt.s32.totalorder %s10, 5
      %p130 = pnand %p128, %p129
      %p131 = pneg %p130
      // Predicated region
      $region9: #{tpu_custom_call.1} parent=5 // pred_check
        _
      $region10: #{tpu_custom_call.1} parent=5 // pred_check_branch
        %133 = sbr.rel (%p130) target = $region12
      $region11: #{tpu_custom_call.1} parent=5 // pred_region
        %s134 = ssub.s32 %s10, 1
        // Predicated region
        $region13: #{tpu_custom_call.1} parent=11 // pred_check
          %p135 = pneg %p71
        $region14: #{tpu_custom_call.1} parent=11 // pred_check_branch
          %137 = sbr.rel (%p135) target = $region16
        $region15: #{tpu_custom_call.1} parent=11 // pred_region
          _
        $region16: #{tpu_custom_call.1} parent=11 // pred_fallthru
          _
        // Predicated region
        $region17: #{tpu_custom_call.1} parent=11 // pred_check
          %p138 = pneg %p92
        $region18: #{tpu_custom_call.1} parent=11 // pred_check_branch
          %140 = sbr.rel (%p138) target = $region20
        $region19: #{tpu_custom_call.1} parent=11 // pred_region
          %s142 = ssub.s32 16, 16
          %143 = vsyncadd [#allocation4], %s142
          %s145 = sshll.u32 [#allocation3], 4
          %s146 = int_to_ptr.vmem [resolvable:$true] %s145
          %148 = dma.hbm_to_vmem [thread:$0]  %s2, 16, %s146, [#allocation4]
        $region20: #{tpu_custom_call.1} parent=11 // pred_fallthru
          _
      $region12: #{tpu_custom_call.1} parent=5 // pred_fallthru
        _
      %p149 = scmp.lt.s32.totalorder %s10, 4
      // Predicated region
      $region21: #{tpu_custom_call.1} parent=5 // pred_check
        %p150 = pneg %p149
      $region22: #{tpu_custom_call.1} parent=5 // pred_check_branch
        %152 = sbr.rel (%p150) target = $region24
      $region23: #{tpu_custom_call.1} parent=5 // pred_region
        // Predicated region
        $region25: #{tpu_custom_call.1} parent=23 // pred_check
          %p153 = pneg %p44
        $region26: #{tpu_custom_call.1} parent=23 // pred_check_branch
          %155 = sbr.rel (%p153) target = $region28
        $region27: #{tpu_custom_call.1} parent=23 // pred_region
          %p156 = scmp.lt.s32.totalorder %s17, 1
          %s157 = scalar_select %p156, %s17, 1
          %p158 = scmp.lt.s32.totalorder %s18, 1
          %s159 = scalar_select %p158, %s18, 1
          %s160 = smul.addr %s159, 25
          %s161 = smul.addr %s157, 50
          %s162 = sadd.s32 %s160, %s161
          %s163 = smul.addr %s162, 4
          %s164 = scalar_lea.vmem %s0, %s163
        $region28: #{tpu_custom_call.1} parent=23 // pred_fallthru
          _
      $region24: #{tpu_custom_call.1} parent=5 // pred_fallthru
        _
      %p165 = scmp.le.s32.totalorder 1, %s10
      %p166 = scmp.lt.s32.totalorder %s10, 5
      %p167 = pnand %p165, %p166
      %p168 = pneg %p167
      // Predicated region
      $region29: #{tpu_custom_call.1} parent=5 // pred_check
        _
      $region30: #{tpu_custom_call.1} parent=5 // pred_check_branch
        %170 = sbr.rel (%p167) target = $region32
      $region31: #{tpu_custom_call.1} parent=5 // pred_region
        %s171 = ssub.s32 %s10, 1
        // Predicated region
        $region33: #{tpu_custom_call.1} parent=31 // pred_check
          %p172 = pneg %p92
        $region34: #{tpu_custom_call.1} parent=31 // pred_check_branch
          %174 = sbr.rel (%p172) target = $region36
        $region35: #{tpu_custom_call.1} parent=31 // pred_region
          %175 = dma.done [#allocation4], 16
        $region36: #{tpu_custom_call.1} parent=31 // pred_fallthru
          _
        %p176 = scmp.lt.s32.totalorder %s19, 1
        %s177 = scalar_select %p176, %s19, 1
        %p178 = scmp.lt.s32.totalorder %s20, 1
        %s179 = scalar_select %p178, %s20, 1
        %s180 = smul.addr %s179, 25
        %s181 = smul.addr %s177, 50
        %s182 = sadd.s32 %s180, %s181
        %s183 = smul.addr %s182, 4
        %s184 = scalar_lea.vmem %s0, %s183
        %p185 = pneg %p50
        %p186 = pneg %p47
        %p187 = pneg %p71
        %p188 = pneg %p68
        %p189 = pneg %p92
        %p190 = pneg %p89
        %p191 = pneg %p120
        %p192 = pneg %p117
        %s193 = sand.u32 %s107, 1
        %s194 = sand.u32 %s107, 1
        %s195 = smul.addr %s194, 576
        %s196 = scalar_lea.vmem [#allocation5], %s195
        %p197 = scmp.lt.s32.totalorder %s19, 1
        %s198 = scalar_select %p197, %s19, 1
        %p199 = scmp.lt.s32.totalorder %s20, 1
        %s200 = scalar_select %p199, %s20, 1
        %s201 = smul.addr %s200, 25
        %s202 = smul.addr %s198, 50
        %s203 = sadd.s32 %s201, %s202
        %s204 = smul.addr %s203, 4
        %s205 = scalar_lea.vmem %s0, %s204
        %s206 = smul.u32 18, %s20
        %v208 = vld [vmem:[#allocation3] sm:$0x1]
        %v209 = vld [vmem:[%s205] sm:$0xf]
        %v210 = vld [vmem:[%s205 + $0x4] sm:$0xf]
        %v211 = vld [vmem:[%s205 + $0x8] sm:$0xf]
        %v212 = vld [vmem:[%s205 + $0xc] sm:$0xf]
        %v213 = vld [vmem:[%s205 + $0x10] sm:$0xf]
        %v214 = vld [vmem:[%s205 + $0x14] sm:$0xf]
        %v215 = vld [vmem:[%s205 + $0x18] sm:$0xf]
        %v216 = vld [vmem:[%s205 + $0x1c] sm:$0xf]
        %v217 = vld [vmem:[%s205 + $0x20] sm:$0xf]
        %v218 = vld [vmem:[%s205 + $0x24] sm:$0xf]
        %v219 = vld [vmem:[%s205 + $0x28] sm:$0xf]
        %v220 = vld [vmem:[%s205 + $0x2c] sm:$0xf]
        %v221 = vld [vmem:[%s205 + $0x30] sm:$0xf]
        %v222 = vld [vmem:[%s205 + $0x34] sm:$0xf]
        %v223 = vld [vmem:[%s205 + $0x38] sm:$0xf]
        %v224 = vld [vmem:[%s205 + $0x3c] sm:$0xf]
        %v225 = vld [vmem:[%s205 + $0x40] sm:$0xf]
        %v226 = vld [vmem:[%s205 + $0x44] sm:$0xf]
        %v227 = vld [vmem:[%s1] sm:$0x3]
        %v246 = vunpack.c.l.b16 %v209
        %v247 = vunpack.c.l.b16 %v210
        %v248 = vunpack.c.l.b16 %v211
        %v249 = vunpack.c.l.b16 %v212
        %v250 = vunpack.c.l.b16 %v213
        %v251 = vunpack.c.l.b16 %v214
        %v252 = vunpack.c.l.b16 %v215
        %v253 = vunpack.c.l.b16 %v216
        %v254 = vunpack.c.l.b16 %v217
        %v255 = vunpack.c.l.b16 %v218
        %v256 = vunpack.c.l.b16 %v219
        %v257 = vunpack.c.l.b16 %v220
        %v258 = vunpack.c.l.b16 %v221
        %v259 = vunpack.c.l.b16 %v222
        %v260 = vunpack.c.l.b16 %v223
        %v261 = vunpack.c.l.b16 %v224
        %v262 = vunpack.c.l.b16 %v225
        %v263 = vunpack.c.l.b16 %v226
        %v264 = vpack.c.b16 %v247, %v246
        %v265 = vpack.c.b16 %v249, %v248
        %v266 = vpack.c.b16 %v251, %v250
        %v267 = vpack.c.b16 %v253, %v252
        %v268 = vpack.c.b16 %v255, %v254
        %v269 = vpack.c.b16 %v257, %v256
        %v270 = vpack.c.b16 %v259, %v258
        %v271 = vpack.c.b16 %v261, %v260
        %v272 = vpack.c.b16 %v263, %v262
        %vm273 = vcmask 31744
        %v275 = vsel %vm273, %v264, 0
        %v278 = vsel %vm273, %v265, 0
        %v281 = vsel %vm273, %v266, 0
        %v284 = vsel %vm273, %v267, 0
        %v287 = vsel %vm273, %v268, 0
        %v290 = vsel %vm273, %v269, 0
        %v293 = vsel %vm273, %v270, 0
        %v296 = vsel %vm273, %v271, 0
        %v299 = vsel %vm273, %v272, 0
        %vm301 = vcmask 1041408
        %v303 = vsel %vm301, %v227, 0
        %305 = vmatprep.subr.bf16.mxu0 0
        %306 = vmatpush1.bf16.msra.mxu0 %v303
        %307 = vmatprep.subr.bf16.mxu0 0
        %308 = vmatpush1.bf16.msra.mxu0 0
        %309 = vmatprep.subr.bf16.mxu0 0
        %310 = vmatpush1.bf16.msra.mxu0 0
        %311 = vmatprep.subr.bf16.mxu0 0
        %312 = vmatpush1.bf16.msra.mxu0 0
        %313 = vmatprep.subr.bf16.mxu0 0
        %314 = vmatpush1.bf16.msra.mxu0 0
        %315 = vmatprep.subr.bf16.mxu0 0
        %316 = vmatpush1.bf16.msra.mxu0 0
        %317 = vmatprep.subr.bf16.mxu0 0
        %318 = vmatpush1.bf16.msra.mxu0 0
        %319 = vmatprep.subr.bf16.mxu0 0
        %320 = vmatpush1.bf16.msra.mxu0 0
        %321 = vmatprep.subr.bf16.mxu0 0
        %322 = vmatpush1.bf16.msra.mxu0 0
        %323 = vmatprep.subr.bf16.mxu0 0
        %324 = vmatpush1.bf16.msra.mxu0 0
        %325 = vmatprep.subr.bf16.mxu0 0
        %326 = vmatpush1.bf16.msra.mxu0 0
        %327 = vmatprep.subr.bf16.mxu0 0
        %328 = vmatpush1.bf16.msra.mxu0 0
        %329 = vmatprep.subr.bf16.mxu0 0
        %330 = vmatpush1.bf16.msra.mxu0 0
        %331 = vmatprep.subr.bf16.mxu0 0
        %332 = vmatpush1.bf16.msra.mxu0 0
        %333 = vmatprep.subr.bf16.mxu0 0
        %334 = vmatpush1.bf16.msra.mxu0 0
        %335 = vmatprep.subr.bf16.mxu0 0
        %336 = vmatpush1.bf16.msra.mxu0 0
        %337 = vmatprep.mubr.bf16.mxu0 0
        %338 = vmatmul.mubr.bf16.gmra.mrb[0].mxu0 %v275
        %v339 = vpop.f32.mrb[0].mxu0
        %v340 = vadd.f32 0.0, %v339
        %v341 = vpop.f32.mrb[0].mxu0
        %v342 = vpop.f32.mrb[0].mxu0
        %v343 = vadd.f32 0.0, %v342
        %v344 = vpop.f32.mrb[0].mxu0
        %345 = vmatprep.mubr.bf16.mxu0 0
        %346 = vmatmul.mubr.bf16.gmra.mrb[0].mxu0 %v278
        %v347 = vpop.f32.mrb[0].mxu0
        %v348 = vadd.f32 0.0, %v347
        %v349 = vpop.f32.mrb[0].mxu0
        %v350 = vpop.f32.mrb[0].mxu0
        %v351 = vadd.f32 0.0, %v350
        %v352 = vpop.f32.mrb[0].mxu0
        %353 = vmatprep.mubr.bf16.mxu0 0
        %354 = vmatmul.mubr.bf16.gmra.mrb[0].mxu0 %v281
        %v355 = vpop.f32.mrb[0].mxu0
        %v356 = vadd.f32 0.0, %v355
        %v357 = vpop.f32.mrb[0].mxu0
        %v358 = vpop.f32.mrb[0].mxu0
        %v359 = vadd.f32 0.0, %v358
        %v360 = vpop.f32.mrb[0].mxu0
        %361 = vmatprep.mubr.bf16.mxu0 0
        %362 = vmatmul.mubr.bf16.gmra.mrb[0].mxu0 %v284
        %v363 = vpop.f32.mrb[0].mxu0
        %v364 = vadd.f32 0.0, %v363
        %v365 = vpop.f32.mrb[0].mxu0
        %v366 = vpop.f32.mrb[0].mxu0
        %v367 = vadd.f32 0.0, %v366
        %v368 = vpop.f32.mrb[0].mxu0
        %369 = vmatprep.mubr.bf16.mxu0 0
        %370 = vmatmul.mubr.bf16.gmra.mrb[0].mxu0 %v287
        %v371 = vpop.f32.mrb[0].mxu0
        %v372 = vadd.f32 0.0, %v371
        %v373 = vpop.f32.mrb[0].mxu0
        %v374 = vpop.f32.mrb[0].mxu0
        %v375 = vadd.f32 0.0, %v374
        %v376 = vpop.f32.mrb[0].mxu0
        %377 = vmatprep.mubr.bf16.mxu0 0
        %378 = vmatmul.mubr.bf16.gmra.mrb[0].mxu0 %v290
        %v379 = vpop.f32.mrb[0].mxu0
        %v380 = vadd.f32 0.0, %v379
        %v381 = vpop.f32.mrb[0].mxu0
        %v382 = vpop.f32.mrb[0].mxu0
        %v383 = vadd.f32 0.0, %v382
        %v384 = vpop.f32.mrb[0].mxu0
        %385 = vmatprep.mubr.bf16.mxu0 0
        %386 = vmatmul.mubr.bf16.gmra.mrb[0].mxu0 %v293
        %v387 = vpop.f32.mrb[0].mxu0
        %v388 = vadd.f32 0.0, %v387
        %v389 = vpop.f32.mrb[0].mxu0
        %v390 = vpop.f32.mrb[0].mxu0
        %v391 = vadd.f32 0.0, %v390
        %v392 = vpop.f32.mrb[0].mxu0
        %393 = vmatprep.mubr.bf16.mxu0 0
        %394 = vmatmul.mubr.bf16.gmra.mrb[0].mxu0 %v296
        %v395 = vpop.f32.mrb[0].mxu0
        %v396 = vadd.f32 0.0, %v395
        %v397 = vpop.f32.mrb[0].mxu0
        %v398 = vpop.f32.mrb[0].mxu0
        %v399 = vadd.f32 0.0, %v398
        %v400 = vpop.f32.mrb[0].mxu0
        %401 = vmatprep.mubr.bf16.mxu0 0
        %402 = vmatmul.mubr.bf16.gmra.mrb[0].mxu0 %v299
        %v403 = vpop.f32.mrb[0].mxu0
        %v404 = vadd.f32 0.0, %v403
        %v405 = vpop.f32.mrb[0].mxu0
        %v406 = vpop.f32.mrb[0].mxu0
        %v407 = vadd.f32 0.0, %v406
        %v408 = vpop.f32.mrb[0].mxu0
        %409 = vdwg.mxu0
        %410 = vst.msk [vmem:[#allocation2] sm:$0xff] %vm273, %v340
        %411 = vst.msk [vmem:[#allocation2 + $0x8] sm:$0xff] %vm273, %v343
        %412 = vst.msk [vmem:[#allocation2 + $0x10] sm:$0xff] %vm273, %v348
        %413 = vst.msk [vmem:[#allocation2 + $0x18] sm:$0xff] %vm273, %v351
        %414 = vst.msk [vmem:[#allocation2 + $0x20] sm:$0xff] %vm273, %v356
        %415 = vst.msk [vmem:[#allocation2 + $0x28] sm:$0xff] %vm273, %v359
        %416 = vst.msk [vmem:[#allocation2 + $0x30] sm:$0xff] %vm273, %v364
        %417 = vst.msk [vmem:[#allocation2 + $0x38] sm:$0xff] %vm273, %v367
        %418 = vst.msk [vmem:[#allocation2 + $0x40] sm:$0xff] %vm273, %v372
        %419 = vst.msk [vmem:[#allocation2 + $0x48] sm:$0xff] %vm273, %v375
        %420 = vst.msk [vmem:[#allocation2 + $0x50] sm:$0xff] %vm273, %v380
        %421 = vst.msk [vmem:[#allocation2 + $0x58] sm:$0xff] %vm273, %v383
        %422 = vst.msk [vmem:[#allocation2 + $0x60] sm:$0xff] %vm273, %v388
        %423 = vst.msk [vmem:[#allocation2 + $0x68] sm:$0xff] %vm273, %v391
        %424 = vst.msk [vmem:[#allocation2 + $0x70] sm:$0xff] %vm273, %v396
        %425 = vst.msk [vmem:[#allocation2 + $0x78] sm:$0xff] %vm273, %v399
        %426 = vst.msk [vmem:[#allocation2 + $0x80] sm:$0xff] %vm273, %v404
        %427 = vst.msk [vmem:[#allocation2 + $0x88] sm:$0xff] %vm273, %v407
        %v428 = vld [vmem:[%s205] sm:$0xf]
        %v429 = vld [vmem:[%s205 + $0x4] sm:$0xf]
        %v430 = vld [vmem:[%s205 + $0x8] sm:$0xf]
        %v431 = vld [vmem:[%s205 + $0xc] sm:$0xf]
        %v432 = vld [vmem:[%s205 + $0x10] sm:$0xf]
        %v433 = vld [vmem:[%s205 + $0x14] sm:$0xf]
        %v434 = vld [vmem:[%s205 + $0x18] sm:$0xf]
        %v435 = vld [vmem:[%s205 + $0x1c] sm:$0xf]
        %v436 = vld [vmem:[%s205 + $0x20] sm:$0xf]
        %v437 = vld [vmem:[%s205 + $0x24] sm:$0xf]
        %v438 = vld [vmem:[%s205 + $0x28] sm:$0xf]
        %v439 = vld [vmem:[%s205 + $0x2c] sm:$0xf]
        %v440 = vld [vmem:[%s205 + $0x30] sm:$0xf]
        %v441 = vld [vmem:[%s205 + $0x34] sm:$0xf]
        %v442 = vld [vmem:[%s205 + $0x38] sm:$0xf]
        %v443 = vld [vmem:[%s205 + $0x3c] sm:$0xf]
        %v444 = vld [vmem:[%s205 + $0x40] sm:$0xf]
        %v445 = vld [vmem:[%s205 + $0x44] sm:$0xf]
        %v446 = vld [vmem:[%s205 + $0x48] sm:$0x1]
        %s447 = scalar_lea.vmem %s1, 2
        %v448 = vld [vmem:[%s447] sm:$0x3]
        %v468 = vunpack.c.l.b16 %v428
        %v469 = vunpack.c.l.b16 %v429
        %v470 = vunpack.c.l.b16 %v430
        %v471 = vunpack.c.l.b16 %v431
        %v472 = vunpack.c.l.b16 %v432
        %v473 = vunpack.c.l.b16 %v433
        %v474 = vunpack.c.l.b16 %v434
        %v475 = vunpack.c.l.b16 %v435
        %v476 = vunpack.c.l.b16 %v436
        %v477 = vunpack.c.l.b16 %v437
        %v478 = vunpack.c.l.b16 %v438
        %v479 = vunpack.c.l.b16 %v439
        %v480 = vunpack.c.l.b16 %v440
        %v481 = vunpack.c.l.b16 %v441
        %v482 = vunpack.c.l.b16 %v442
        %v483 = vunpack.c.l.b16 %v443
        %v484 = vunpack.c.l.b16 %v444
        %v485 = vunpack.c.l.b16 %v445
        %v486 = vunpack.c.l.b16 %v446
        %v487 = vpack.c.b16 %v469, %v468
        %v488 = vpack.c.b16 %v471, %v470
        %v489 = vpack.c.b16 %v473, %v472
        %v490 = vpack.c.b16 %v475, %v474
        %v491 = vpack.c.b16 %v477, %v476
        %v492 = vpack.c.b16 %v479, %v478
        %v493 = vpack.c.b16 %v481, %v480
        %v494 = vpack.c.b16 %v483, %v482
        %v495 = vpack.c.b16 %v485, %v484
        %v496 = vpack.c.b16 %v486, %v486
        %vm497 = vsmask.f32 7424
        %v499 = vshrl.u32 %v487, 16
        %v501 = vshll.u32 %v487, 16
        %v503 = vrot.slane %v501, 1
        %v504 = vor.u32 %v499, %v503
        %v506 = vshll.u32 %v488, 16
        %v508 = vrot.slane %v506, 1
        %v509 = vsel %vm497, %v504, %v508
        %v510 = vshrl.u32 %v488, 16
        %v512 = vor.u32 %v510, %v508
        %v514 = vshll.u32 %v489, 16
        %v516 = vrot.slane %v514, 1
        %v517 = vsel %vm497, %v512, %v516
        %v518 = vshrl.u32 %v489, 16
        %v520 = vor.u32 %v518, %v516
        %v522 = vshll.u32 %v490, 16
        %v524 = vrot.slane %v522, 1
        %v525 = vsel %vm497, %v520, %v524
        %v526 = vshrl.u32 %v490, 16
        %v528 = vor.u32 %v526, %v524
        %v530 = vshll.u32 %v491, 16
        %v532 = vrot.slane %v530, 1
        %v533 = vsel %vm497, %v528, %v532
        %v534 = vshrl.u32 %v491, 16
        %v536 = vor.u32 %v534, %v532
        %v538 = vshll.u32 %v492, 16
        %v540 = vrot.slane %v538, 1
        %v541 = vsel %vm497, %v536, %v540
        %v542 = vshrl.u32 %v492, 16
        %v544 = vor.u32 %v542, %v540
        %v546 = vshll.u32 %v493, 16
        %v548 = vrot.slane %v546, 1
        %v549 = vsel %vm497, %v544, %v548
        %v550 = vshrl.u32 %v493, 16
        %v552 = vor.u32 %v550, %v548
        %v554 = vshll.u32 %v494, 16
        %v556 = vrot.slane %v554, 1
        %v557 = vsel %vm497, %v552, %v556
        %v558 = vshrl.u32 %v494, 16
        %v560 = vor.u32 %v558, %v556
        %v562 = vshll.u32 %v495, 16
        %v564 = vrot.slane %v562, 1
        %v565 = vsel %vm497, %v560, %v564
        %v566 = vshrl.u32 %v495, 16
        %v568 = vor.u32 %v566, %v564
        %v570 = vshll.u32 %v496, 16
        %v572 = vrot.slane %v570, 1
        %v573 = vsel %vm497, %v568, %v572
        %v575 = vsel %vm273, %v509, 0
        %v578 = vsel %vm273, %v517, 0
        %v581 = vsel %vm273, %v525, 0
        %v584 = vsel %vm273, %v533, 0
        %v587 = vsel %vm273, %v541, 0
        %v590 = vsel %vm273, %v549, 0
        %v593 = vsel %vm273, %v557, 0
        %v596 = vsel %vm273, %v565, 0
        %v599 = vsel %vm273, %v573, 0
        %v602 = vsel %vm301, %v448, 0
        %604 = vmatprep.subr.bf16.mxu0 0
        %605 = vmatpush1.bf16.msra.mxu0 %v602
        %606 = vmatprep.subr.bf16.mxu0 0
        %607 = vmatpush1.bf16.msra.mxu0 0
        %608 = vmatprep.subr.bf16.mxu0 0
        %609 = vmatpush1.bf16.msra.mxu0 0
        %610 = vmatprep.subr.bf16.mxu0 0
        %611 = vmatpush1.bf16.msra.mxu0 0
        %612 = vmatprep.subr.bf16.mxu0 0
        %613 = vmatpush1.bf16.msra.mxu0 0
        %614 = vmatprep.subr.bf16.mxu0 0
        %615 = vmatpush1.bf16.msra.mxu0 0
        %616 = vmatprep.subr.bf16.mxu0 0
        %617 = vmatpush1.bf16.msra.mxu0 0
        %618 = vmatprep.subr.bf16.mxu0 0
        %619 = vmatpush1.bf16.msra.mxu0 0
        %620 = vmatprep.subr.bf16.mxu0 0
        %621 = vmatpush1.bf16.msra.mxu0 0
        %622 = vmatprep.subr.bf16.mxu0 0
        %623 = vmatpush1.bf16.msra.mxu0 0
        %624 = vmatprep.subr.bf16.mxu0 0
        %625 = vmatpush1.bf16.msra.mxu0 0
        %626 = vmatprep.subr.bf16.mxu0 0
        %627 = vmatpush1.bf16.msra.mxu0 0
        %628 = vmatprep.subr.bf16.mxu0 0
        %629 = vmatpush1.bf16.msra.mxu0 0
        %630 = vmatprep.subr.bf16.mxu0 0
        %631 = vmatpush1.bf16.msra.mxu0 0
        %632 = vmatprep.subr.bf16.mxu0 0
        %633 = vmatpush1.bf16.msra.mxu0 0
        %634 = vmatprep.subr.bf16.mxu0 0
        %635 = vmatpush1.bf16.msra.mxu0 0
        %636 = vmatprep.mubr.bf16.mxu0 0
        %637 = vmatmul.mubr.bf16.gmra.mrb[0].mxu0 %v575
        %v638 = vpop.f32.mrb[0].mxu0
        %v639 = vadd.f32 0.0, %v638
        %v640 = vpop.f32.mrb[0].mxu0
        %v641 = vpop.f32.mrb[0].mxu0
        %v642 = vadd.f32 0.0, %v641
        %v643 = vpop.f32.mrb[0].mxu0
        %644 = vmatprep.mubr.bf16.mxu0 0
        %645 = vmatmul.mubr.bf16.gmra.mrb[0].mxu0 %v578
        %v646 = vpop.f32.mrb[0].mxu0
        %v647 = vadd.f32 0.0, %v646
        %v648 = vpop.f32.mrb[0].mxu0
        %v649 = vpop.f32.mrb[0].mxu0
        %v650 = vadd.f32 0.0, %v649
        %v651 = vpop.f32.mrb[0].mxu0
        %652 = vmatprep.mubr.bf16.mxu0 0
        %653 = vmatmul.mubr.bf16.gmra.mrb[0].mxu0 %v581
        %v654 = vpop.f32.mrb[0].mxu0
        %v655 = vadd.f32 0.0, %v654
        %v656 = vpop.f32.mrb[0].mxu0
        %v657 = vpop.f32.mrb[0].mxu0
        %v658 = vadd.f32 0.0, %v657
        %v659 = vpop.f32.mrb[0].mxu0
        %660 = vmatprep.mubr.bf16.mxu0 0
        %661 = vmatmul.mubr.bf16.gmra.mrb[0].mxu0 %v584
        %v662 = vpop.f32.mrb[0].mxu0
        %v663 = vadd.f32 0.0, %v662
        %v664 = vpop.f32.mrb[0].mxu0
        %v665 = vpop.f32.mrb[0].mxu0
        %v666 = vadd.f32 0.0, %v665
        %v667 = vpop.f32.mrb[0].mxu0
        %668 = vmatprep.mubr.bf16.mxu0 0
        %669 = vmatmul.mubr.bf16.gmra.mrb[0].mxu0 %v587
        %v670 = vpop.f32.mrb[0].mxu0
        %v671 = vadd.f32 0.0, %v670
        %v672 = vpop.f32.mrb[0].mxu0
        %v673 = vpop.f32.mrb[0].mxu0
        %v674 = vadd.f32 0.0, %v673
        %v675 = vpop.f32.mrb[0].mxu0
        %676 = vmatprep.mubr.bf16.mxu0 0
        %677 = vmatmul.mubr.bf16.gmra.mrb[0].mxu0 %v590
        %v678 = vpop.f32.mrb[0].mxu0
        %v679 = vadd.f32 0.0, %v678
        %v680 = vpop.f32.mrb[0].mxu0
        %v681 = vpop.f32.mrb[0].mxu0
        %v682 = vadd.f32 0.0, %v681
        %v683 = vpop.f32.mrb[0].mxu0
        %684 = vmatprep.mubr.bf16.mxu0 0
        %685 = vmatmul.mubr.bf16.gmra.mrb[0].mxu0 %v593
        %v686 = vpop.f32.mrb[0].mxu0
        %v687 = vadd.f32 0.0, %v686
        %v688 = vpop.f32.mrb[0].mxu0
        %v689 = vpop.f32.mrb[0].mxu0
        %v690 = vadd.f32 0.0, %v689
        %v691 = vpop.f32.mrb[0].mxu0
        %692 = vmatprep.mubr.bf16.mxu0 0
        %693 = vmatmul.mubr.bf16.gmra.mrb[0].mxu0 %v596
        %v694 = vpop.f32.mrb[0].mxu0
        %v695 = vadd.f32 0.0, %v694
        %v696 = vpop.f32.mrb[0].mxu0
        %v697 = vpop.f32.mrb[0].mxu0
        %v698 = vadd.f32 0.0, %v697
        %v699 = vpop.f32.mrb[0].mxu0
        %700 = vmatprep.mubr.bf16.mxu0 0
        %701 = vmatmul.mubr.bf16.gmra.mrb[0].mxu0 %v599
        %v702 = vpop.f32.mrb[0].mxu0
        %v703 = vadd.f32 0.0, %v702
        %v704 = vpop.f32.mrb[0].mxu0
        %v705 = vpop.f32.mrb[0].mxu0
        %v706 = vadd.f32 0.0, %v705
        %v707 = vpop.f32.mrb[0].mxu0
        %708 = vdwg.mxu0
        %v709 = vld [vmem:[#allocation2] sm:$0xff]
        %v710 = vld [vmem:[#allocation2 + $0x8] sm:$0xff]
        %v711 = vld [vmem:[#allocation2 + $0x10] sm:$0xff]
        %v712 = vld [vmem:[#allocation2 + $0x18] sm:$0xff]
        %v713 = vld [vmem:[#allocation2 + $0x20] sm:$0xff]
        %v714 = vld [vmem:[#allocation2 + $0x28] sm:$0xff]
        %v715 = vld [vmem:[#allocation2 + $0x30] sm:$0xff]
        %v716 = vld [vmem:[#allocation2 + $0x38] sm:$0xff]
        %v717 = vld [vmem:[#allocation2 + $0x40] sm:$0xff]
        %v718 = vld [vmem:[#allocation2 + $0x48] sm:$0xff]
        %v719 = vld [vmem:[#allocation2 + $0x50] sm:$0xff]
        %v720 = vld [vmem:[#allocation2 + $0x58] sm:$0xff]
        %v721 = vld [vmem:[#allocation2 + $0x60] sm:$0xff]
        %v722 = vld [vmem:[#allocation2 + $0x68] sm:$0xff]
        %v723 = vld [vmem:[#allocation2 + $0x70] sm:$0xff]
        %v724 = vld [vmem:[#allocation2 + $0x78] sm:$0xff]
        %v725 = vld [vmem:[#allocation2 + $0x80] sm:$0xff]
        %v726 = vld [vmem:[#allocation2 + $0x88] sm:$0xff]
        %v727 = vadd.f32 %v709, %v639
        %v728 = vadd.f32 %v710, %v642
        %v729 = vadd.f32 %v711, %v647
        %v730 = vadd.f32 %v712, %v650
        %v731 = vadd.f32 %v713, %v655
        %v732 = vadd.f32 %v714, %v658
        %v733 = vadd.f32 %v715, %v663
        %v734 = vadd.f32 %v716, %v666
        %v735 = vadd.f32 %v717, %v671
        %v736 = vadd.f32 %v718, %v674
        %v737 = vadd.f32 %v719, %v679
        %v738 = vadd.f32 %v720, %v682
        %v739 = vadd.f32 %v721, %v687
        %v740 = vadd.f32 %v722, %v690
        %v741 = vadd.f32 %v723, %v695
        %v742 = vadd.f32 %v724, %v698
        %v743 = vadd.f32 %v725, %v703
        %v744 = vadd.f32 %v726, %v706
        %745 = vst.msk [vmem:[#allocation2] sm:$0xff] %vm273, %v727
        %746 = vst.msk [vmem:[#allocation2 + $0x8] sm:$0xff] %vm273, %v728
        %747 = vst.msk [vmem:[#allocation2 + $0x10] sm:$0xff] %vm273, %v729
        %748 = vst.msk [vmem:[#allocation2 + $0x18] sm:$0xff] %vm273, %v730
        %749 = vst.msk [vmem:[#allocation2 + $0x20] sm:$0xff] %vm273, %v731
        %750 = vst.msk [vmem:[#allocation2 + $0x28] sm:$0xff] %vm273, %v732
        %751 = vst.msk [vmem:[#allocation2 + $0x30] sm:$0xff] %vm273, %v733
        %752 = vst.msk [vmem:[#allocation2 + $0x38] sm:$0xff] %vm273, %v734
        %753 = vst.msk [vmem:[#allocation2 + $0x40] sm:$0xff] %vm273, %v735
        %754 = vst.msk [vmem:[#allocation2 + $0x48] sm:$0xff] %vm273, %v736
        %755 = vst.msk [vmem:[#allocation2 + $0x50] sm:$0xff] %vm273, %v737
        %756 = vst.msk [vmem:[#allocation2 + $0x58] sm:$0xff] %vm273, %v738
        %757 = vst.msk [vmem:[#allocation2 + $0x60] sm:$0xff] %vm273, %v739
        %758 = vst.msk [vmem:[#allocation2 + $0x68] sm:$0xff] %vm273, %v740
        %759 = vst.msk [vmem:[#allocation2 + $0x70] sm:$0xff] %vm273, %v741
        %760 = vst.msk [vmem:[#allocation2 + $0x78] sm:$0xff] %vm273, %v742
        %761 = vst.msk [vmem:[#allocation2 + $0x80] sm:$0xff] %vm273, %v743
        %762 = vst.msk [vmem:[#allocation2 + $0x88] sm:$0xff] %vm273, %v744
        %v763 = vld [vmem:[%s205 + $0x8] sm:$0xe]
        %v764 = vld [vmem:[%s205 + $0xc] sm:$0xf]
        %v765 = vld [vmem:[%s205 + $0x10] sm:$0xf]
        %v766 = vld [vmem:[%s205 + $0x14] sm:$0xf]
        %v767 = vld [vmem:[%s205 + $0x18] sm:$0xf]
        %v768 = vld [vmem:[%s205 + $0x1c] sm:$0xf]
        %v769 = vld [vmem:[%s205 + $0x20] sm:$0xf]
        %v770 = vld [vmem:[%s205 + $0x24] sm:$0xf]
        %v771 = vld [vmem:[%s205 + $0x28] sm:$0xf]
        %v772 = vld [vmem:[%s205 + $0x2c] sm:$0xf]
        %v773 = vld [vmem:[%s205 + $0x30] sm:$0xf]
        %v774 = vld [vmem:[%s205 + $0x34] sm:$0xf]
        %v775 = vld [vmem:[%s205 + $0x38] sm:$0xf]
        %v776 = vld [vmem:[%s205 + $0x3c] sm:$0xf]
        %v777 = vld [vmem:[%s205 + $0x40] sm:$0xf]
        %v778 = vld [vmem:[%s205 + $0x44] sm:$0xf]
        %v779 = vld [vmem:[%s205 + $0x48] sm:$0xf]
        %v780 = vld [vmem:[%s205 + $0x4c] sm:$0xf]
        %v781 = vld [vmem:[%s205 + $0x50] sm:$0x1]
        %s782 = scalar_lea.vmem %s1, 4
        %v783 = vld [vmem:[%s782] sm:$0x3]
        %v803 = vunpack.c.l.b16 %v763
        %v804 = vunpack.c.l.b16 %v764
        %v805 = vunpack.c.l.b16 %v765
        %v806 = vunpack.c.l.b16 %v766
        %v807 = vunpack.c.l.b16 %v767
        %v808 = vunpack.c.l.b16 %v768
        %v809 = vunpack.c.l.b16 %v769
        %v810 = vunpack.c.l.b16 %v770
        %v811 = vunpack.c.l.b16 %v771
        %v812 = vunpack.c.l.b16 %v772
        %v813 = vunpack.c.l.b16 %v773
        %v814 = vunpack.c.l.b16 %v774
        %v815 = vunpack.c.l.b16 %v775
        %v816 = vunpack.c.l.b16 %v776
        %v817 = vunpack.c.l.b16 %v777
        %v818 = vunpack.c.l.b16 %v778
        %v819 = vunpack.c.l.b16 %v779
        %v820 = vunpack.c.l.b16 %v780
        %v821 = vunpack.c.l.b16 %v781
        %v822 = vpack.c.b16 %v804, %v803
        %v823 = vpack.c.b16 %v806, %v805
        %v824 = vpack.c.b16 %v808, %v807
        %v825 = vpack.c.b16 %v810, %v809
        %v826 = vpack.c.b16 %v812, %v811
        %v827 = vpack.c.b16 %v814, %v813
        %v828 = vpack.c.b16 %v816, %v815
        %v829 = vpack.c.b16 %v818, %v817
        %v830 = vpack.c.b16 %v820, %v819
        %v831 = vpack.c.b16 %v821, %v821
        %vm832 = vcmask 1046528
        %v833 = vrot.slane %v822, 1
        %v834 = vrot.slane %v823, 1
        %v835 = vsel %vm832, %v833, %v834
        %v836 = vrot.slane %v824, 1
        %v837 = vsel %vm832, %v834, %v836
        %v838 = vrot.slane %v825, 1
        %v839 = vsel %vm832, %v836, %v838
        %v840 = vrot.slane %v826, 1
        %v841 = vsel %vm832, %v838, %v840
        %v842 = vrot.slane %v827, 1
        %v843 = vsel %vm832, %v840, %v842
        %v844 = vrot.slane %v828, 1
        %v845 = vsel %vm832, %v842, %v844
        %v846 = vrot.slane %v829, 1
        %v847 = vsel %vm832, %v844, %v846
        %v848 = vrot.slane %v830, 1
        %v849 = vsel %vm832, %v846, %v848
        %v850 = vrot.slane %v831, 1
        %v851 = vsel %vm832, %v848, %v850
        %v853 = vsel %vm273, %v835, 0
        %v856 = vsel %vm273, %v837, 0
        %v859 = vsel %vm273, %v839, 0
        %v862 = vsel %vm273, %v841, 0
        %v865 = vsel %vm273, %v843, 0
        %v868 = vsel %vm273, %v845, 0
        %v871 = vsel %vm273, %v847, 0
        %v874 = vsel %vm273, %v849, 0
        %v877 = vsel %vm273, %v851, 0
        %v880 = vsel %vm301, %v783, 0
        %882 = vmatprep.subr.bf16.mxu0 0
        %883 = vmatpush1.bf16.msra.mxu0 %v880
        %884 = vmatprep.subr.bf16.mxu0 0
        %885 = vmatpush1.bf16.msra.mxu0 0
        %886 = vmatprep.subr.bf16.mxu0 0
        %887 = vmatpush1.bf16.msra.mxu0 0
        %888 = vmatprep.subr.bf16.mxu0 0
        %889 = vmatpush1.bf16.msra.mxu0 0
        %890 = vmatprep.subr.bf16.mxu0 0
        %891 = vmatpush1.bf16.msra.mxu0 0
        %892 = vmatprep.subr.bf16.mxu0 0
        %893 = vmatpush1.bf16.msra.mxu0 0
        %894 = vmatprep.subr.bf16.mxu0 0
        %895 = vmatpush1.bf16.msra.mxu0 0
        %896 = vmatprep.subr.bf16.mxu0 0
        %897 = vmatpush1.bf16.msra.mxu0 0
        %898 = vmatprep.subr.bf16.mxu0 0
        %899 = vmatpush1.bf16.msra.mxu0 0
        %900 = vmatprep.subr.bf16.mxu0 0
        %901 = vmatpush1.bf16.msra.mxu0 0
        %902 = vmatprep.subr.bf16.mxu0 0
        %903 = vmatpush1.bf16.msra.mxu0 0
        %904 = vmatprep.subr.bf16.mxu0 0
        %905 = vmatpush1.bf16.msra.mxu0 0
        %906 = vmatprep.subr.bf16.mxu0 0
        %907 = vmatpush1.bf16.msra.mxu0 0
        %908 = vmatprep.subr.bf16.mxu0 0
        %909 = vmatpush1.bf16.msra.mxu0 0
        %910 = vmatprep.subr.bf16.mxu0 0
        %911 = vmatpush1.bf16.msra.mxu0 0
        %912 = vmatprep.subr.bf16.mxu0 0
        %913 = vmatpush1.bf16.msra.mxu0 0
        %914 = vmatprep.mubr.bf16.mxu0 0
        %915 = vmatmul.mubr.bf16.gmra.mrb[0].mxu0 %v853
        %v916 = vpop.f32.mrb[0].mxu0
        %v917 = vadd.f32 0.0, %v916
        %v918 = vpop.f32.mrb[0].mxu0
        %v919 = vpop.f32.mrb[0].mxu0
        %v920 = vadd.f32 0.0, %v919
        %v921 = vpop.f32.mrb[0].mxu0
        %922 = vmatprep.mubr.bf16.mxu0 0
        %923 = vmatmul.mubr.bf16.gmra.mrb[0].mxu0 %v856
        %v924 = vpop.f32.mrb[0].mxu0
        %v925 = vadd.f32 0.0, %v924
        %v926 = vpop.f32.mrb[0].mxu0
        %v927 = vpop.f32.mrb[0].mxu0
        %v928 = vadd.f32 0.0, %v927
        %v929 = vpop.f32.mrb[0].mxu0
        %930 = vmatprep.mubr.bf16.mxu0 0
        %931 = vmatmul.mubr.bf16.gmra.mrb[0].mxu0 %v859
        %v932 = vpop.f32.mrb[0].mxu0
        %v933 = vadd.f32 0.0, %v932
        %v934 = vpop.f32.mrb[0].mxu0
        %v935 = vpop.f32.mrb[0].mxu0
        %v936 = vadd.f32 0.0, %v935
        %v937 = vpop.f32.mrb[0].mxu0
        %938 = vmatprep.mubr.bf16.mxu0 0
        %939 = vmatmul.mubr.bf16.gmra.mrb[0].mxu0 %v862
        %v940 = vpop.f32.mrb[0].mxu0
        %v941 = vadd.f32 0.0, %v940
        %v942 = vpop.f32.mrb[0].mxu0
        %v943 = vpop.f32.mrb[0].mxu0
        %v944 = vadd.f32 0.0, %v943
        %v945 = vpop.f32.mrb[0].mxu0
        %946 = vmatprep.mubr.bf16.mxu0 0
        %947 = vmatmul.mubr.bf16.gmra.mrb[0].mxu0 %v865
        %v948 = vpop.f32.mrb[0].mxu0
        %v949 = vadd.f32 0.0, %v948
        %v950 = vpop.f32.mrb[0].mxu0
        %v951 = vpop.f32.mrb[0].mxu0
        %v952 = vadd.f32 0.0, %v951
        %v953 = vpop.f32.mrb[0].mxu0
        %954 = vmatprep.mubr.bf16.mxu0 0
        %955 = vmatmul.mubr.bf16.gmra.mrb[0].mxu0 %v868
        %v956 = vpop.f32.mrb[0].mxu0
        %v957 = vadd.f32 0.0, %v956
        %v958 = vpop.f32.mrb[0].mxu0
        %v959 = vpop.f32.mrb[0].mxu0
        %v960 = vadd.f32 0.0, %v959
        %v961 = vpop.f32.mrb[0].mxu0
        %962 = vmatprep.mubr.bf16.mxu0 0
        %963 = vmatmul.mubr.bf16.gmra.mrb[0].mxu0 %v871
        %v964 = vpop.f32.mrb[0].mxu0
        %v965 = vadd.f32 0.0, %v964
        %v966 = vpop.f32.mrb[0].mxu0
        %v967 = vpop.f32.mrb[0].mxu0
        %v968 = vadd.f32 0.0, %v967
        %v969 = vpop.f32.mrb[0].mxu0
        %970 = vmatprep.mubr.bf16.mxu0 0
        %971 = vmatmul.mubr.bf16.gmra.mrb[0].mxu0 %v874
        %v972 = vpop.f32.mrb[0].mxu0
        %v973 = vadd.f32 0.0, %v972
        %v974 = vpop.f32.mrb[0].mxu0
        %v975 = vpop.f32.mrb[0].mxu0
        %v976 = vadd.f32 0.0, %v975
        %v977 = vpop.f32.mrb[0].mxu0
        %978 = vmatprep.mubr.bf16.mxu0 0
        %979 = vmatmul.mubr.bf16.gmra.mrb[0].mxu0 %v877
        %v980 = vpop.f32.mrb[0].mxu0
        %v981 = vadd.f32 0.0, %v980
        %v982 = vpop.f32.mrb[0].mxu0
        %v983 = vpop.f32.mrb[0].mxu0
        %v984 = vadd.f32 0.0, %v983
        %v985 = vpop.f32.mrb[0].mxu0
        %986 = vdwg.mxu0
        %v987 = vld [vmem:[#allocation2] sm:$0xff]
        %v988 = vld [vmem:[#allocation2 + $0x8] sm:$0xff]
        %v989 = vld [vmem:[#allocation2 + $0x10] sm:$0xff]
        %v990 = vld [vmem:[#allocation2 + $0x18] sm:$0xff]
        %v991 = vld [vmem:[#allocation2 + $0x20] sm:$0xff]
        %v992 = vld [vmem:[#allocation2 + $0x28] sm:$0xff]
        %v993 = vld [vmem:[#allocation2 + $0x30] sm:$0xff]
        %v994 = vld [vmem:[#allocation2 + $0x38] sm:$0xff]
        %v995 = vld [vmem:[#allocation2 + $0x40] sm:$0xff]
        %v996 = vld [vmem:[#allocation2 + $0x48] sm:$0xff]
        %v997 = vld [vmem:[#allocation2 + $0x50] sm:$0xff]
        %v998 = vld [vmem:[#allocation2 + $0x58] sm:$0xff]
        %v999 = vld [vmem:[#allocation2 + $0x60] sm:$0xff]
        %v1000 = vld [vmem:[#allocation2 + $0x68] sm:$0xff]
        %v1001 = vld [vmem:[#allocation2 + $0x70] sm:$0xff]
        %v1002 = vld [vmem:[#allocation2 + $0x78] sm:$0xff]
        %v1003 = vld [vmem:[#allocation2 + $0x80] sm:$0xff]
        %v1004 = vld [vmem:[#allocation2 + $0x88] sm:$0xff]
        %v1005 = vadd.f32 %v987, %v917
        %v1006 = vadd.f32 %v988, %v920
        %v1007 = vadd.f32 %v989, %v925
        %v1008 = vadd.f32 %v990, %v928
        %v1009 = vadd.f32 %v991, %v933
        %v1010 = vadd.f32 %v992, %v936
        %v1011 = vadd.f32 %v993, %v941
        %v1012 = vadd.f32 %v994, %v944
        %v1013 = vadd.f32 %v995, %v949
        %v1014 = vadd.f32 %v996, %v952
        %v1015 = vadd.f32 %v997, %v957
        %v1016 = vadd.f32 %v998, %v960
        %v1017 = vadd.f32 %v999, %v965
        %v1018 = vadd.f32 %v1000, %v968
        %v1019 = vadd.f32 %v1001, %v973
        %v1020 = vadd.f32 %v1002, %v976
        %v1021 = vadd.f32 %v1003, %v981
        %v1022 = vadd.f32 %v1004, %v984
        %1023 = vst.msk [vmem:[#allocation2] sm:$0xff] %vm273, %v1005
        %1024 = vst.msk [vmem:[#allocation2 + $0x8] sm:$0xff] %vm273, %v1006
        %1025 = vst.msk [vmem:[#allocation2 + $0x10] sm:$0xff] %vm273, %v1007
        %1026 = vst.msk [vmem:[#allocation2 + $0x18] sm:$0xff] %vm273, %v1008
        %1027 = vst.msk [vmem:[#allocation2 + $0x20] sm:$0xff] %vm273, %v1009
        %1028 = vst.msk [vmem:[#allocation2 + $0x28] sm:$0xff] %vm273, %v1010
        %1029 = vst.msk [vmem:[#allocation2 + $0x30] sm:$0xff] %vm273, %v1011
        %1030 = vst.msk [vmem:[#allocation2 + $0x38] sm:$0xff] %vm273, %v1012
        %1031 = vst.msk [vmem:[#allocation2 + $0x40] sm:$0xff] %vm273, %v1013
        %1032 = vst.msk [vmem:[#allocation2 + $0x48] sm:$0xff] %vm273, %v1014
        %1033 = vst.msk [vmem:[#allocation2 + $0x50] sm:$0xff] %vm273, %v1015
        %1034 = vst.msk [vmem:[#allocation2 + $0x58] sm:$0xff] %vm273, %v1016
        %1035 = vst.msk [vmem:[#allocation2 + $0x60] sm:$0xff] %vm273, %v1017
        %1036 = vst.msk [vmem:[#allocation2 + $0x68] sm:$0xff] %vm273, %v1018
        %1037 = vst.msk [vmem:[#allocation2 + $0x70] sm:$0xff] %vm273, %v1019
        %1038 = vst.msk [vmem:[#allocation2 + $0x78] sm:$0xff] %vm273, %v1020
        %1039 = vst.msk [vmem:[#allocation2 + $0x80] sm:$0xff] %vm273, %v1021
        %1040 = vst.msk [vmem:[#allocation2 + $0x88] sm:$0xff] %vm273, %v1022
        %v1041 = vld [vmem:[%s205 + $0x8] sm:$0xe]
        %v1042 = vld [vmem:[%s205 + $0xc] sm:$0xf]
        %v1043 = vld [vmem:[%s205 + $0x10] sm:$0xf]
        %v1044 = vld [vmem:[%s205 + $0x14] sm:$0xf]
        %v1045 = vld [vmem:[%s205 + $0x18] sm:$0xf]
        %v1046 = vld [vmem:[%s205 + $0x1c] sm:$0xf]
        %v1047 = vld [vmem:[%s205 + $0x20] sm:$0xf]
        %v1048 = vld [vmem:[%s205 + $0x24] sm:$0xf]
        %v1049 = vld [vmem:[%s205 + $0x28] sm:$0xf]
        %v1050 = vld [vmem:[%s205 + $0x2c] sm:$0xf]
        %v1051 = vld [vmem:[%s205 + $0x30] sm:$0xf]
        %v1052 = vld [vmem:[%s205 + $0x34] sm:$0xf]
        %v1053 = vld [vmem:[%s205 + $0x38] sm:$0xf]
        %v1054 = vld [vmem:[%s205 + $0x3c] sm:$0xf]
        %v1055 = vld [vmem:[%s205 + $0x40] sm:$0xf]
        %v1056 = vld [vmem:[%s205 + $0x44] sm:$0xf]
        %v1057 = vld [vmem:[%s205 + $0x48] sm:$0xf]
        %v1058 = vld [vmem:[%s205 + $0x4c] sm:$0xf]
        %v1059 = vld [vmem:[%s205 + $0x50] sm:$0x3]
        %s1060 = scalar_lea.vmem %s1, 6
        %v1061 = vld [vmem:[%s1060] sm:$0x3]
        %v1081 = vunpack.c.l.b16 %v1041
        %v1082 = vunpack.c.l.b16 %v1042
        %v1083 = vunpack.c.l.b16 %v1043
        %v1084 = vunpack.c.l.b16 %v1044
        %v1085 = vunpack.c.l.b16 %v1045
        %v1086 = vunpack.c.l.b16 %v1046
        %v1087 = vunpack.c.l.b16 %v1047
        %v1088 = vunpack.c.l.b16 %v1048
        %v1089 = vunpack.c.l.b16 %v1049
        %v1090 = vunpack.c.l.b16 %v1050
        %v1091 = vunpack.c.l.b16 %v1051
        %v1092 = vunpack.c.l.b16 %v1052
        %v1093 = vunpack.c.l.b16 %v1053
        %v1094 = vunpack.c.l.b16 %v1054
        %v1095 = vunpack.c.l.b16 %v1055
        %v1096 = vunpack.c.l.b16 %v1056
        %v1097 = vunpack.c.l.b16 %v1057
        %v1098 = vunpack.c.l.b16 %v1058
        %v1099 = vunpack.c.l.b16 %v1059
        %v1100 = vpack.c.b16 %v1082, %v1081
        %v1101 = vpack.c.b16 %v1084, %v1083
        %v1102 = vpack.c.b16 %v1086, %v1085
        %v1103 = vpack.c.b16 %v1088, %v1087
        %v1104 = vpack.c.b16 %v1090, %v1089
        %v1105 = vpack.c.b16 %v1092, %v1091
        %v1106 = vpack.c.b16 %v1094, %v1093
        %v1107 = vpack.c.b16 %v1096, %v1095
        %v1108 = vpack.c.b16 %v1098, %v1097
        %v1109 = vpack.c.b16 %v1099, %v1099
        %vm1110 = vsmask.f32 6400
        %v1112 = vshrl.u32 %v1100, 16
        %v1114 = vrot.slane %v1112, 1
        %v1115 = vshll.u32 %v1100, 16
        %v1117 = vrot.slane %v1115, 2
        %v1118 = vor.u32 %v1114, %v1117
        %v1120 = vshrl.u32 %v1101, 16
        %v1122 = vrot.slane %v1120, 1
        %v1123 = vshll.u32 %v1101, 16
        %v1125 = vrot.slane %v1123, 2
        %v1126 = vor.u32 %v1122, %v1125
        %v1127 = vsel %vm1110, %v1118, %v1126
        %v1129 = vshrl.u32 %v1102, 16
        %v1131 = vrot.slane %v1129, 1
        %v1132 = vshll.u32 %v1102, 16
        %v1134 = vrot.slane %v1132, 2
        %v1135 = vor.u32 %v1131, %v1134
        %v1136 = vsel %vm1110, %v1126, %v1135
        %v1138 = vshrl.u32 %v1103, 16
        %v1140 = vrot.slane %v1138, 1
        %v1141 = vshll.u32 %v1103, 16
        %v1143 = vrot.slane %v1141, 2
        %v1144 = vor.u32 %v1140, %v1143
        %v1145 = vsel %vm1110, %v1135, %v1144
        %v1147 = vshrl.u32 %v1104, 16
        %v1149 = vrot.slane %v1147, 1
        %v1150 = vshll.u32 %v1104, 16
        %v1152 = vrot.slane %v1150, 2
        %v1153 = vor.u32 %v1149, %v1152
        %v1154 = vsel %vm1110, %v1144, %v1153
        %v1156 = vshrl.u32 %v1105, 16
        %v1158 = vrot.slane %v1156, 1
        %v1159 = vshll.u32 %v1105, 16
        %v1161 = vrot.slane %v1159, 2
        %v1162 = vor.u32 %v1158, %v1161
        %v1163 = vsel %vm1110, %v1153, %v1162
        %v1165 = vshrl.u32 %v1106, 16
        %v1167 = vrot.slane %v1165, 1
        %v1168 = vshll.u32 %v1106, 16
        %v1170 = vrot.slane %v1168, 2
        %v1171 = vor.u32 %v1167, %v1170
        %v1172 = vsel %vm1110, %v1162, %v1171
        %v1174 = vshrl.u32 %v1107, 16
        %v1176 = vrot.slane %v1174, 1
        %v1177 = vshll.u32 %v1107, 16
        %v1179 = vrot.slane %v1177, 2
        %v1180 = vor.u32 %v1176, %v1179
        %v1181 = vsel %vm1110, %v1171, %v1180
        %v1183 = vshrl.u32 %v1108, 16
        %v1185 = vrot.slane %v1183, 1
        %v1186 = vshll.u32 %v1108, 16
        %v1188 = vrot.slane %v1186, 2
        %v1189 = vor.u32 %v1185, %v1188
        %v1190 = vsel %vm1110, %v1180, %v1189
        %v1192 = vshrl.u32 %v1109, 16
        %v1194 = vrot.slane %v1192, 1
        %v1195 = vshll.u32 %v1109, 16
        %v1197 = vrot.slane %v1195, 2
        %v1198 = vor.u32 %v1194, %v1197
        %v1199 = vsel %vm1110, %v1189, %v1198
        %v1201 = vsel %vm273, %v1127, 0
        %v1204 = vsel %vm273, %v1136, 0
        %v1207 = vsel %vm273, %v1145, 0
        %v1210 = vsel %vm273, %v1154, 0
        %v1213 = vsel %vm273, %v1163, 0
        %v1216 = vsel %vm273, %v1172, 0
        %v1219 = vsel %vm273, %v1181, 0
        %v1222 = vsel %vm273, %v1190, 0
        %v1225 = vsel %vm273, %v1199, 0
        %v1228 = vsel %vm301, %v1061, 0
        %1230 = vmatprep.subr.bf16.mxu0 0
        %1231 = vmatpush1.bf16.msra.mxu0 %v1228
        %1232 = vmatprep.subr.bf16.mxu0 0
        %1233 = vmatpush1.bf16.msra.mxu0 0
        %1234 = vmatprep.subr.bf16.mxu0 0
        %1235 = vmatpush1.bf16.msra.mxu0 0
        %1236 = vmatprep.subr.bf16.mxu0 0
        %1237 = vmatpush1.bf16.msra.mxu0 0
        %1238 = vmatprep.subr.bf16.mxu0 0
        %1239 = vmatpush1.bf16.msra.mxu0 0
        %1240 = vmatprep.subr.bf16.mxu0 0
        %1241 = vmatpush1.bf16.msra.mxu0 0
        %1242 = vmatprep.subr.bf16.mxu0 0
        %1243 = vmatpush1.bf16.msra.mxu0 0
        %1244 = vmatprep.subr.bf16.mxu0 0
        %1245 = vmatpush1.bf16.msra.mxu0 0
        %1246 = vmatprep.subr.bf16.mxu0 0
        %1247 = vmatpush1.bf16.msra.mxu0 0
        %1248 = vmatprep.subr.bf16.mxu0 0
        %1249 = vmatpush1.bf16.msra.mxu0 0
        %1250 = vmatprep.subr.bf16.mxu0 0
        %1251 = vmatpush1.bf16.msra.mxu0 0
        %1252 = vmatprep.subr.bf16.mxu0 0
        %1253 = vmatpush1.bf16.msra.mxu0 0
        %1254 = vmatprep.subr.bf16.mxu0 0
        %1255 = vmatpush1.bf16.msra.mxu0 0
        %1256 = vmatprep.subr.bf16.mxu0 0
        %1257 = vmatpush1.bf16.msra.mxu0 0
        %1258 = vmatprep.subr.bf16.mxu0 0
        %1259 = vmatpush1.bf16.msra.mxu0 0
        %1260 = vmatprep.subr.bf16.mxu0 0
        %1261 = vmatpush1.bf16.msra.mxu0 0
        %1262 = vmatprep.mubr.bf16.mxu0 0
        %1263 = vmatmul.mubr.bf16.gmra.mrb[0].mxu0 %v1201
        %v1264 = vpop.f32.mrb[0].mxu0
        %v1265 = vadd.f32 0.0, %v1264
        %v1266 = vpop.f32.mrb[0].mxu0
        %v1267 = vpop.f32.mrb[0].mxu0
        %v1268 = vadd.f32 0.0, %v1267
        %v1269 = vpop.f32.mrb[0].mxu0
        %1270 = vmatprep.mubr.bf16.mxu0 0
        %1271 = vmatmul.mubr.bf16.gmra.mrb[0].mxu0 %v1204
        %v1272 = vpop.f32.mrb[0].mxu0
        %v1273 = vadd.f32 0.0, %v1272
        %v1274 = vpop.f32.mrb[0].mxu0
        %v1275 = vpop.f32.mrb[0].mxu0
        %v1276 = vadd.f32 0.0, %v1275
        %v1277 = vpop.f32.mrb[0].mxu0
        %1278 = vmatprep.mubr.bf16.mxu0 0
        %1279 = vmatmul.mubr.bf16.gmra.mrb[0].mxu0 %v1207
        %v1280 = vpop.f32.mrb[0].mxu0
        %v1281 = vadd.f32 0.0, %v1280
        %v1282 = vpop.f32.mrb[0].mxu0
        %v1283 = vpop.f32.mrb[0].mxu0
        %v1284 = vadd.f32 0.0, %v1283
        %v1285 = vpop.f32.mrb[0].mxu0
        %1286 = vmatprep.mubr.bf16.mxu0 0
        %1287 = vmatmul.mubr.bf16.gmra.mrb[0].mxu0 %v1210
        %v1288 = vpop.f32.mrb[0].mxu0
        %v1289 = vadd.f32 0.0, %v1288
        %v1290 = vpop.f32.mrb[0].mxu0
        %v1291 = vpop.f32.mrb[0].mxu0
        %v1292 = vadd.f32 0.0, %v1291
        %v1293 = vpop.f32.mrb[0].mxu0
        %1294 = vmatprep.mubr.bf16.mxu0 0
        %1295 = vmatmul.mubr.bf16.gmra.mrb[0].mxu0 %v1213
        %v1296 = vpop.f32.mrb[0].mxu0
        %v1297 = vadd.f32 0.0, %v1296
        %v1298 = vpop.f32.mrb[0].mxu0
        %v1299 = vpop.f32.mrb[0].mxu0
        %v1300 = vadd.f32 0.0, %v1299
        %v1301 = vpop.f32.mrb[0].mxu0
        %1302 = vmatprep.mubr.bf16.mxu0 0
        %1303 = vmatmul.mubr.bf16.gmra.mrb[0].mxu0 %v1216
        %v1304 = vpop.f32.mrb[0].mxu0
        %v1305 = vadd.f32 0.0, %v1304
        %v1306 = vpop.f32.mrb[0].mxu0
        %v1307 = vpop.f32.mrb[0].mxu0
        %v1308 = vadd.f32 0.0, %v1307
        %v1309 = vpop.f32.mrb[0].mxu0
        %1310 = vmatprep.mubr.bf16.mxu0 0
        %1311 = vmatmul.mubr.bf16.gmra.mrb[0].mxu0 %v1219
        %v1312 = vpop.f32.mrb[0].mxu0
        %v1313 = vadd.f32 0.0, %v1312
        %v1314 = vpop.f32.mrb[0].mxu0
        %v1315 = vpop.f32.mrb[0].mxu0
        %v1316 = vadd.f32 0.0, %v1315
        %v1317 = vpop.f32.mrb[0].mxu0
        %1318 = vmatprep.mubr.bf16.mxu0 0
        %1319 = vmatmul.mubr.bf16.gmra.mrb[0].mxu0 %v1222
        %v1320 = vpop.f32.mrb[0].mxu0
        %v1321 = vadd.f32 0.0, %v1320
        %v1322 = vpop.f32.mrb[0].mxu0
        %v1323 = vpop.f32.mrb[0].mxu0
        %v1324 = vadd.f32 0.0, %v1323
        %v1325 = vpop.f32.mrb[0].mxu0
        %1326 = vmatprep.mubr.bf16.mxu0 0
        %1327 = vmatmul.mubr.bf16.gmra.mrb[0].mxu0 %v1225
        %v1328 = vpop.f32.mrb[0].mxu0
        %v1329 = vadd.f32 0.0, %v1328
        %v1330 = vpop.f32.mrb[0].mxu0
        %v1331 = vpop.f32.mrb[0].mxu0
        %v1332 = vadd.f32 0.0, %v1331
        %v1333 = vpop.f32.mrb[0].mxu0
        %1334 = vdwg.mxu0
        %v1335 = vld [vmem:[#allocation2] sm:$0xff]
        %v1336 = vld [vmem:[#allocation2 + $0x8] sm:$0xff]
        %v1337 = vld [vmem:[#allocation2 + $0x10] sm:$0xff]
        %v1338 = vld [vmem:[#allocation2 + $0x18] sm:$0xff]
        %v1339 = vld [vmem:[#allocation2 + $0x20] sm:$0xff]
        %v1340 = vld [vmem:[#allocation2 + $0x28] sm:$0xff]
        %v1341 = vld [vmem:[#allocation2 + $0x30] sm:$0xff]
        %v1342 = vld [vmem:[#allocation2 + $0x38] sm:$0xff]
        %v1343 = vld [vmem:[#allocation2 + $0x40] sm:$0xff]
        %v1344 = vld [vmem:[#allocation2 + $0x48] sm:$0xff]
        %v1345 = vld [vmem:[#allocation2 + $0x50] sm:$0xff]
        %v1346 = vld [vmem:[#allocation2 + $0x58] sm:$0xff]
        %v1347 = vld [vmem:[#allocation2 + $0x60] sm:$0xff]
        %v1348 = vld [vmem:[#allocation2 + $0x68] sm:$0xff]
        %v1349 = vld [vmem:[#allocation2 + $0x70] sm:$0xff]
        %v1350 = vld [vmem:[#allocation2 + $0x78] sm:$0xff]
        %v1351 = vld [vmem:[#allocation2 + $0x80] sm:$0xff]
        %v1352 = vld [vmem:[#allocation2 + $0x88] sm:$0xff]
        %v1353 = vadd.f32 %v1335, %v1265
        %v1354 = vadd.f32 %v1336, %v1268
        %v1355 = vadd.f32 %v1337, %v1273
        %v1356 = vadd.f32 %v1338, %v1276
        %v1357 = vadd.f32 %v1339, %v1281
        %v1358 = vadd.f32 %v1340, %v1284
        %v1359 = vadd.f32 %v1341, %v1289
        %v1360 = vadd.f32 %v1342, %v1292
        %v1361 = vadd.f32 %v1343, %v1297
        %v1362 = vadd.f32 %v1344, %v1300
        %v1363 = vadd.f32 %v1345, %v1305
        %v1364 = vadd.f32 %v1346, %v1308
        %v1365 = vadd.f32 %v1347, %v1313
        %v1366 = vadd.f32 %v1348, %v1316
        %v1367 = vadd.f32 %v1349, %v1321
        %v1368 = vadd.f32 %v1350, %v1324
        %v1369 = vadd.f32 %v1351, %v1329
        %v1370 = vadd.f32 %v1352, %v1332
        %1371 = vst.msk [vmem:[#allocation2] sm:$0xff] %vm273, %v1353
        %1372 = vst.msk [vmem:[#allocation2 + $0x8] sm:$0xff] %vm273, %v1354
        %1373 = vst.msk [vmem:[#allocation2 + $0x10] sm:$0xff] %vm273, %v1355
        %1374 = vst.msk [vmem:[#allocation2 + $0x18] sm:$0xff] %vm273, %v1356
        %1375 = vst.msk [vmem:[#allocation2 + $0x20] sm:$0xff] %vm273, %v1357
        %1376 = vst.msk [vmem:[#allocation2 + $0x28] sm:$0xff] %vm273, %v1358
        %1377 = vst.msk [vmem:[#allocation2 + $0x30] sm:$0xff] %vm273, %v1359
        %1378 = vst.msk [vmem:[#allocation2 + $0x38] sm:$0xff] %vm273, %v1360
        %1379 = vst.msk [vmem:[#allocation2 + $0x40] sm:$0xff] %vm273, %v1361
        %1380 = vst.msk [vmem:[#allocation2 + $0x48] sm:$0xff] %vm273, %v1362
        %1381 = vst.msk [vmem:[#allocation2 + $0x50] sm:$0xff] %vm273, %v1363
        %1382 = vst.msk [vmem:[#allocation2 + $0x58] sm:$0xff] %vm273, %v1364
        %1383 = vst.msk [vmem:[#allocation2 + $0x60] sm:$0xff] %vm273, %v1365
        %1384 = vst.msk [vmem:[#allocation2 + $0x68] sm:$0xff] %vm273, %v1366
        %1385 = vst.msk [vmem:[#allocation2 + $0x70] sm:$0xff] %vm273, %v1367
        %1386 = vst.msk [vmem:[#allocation2 + $0x78] sm:$0xff] %vm273, %v1368
        %1387 = vst.msk [vmem:[#allocation2 + $0x80] sm:$0xff] %vm273, %v1369
        %1388 = vst.msk [vmem:[#allocation2 + $0x88] sm:$0xff] %vm273, %v1370
        %v1389 = vld [vmem:[#allocation2] sm:$0xff]
        %v1390 = vld [vmem:[#allocation2 + $0x8] sm:$0xff]
        %v1391 = vld [vmem:[#allocation2 + $0x10] sm:$0xff]
        %v1392 = vld [vmem:[#allocation2 + $0x18] sm:$0xff]
        %v1393 = vld [vmem:[#allocation2 + $0x20] sm:$0xff]
        %v1394 = vld [vmem:[#allocation2 + $0x28] sm:$0xff]
        %v1395 = vld [vmem:[#allocation2 + $0x30] sm:$0xff]
        %v1396 = vld [vmem:[#allocation2 + $0x38] sm:$0xff]
        %v1397 = vld [vmem:[#allocation2 + $0x40] sm:$0xff]
        %v1398 = vld [vmem:[#allocation2 + $0x48] sm:$0xff]
        %v1399 = vld [vmem:[#allocation2 + $0x50] sm:$0xff]
        %v1400 = vld [vmem:[#allocation2 + $0x58] sm:$0xff]
        %v1401 = vld [vmem:[#allocation2 + $0x60] sm:$0xff]
        %v1402 = vld [vmem:[#allocation2 + $0x68] sm:$0xff]
        %v1403 = vld [vmem:[#allocation2 + $0x70] sm:$0xff]
        %v1404 = vld [vmem:[#allocation2 + $0x78] sm:$0xff]
        %v1405 = vld [vmem:[#allocation2 + $0x80] sm:$0xff]
        %v1406 = vld [vmem:[#allocation2 + $0x88] sm:$0xff]
        %v1408 = vlaneseq
        %v1409 = vshrl.u32 %v1408, 7
        %v1410 = vsub.s32 0, %v1409
        %v1411 = vrot.slane %v208, %v1410
        %v1413 = vadd.f32 %v1389, %v1411
        %v1414 = vadd.f32 %v1390, %v1411
        %v1415 = vadd.f32 %v1391, %v1411
        %v1416 = vadd.f32 %v1392, %v1411
        %v1417 = vadd.f32 %v1393, %v1411
        %v1418 = vadd.f32 %v1394, %v1411
        %v1419 = vadd.f32 %v1395, %v1411
        %v1420 = vadd.f32 %v1396, %v1411
        %v1421 = vadd.f32 %v1397, %v1411
        %v1422 = vadd.f32 %v1398, %v1411
        %v1423 = vadd.f32 %v1399, %v1411
        %v1424 = vadd.f32 %v1400, %v1411
        %v1425 = vadd.f32 %v1401, %v1411
        %v1426 = vadd.f32 %v1402, %v1411
        %v1427 = vadd.f32 %v1403, %v1411
        %v1428 = vadd.f32 %v1404, %v1411
        %v1429 = vadd.f32 %v1405, %v1411
        %v1430 = vadd.f32 %v1406, %v1411
        %1431 = vst.msk [vmem:[%s196] sm:$0xff] %vm273, %v1413
        %1432 = vst.msk [vmem:[%s196 + $0x8] sm:$0xff] %vm273, %v1414
        %1433 = vst.msk [vmem:[%s196 + $0x10] sm:$0xff] %vm273, %v1415
        %1434 = vst.msk [vmem:[%s196 + $0x18] sm:$0xff] %vm273, %v1416
        %1435 = vst.msk [vmem:[%s196 + $0x20] sm:$0xff] %vm273, %v1417
        %1436 = vst.msk [vmem:[%s196 + $0x28] sm:$0xff] %vm273, %v1418
        %1437 = vst.msk [vmem:[%s196 + $0x30] sm:$0xff] %vm273, %v1419
        %1438 = vst.msk [vmem:[%s196 + $0x38] sm:$0xff] %vm273, %v1420
        %1439 = vst.msk [vmem:[%s196 + $0x40] sm:$0xff] %vm273, %v1421
        %1440 = vst.msk [vmem:[%s196 + $0x48] sm:$0xff] %vm273, %v1422
        %1441 = vst.msk [vmem:[%s196 + $0x50] sm:$0xff] %vm273, %v1423
        %1442 = vst.msk [vmem:[%s196 + $0x58] sm:$0xff] %vm273, %v1424
        %1443 = vst.msk [vmem:[%s196 + $0x60] sm:$0xff] %vm273, %v1425
        %1444 = vst.msk [vmem:[%s196 + $0x68] sm:$0xff] %vm273, %v1426
        %1445 = vst.msk [vmem:[%s196 + $0x70] sm:$0xff] %vm273, %v1427
        %1446 = vst.msk [vmem:[%s196 + $0x78] sm:$0xff] %vm273, %v1428
        %1447 = vst.msk [vmem:[%s196 + $0x80] sm:$0xff] %vm273, %v1429
        %1448 = vst.msk [vmem:[%s196 + $0x88] sm:$0xff] %vm273, %v1430
        %v1449 = vld [vmem:[%s205] sm:$0xf]
        %v1450 = vld [vmem:[%s205 + $0x4] sm:$0xf]
        %v1451 = vld [vmem:[%s205 + $0x8] sm:$0xf]
        %v1452 = vld [vmem:[%s205 + $0xc] sm:$0xf]
        %v1453 = vld [vmem:[%s205 + $0x10] sm:$0xf]
        %v1454 = vld [vmem:[%s205 + $0x14] sm:$0xf]
        %v1455 = vld [vmem:[%s205 + $0x18] sm:$0xf]
        %v1456 = vld [vmem:[%s205 + $0x1c] sm:$0xf]
        %v1457 = vld [vmem:[%s205 + $0x20] sm:$0xf]
        %v1458 = vld [vmem:[%s205 + $0x24] sm:$0xf]
        %v1459 = vld [vmem:[%s205 + $0x28] sm:$0xf]
        %v1460 = vld [vmem:[%s205 + $0x2c] sm:$0xf]
        %v1461 = vld [vmem:[%s205 + $0x30] sm:$0xf]
        %v1462 = vld [vmem:[%s205 + $0x34] sm:$0xf]
        %v1463 = vld [vmem:[%s205 + $0x38] sm:$0xf]
        %v1464 = vld [vmem:[%s205 + $0x3c] sm:$0xf]
        %v1465 = vld [vmem:[%s205 + $0x40] sm:$0xf]
        %v1466 = vld [vmem:[%s205 + $0x44] sm:$0xf]
        %v1467 = vld [vmem:[%s205 + $0x48] sm:$0x1]
        %s1468 = scalar_lea.vmem %s1, 8
        %v1469 = vld [vmem:[%s1468] sm:$0x3]
        %v1489 = vunpack.c.l.b16 %v1449
        %v1490 = vunpack.c.l.b16 %v1450
        %v1491 = vunpack.c.l.b16 %v1451
        %v1492 = vunpack.c.l.b16 %v1452
        %v1493 = vunpack.c.l.b16 %v1453
        %v1494 = vunpack.c.l.b16 %v1454
        %v1495 = vunpack.c.l.b16 %v1455
        %v1496 = vunpack.c.l.b16 %v1456
        %v1497 = vunpack.c.l.b16 %v1457
        %v1498 = vunpack.c.l.b16 %v1458
        %v1499 = vunpack.c.l.b16 %v1459
        %v1500 = vunpack.c.l.b16 %v1460
        %v1501 = vunpack.c.l.b16 %v1461
        %v1502 = vunpack.c.l.b16 %v1462
        %v1503 = vunpack.c.l.b16 %v1463
        %v1504 = vunpack.c.l.b16 %v1464
        %v1505 = vunpack.c.l.b16 %v1465
        %v1506 = vunpack.c.l.b16 %v1466
        %v1507 = vunpack.c.l.b16 %v1467
        %v1508 = vpack.c.b16 %v1490, %v1489
        %v1509 = vpack.c.b16 %v1492, %v1491
        %v1510 = vpack.c.b16 %v1494, %v1493
        %v1511 = vpack.c.b16 %v1496, %v1495
        %v1512 = vpack.c.b16 %v1498, %v1497
        %v1513 = vpack.c.b16 %v1500, %v1499
        %v1514 = vpack.c.b16 %v1502, %v1501
        %v1515 = vpack.c.b16 %v1504, %v1503
        %v1516 = vpack.c.b16 %v1506, %v1505
        %v1517 = vpack.c.b16 %v1507, %v1507
        %v1519 = vshrl.u32 %v1508, 16
        %v1521 = vshll.u32 %v1508, 16
        %v1523 = vrot.slane %v1521, 1
        %v1524 = vor.u32 %v1519, %v1523
        %v1526 = vshll.u32 %v1509, 16
        %v1528 = vrot.slane %v1526, 1
        %v1529 = vsel %vm497, %v1524, %v1528
        %v1530 = vshrl.u32 %v1509, 16
        %v1532 = vor.u32 %v1530, %v1528
        %v1534 = vshll.u32 %v1510, 16
        %v1536 = vrot.slane %v1534, 1
        %v1537 = vsel %vm497, %v1532, %v1536
        %v1538 = vshrl.u32 %v1510, 16
        %v1540 = vor.u32 %v1538, %v1536
        %v1542 = vshll.u32 %v1511, 16
        %v1544 = vrot.slane %v1542, 1
        %v1545 = vsel %vm497, %v1540, %v1544
        %v1546 = vshrl.u32 %v1511, 16
        %v1548 = vor.u32 %v1546, %v1544
        %v1550 = vshll.u32 %v1512, 16
        %v1552 = vrot.slane %v1550, 1
        %v1553 = vsel %vm497, %v1548, %v1552
        %v1554 = vshrl.u32 %v1512, 16
        %v1556 = vor.u32 %v1554, %v1552
        %v1558 = vshll.u32 %v1513, 16
        %v1560 = vrot.slane %v1558, 1
        %v1561 = vsel %vm497, %v1556, %v1560
        %v1562 = vshrl.u32 %v1513, 16
        %v1564 = vor.u32 %v1562, %v1560
        %v1566 = vshll.u32 %v1514, 16
        %v1568 = vrot.slane %v1566, 1
        %v1569 = vsel %vm497, %v1564, %v1568
        %v1570 = vshrl.u32 %v1514, 16
        %v1572 = vor.u32 %v1570, %v1568
        %v1574 = vshll.u32 %v1515, 16
        %v1576 = vrot.slane %v1574, 1
        %v1577 = vsel %vm497, %v1572, %v1576
        %v1578 = vshrl.u32 %v1515, 16
        %v1580 = vor.u32 %v1578, %v1576
        %v1582 = vshll.u32 %v1516, 16
        %v1584 = vrot.slane %v1582, 1
        %v1585 = vsel %vm497, %v1580, %v1584
        %v1586 = vshrl.u32 %v1516, 16
        %v1588 = vor.u32 %v1586, %v1584
        %v1590 = vshll.u32 %v1517, 16
        %v1592 = vrot.slane %v1590, 1
        %v1593 = vsel %vm497, %v1588, %v1592
        %v1595 = vsel %vm273, %v1529, 0
        %v1598 = vsel %vm273, %v1537, 0
        %v1601 = vsel %vm273, %v1545, 0
        %v1604 = vsel %vm273, %v1553, 0
        %v1607 = vsel %vm273, %v1561, 0
        %v1610 = vsel %vm273, %v1569, 0
        %v1613 = vsel %vm273, %v1577, 0
        %v1616 = vsel %vm273, %v1585, 0
        %v1619 = vsel %vm273, %v1593, 0
        %v1622 = vsel %vm301, %v1469, 0
        %1624 = vmatprep.subr.bf16.mxu0 0
        %1625 = vmatpush1.bf16.msra.mxu0 %v1622
        %1626 = vmatprep.subr.bf16.mxu0 0
        %1627 = vmatpush1.bf16.msra.mxu0 0
        %1628 = vmatprep.subr.bf16.mxu0 0
        %1629 = vmatpush1.bf16.msra.mxu0 0
        %1630 = vmatprep.subr.bf16.mxu0 0
        %1631 = vmatpush1.bf16.msra.mxu0 0
        %1632 = vmatprep.subr.bf16.mxu0 0
        %1633 = vmatpush1.bf16.msra.mxu0 0
        %1634 = vmatprep.subr.bf16.mxu0 0
        %1635 = vmatpush1.bf16.msra.mxu0 0
        %1636 = vmatprep.subr.bf16.mxu0 0
        %1637 = vmatpush1.bf16.msra.mxu0 0
        %1638 = vmatprep.subr.bf16.mxu0 0
        %1639 = vmatpush1.bf16.msra.mxu0 0
        %1640 = vmatprep.subr.bf16.mxu0 0
        %1641 = vmatpush1.bf16.msra.mxu0 0
        %1642 = vmatprep.subr.bf16.mxu0 0
        %1643 = vmatpush1.bf16.msra.mxu0 0
        %1644 = vmatprep.subr.bf16.mxu0 0
        %1645 = vmatpush1.bf16.msra.mxu0 0
        %1646 = vmatprep.subr.bf16.mxu0 0
        %1647 = vmatpush1.bf16.msra.mxu0 0
        %1648 = vmatprep.subr.bf16.mxu0 0
        %1649 = vmatpush1.bf16.msra.mxu0 0
        %1650 = vmatprep.subr.bf16.mxu0 0
        %1651 = vmatpush1.bf16.msra.mxu0 0
        %1652 = vmatprep.subr.bf16.mxu0 0
        %1653 = vmatpush1.bf16.msra.mxu0 0
        %1654 = vmatprep.subr.bf16.mxu0 0
        %1655 = vmatpush1.bf16.msra.mxu0 0
        %1656 = vmatprep.mubr.bf16.mxu0 0
        %1657 = vmatmul.mubr.bf16.gmra.mrb[0].mxu0 %v1595
        %v1658 = vpop.f32.mrb[0].mxu0
        %v1659 = vadd.f32 0.0, %v1658
        %v1660 = vpop.f32.mrb[0].mxu0
        %v1661 = vpop.f32.mrb[0].mxu0
        %v1662 = vadd.f32 0.0, %v1661
        %v1663 = vpop.f32.mrb[0].mxu0
        %1664 = vmatprep.mubr.bf16.mxu0 0
        %1665 = vmatmul.mubr.bf16.gmra.mrb[0].mxu0 %v1598
        %v1666 = vpop.f32.mrb[0].mxu0
        %v1667 = vadd.f32 0.0, %v1666
        %v1668 = vpop.f32.mrb[0].mxu0
        %v1669 = vpop.f32.mrb[0].mxu0
        %v1670 = vadd.f32 0.0, %v1669
        %v1671 = vpop.f32.mrb[0].mxu0
        %1672 = vmatprep.mubr.bf16.mxu0 0
        %1673 = vmatmul.mubr.bf16.gmra.mrb[0].mxu0 %v1601
        %v1674 = vpop.f32.mrb[0].mxu0
        %v1675 = vadd.f32 0.0, %v1674
        %v1676 = vpop.f32.mrb[0].mxu0
        %v1677 = vpop.f32.mrb[0].mxu0
        %v1678 = vadd.f32 0.0, %v1677
        %v1679 = vpop.f32.mrb[0].mxu0
        %1680 = vmatprep.mubr.bf16.mxu0 0
        %1681 = vmatmul.mubr.bf16.gmra.mrb[0].mxu0 %v1604
        %v1682 = vpop.f32.mrb[0].mxu0
        %v1683 = vadd.f32 0.0, %v1682
        %v1684 = vpop.f32.mrb[0].mxu0
        %v1685 = vpop.f32.mrb[0].mxu0
        %v1686 = vadd.f32 0.0, %v1685
        %v1687 = vpop.f32.mrb[0].mxu0
        %1688 = vmatprep.mubr.bf16.mxu0 0
        %1689 = vmatmul.mubr.bf16.gmra.mrb[0].mxu0 %v1607
        %v1690 = vpop.f32.mrb[0].mxu0
        %v1691 = vadd.f32 0.0, %v1690
        %v1692 = vpop.f32.mrb[0].mxu0
        %v1693 = vpop.f32.mrb[0].mxu0
        %v1694 = vadd.f32 0.0, %v1693
        %v1695 = vpop.f32.mrb[0].mxu0
        %1696 = vmatprep.mubr.bf16.mxu0 0
        %1697 = vmatmul.mubr.bf16.gmra.mrb[0].mxu0 %v1610
        %v1698 = vpop.f32.mrb[0].mxu0
        %v1699 = vadd.f32 0.0, %v1698
        %v1700 = vpop.f32.mrb[0].mxu0
        %v1701 = vpop.f32.mrb[0].mxu0
        %v1702 = vadd.f32 0.0, %v1701
        %v1703 = vpop.f32.mrb[0].mxu0
        %1704 = vmatprep.mubr.bf16.mxu0 0
        %1705 = vmatmul.mubr.bf16.gmra.mrb[0].mxu0 %v1613
        %v1706 = vpop.f32.mrb[0].mxu0
        %v1707 = vadd.f32 0.0, %v1706
        %v1708 = vpop.f32.mrb[0].mxu0
        %v1709 = vpop.f32.mrb[0].mxu0
        %v1710 = vadd.f32 0.0, %v1709
        %v1711 = vpop.f32.mrb[0].mxu0
        %1712 = vmatprep.mubr.bf16.mxu0 0
        %1713 = vmatmul.mubr.bf16.gmra.mrb[0].mxu0 %v1616
        %v1714 = vpop.f32.mrb[0].mxu0
        %v1715 = vadd.f32 0.0, %v1714
        %v1716 = vpop.f32.mrb[0].mxu0
        %v1717 = vpop.f32.mrb[0].mxu0
        %v1718 = vadd.f32 0.0, %v1717
        %v1719 = vpop.f32.mrb[0].mxu0
        %1720 = vmatprep.mubr.bf16.mxu0 0
        %1721 = vmatmul.mubr.bf16.gmra.mrb[0].mxu0 %v1619
        %v1722 = vpop.f32.mrb[0].mxu0
        %v1723 = vadd.f32 0.0, %v1722
        %v1724 = vpop.f32.mrb[0].mxu0
        %v1725 = vpop.f32.mrb[0].mxu0
        %v1726 = vadd.f32 0.0, %v1725
        %v1727 = vpop.f32.mrb[0].mxu0
        %1728 = vdwg.mxu0
        %1729 = vst.msk [vmem:[#allocation2] sm:$0xff] %vm273, %v1659
        %1730 = vst.msk [vmem:[#allocation2 + $0x8] sm:$0xff] %vm273, %v1662
        %1731 = vst.msk [vmem:[#allocation2 + $0x10] sm:$0xff] %vm273, %v1667
        %1732 = vst.msk [vmem:[#allocation2 + $0x18] sm:$0xff] %vm273, %v1670
        %1733 = vst.msk [vmem:[#allocation2 + $0x20] sm:$0xff] %vm273, %v1675
        %1734 = vst.msk [vmem:[#allocation2 + $0x28] sm:$0xff] %vm273, %v1678
        %1735 = vst.msk [vmem:[#allocation2 + $0x30] sm:$0xff] %vm273, %v1683
        %1736 = vst.msk [vmem:[#allocation2 + $0x38] sm:$0xff] %vm273, %v1686
        %1737 = vst.msk [vmem:[#allocation2 + $0x40] sm:$0xff] %vm273, %v1691
        %1738 = vst.msk [vmem:[#allocation2 + $0x48] sm:$0xff] %vm273, %v1694
        %1739 = vst.msk [vmem:[#allocation2 + $0x50] sm:$0xff] %vm273, %v1699
        %1740 = vst.msk [vmem:[#allocation2 + $0x58] sm:$0xff] %vm273, %v1702
        %1741 = vst.msk [vmem:[#allocation2 + $0x60] sm:$0xff] %vm273, %v1707
        %1742 = vst.msk [vmem:[#allocation2 + $0x68] sm:$0xff] %vm273, %v1710
        %1743 = vst.msk [vmem:[#allocation2 + $0x70] sm:$0xff] %vm273, %v1715
        %1744 = vst.msk [vmem:[#allocation2 + $0x78] sm:$0xff] %vm273, %v1718
        %1745 = vst.msk [vmem:[#allocation2 + $0x80] sm:$0xff] %vm273, %v1723
        %1746 = vst.msk [vmem:[#allocation2 + $0x88] sm:$0xff] %vm273, %v1726
        %v1747 = vld [vmem:[%s205] sm:$0xe]
        %v1748 = vld [vmem:[%s205 + $0x4] sm:$0xf]
        %v1749 = vld [vmem:[%s205 + $0x8] sm:$0xf]
        %v1750 = vld [vmem:[%s205 + $0xc] sm:$0xf]
        %v1751 = vld [vmem:[%s205 + $0x10] sm:$0xf]
        %v1752 = vld [vmem:[%s205 + $0x14] sm:$0xf]
        %v1753 = vld [vmem:[%s205 + $0x18] sm:$0xf]
        %v1754 = vld [vmem:[%s205 + $0x1c] sm:$0xf]
        %v1755 = vld [vmem:[%s205 + $0x20] sm:$0xf]
        %v1756 = vld [vmem:[%s205 + $0x24] sm:$0xf]
        %v1757 = vld [vmem:[%s205 + $0x28] sm:$0xf]
        %v1758 = vld [vmem:[%s205 + $0x2c] sm:$0xf]
        %v1759 = vld [vmem:[%s205 + $0x30] sm:$0xf]
        %v1760 = vld [vmem:[%s205 + $0x34] sm:$0xf]
        %v1761 = vld [vmem:[%s205 + $0x38] sm:$0xf]
        %v1762 = vld [vmem:[%s205 + $0x3c] sm:$0xf]
        %v1763 = vld [vmem:[%s205 + $0x40] sm:$0xf]
        %v1764 = vld [vmem:[%s205 + $0x44] sm:$0xf]
        %v1765 = vld [vmem:[%s205 + $0x48] sm:$0x1]
        %s1766 = scalar_lea.vmem %s1, 10
        %v1767 = vld [vmem:[%s1766] sm:$0x3]
        %v1787 = vunpack.c.l.b16 %v1747
        %v1788 = vunpack.c.l.b16 %v1748
        %v1789 = vunpack.c.l.b16 %v1749
        %v1790 = vunpack.c.l.b16 %v1750
        %v1791 = vunpack.c.l.b16 %v1751
        %v1792 = vunpack.c.l.b16 %v1752
        %v1793 = vunpack.c.l.b16 %v1753
        %v1794 = vunpack.c.l.b16 %v1754
        %v1795 = vunpack.c.l.b16 %v1755
        %v1796 = vunpack.c.l.b16 %v1756
        %v1797 = vunpack.c.l.b16 %v1757
        %v1798 = vunpack.c.l.b16 %v1758
        %v1799 = vunpack.c.l.b16 %v1759
        %v1800 = vunpack.c.l.b16 %v1760
        %v1801 = vunpack.c.l.b16 %v1761
        %v1802 = vunpack.c.l.b16 %v1762
        %v1803 = vunpack.c.l.b16 %v1763
        %v1804 = vunpack.c.l.b16 %v1764
        %v1805 = vunpack.c.l.b16 %v1765
        %v1806 = vpack.c.b16 %v1788, %v1787
        %v1807 = vpack.c.b16 %v1790, %v1789
        %v1808 = vpack.c.b16 %v1792, %v1791
        %v1809 = vpack.c.b16 %v1794, %v1793
        %v1810 = vpack.c.b16 %v1796, %v1795
        %v1811 = vpack.c.b16 %v1798, %v1797
        %v1812 = vpack.c.b16 %v1800, %v1799
        %v1813 = vpack.c.b16 %v1802, %v1801
        %v1814 = vpack.c.b16 %v1804, %v1803
        %v1815 = vpack.c.b16 %v1805, %v1805
        %v1816 = vrot.slane %v1806, 1
        %v1817 = vrot.slane %v1807, 1
        %v1818 = vsel %vm832, %v1816, %v1817
        %v1819 = vrot.slane %v1808, 1
        %v1820 = vsel %vm832, %v1817, %v1819
        %v1821 = vrot.slane %v1809, 1
        %v1822 = vsel %vm832, %v1819, %v1821
        %v1823 = vrot.slane %v1810, 1
        %v1824 = vsel %vm832, %v1821, %v1823
        %v1825 = vrot.slane %v1811, 1
        %v1826 = vsel %vm832, %v1823, %v1825
        %v1827 = vrot.slane %v1812, 1
        %v1828 = vsel %vm832, %v1825, %v1827
        %v1829 = vrot.slane %v1813, 1
        %v1830 = vsel %vm832, %v1827, %v1829
        %v1831 = vrot.slane %v1814, 1
        %v1832 = vsel %vm832, %v1829, %v1831
        %v1833 = vrot.slane %v1815, 1
        %v1834 = vsel %vm832, %v1831, %v1833
        %v1836 = vsel %vm273, %v1818, 0
        %v1839 = vsel %vm273, %v1820, 0
        %v1842 = vsel %vm273, %v1822, 0
        %v1845 = vsel %vm273, %v1824, 0
        %v1848 = vsel %vm273, %v1826, 0
        %v1851 = vsel %vm273, %v1828, 0
        %v1854 = vsel %vm273, %v1830, 0
        %v1857 = vsel %vm273, %v1832, 0
        %v1860 = vsel %vm273, %v1834, 0
        %v1863 = vsel %vm301, %v1767, 0
        %1865 = vmatprep.subr.bf16.mxu0 0
        %1866 = vmatpush1.bf16.msra.mxu0 %v1863
        %1867 = vmatprep.subr.bf16.mxu0 0
        %1868 = vmatpush1.bf16.msra.mxu0 0
        %1869 = vmatprep.subr.bf16.mxu0 0
        %1870 = vmatpush1.bf16.msra.mxu0 0
        %1871 = vmatprep.subr.bf16.mxu0 0
        %1872 = vmatpush1.bf16.msra.mxu0 0
        %1873 = vmatprep.subr.bf16.mxu0 0
        %1874 = vmatpush1.bf16.msra.mxu0 0
        %1875 = vmatprep.subr.bf16.mxu0 0
        %1876 = vmatpush1.bf16.msra.mxu0 0
        %1877 = vmatprep.subr.bf16.mxu0 0
        %1878 = vmatpush1.bf16.msra.mxu0 0
        %1879 = vmatprep.subr.bf16.mxu0 0
        %1880 = vmatpush1.bf16.msra.mxu0 0
        %1881 = vmatprep.subr.bf16.mxu0 0
        %1882 = vmatpush1.bf16.msra.mxu0 0
        %1883 = vmatprep.subr.bf16.mxu0 0
        %1884 = vmatpush1.bf16.msra.mxu0 0
        %1885 = vmatprep.subr.bf16.mxu0 0
        %1886 = vmatpush1.bf16.msra.mxu0 0
        %1887 = vmatprep.subr.bf16.mxu0 0
        %1888 = vmatpush1.bf16.msra.mxu0 0
        %1889 = vmatprep.subr.bf16.mxu0 0
        %1890 = vmatpush1.bf16.msra.mxu0 0
        %1891 = vmatprep.subr.bf16.mxu0 0
        %1892 = vmatpush1.bf16.msra.mxu0 0
        %1893 = vmatprep.subr.bf16.mxu0 0
        %1894 = vmatpush1.bf16.msra.mxu0 0
        %1895 = vmatprep.subr.bf16.mxu0 0
        %1896 = vmatpush1.bf16.msra.mxu0 0
        %1897 = vmatprep.mubr.bf16.mxu0 0
        %1898 = vmatmul.mubr.bf16.gmra.mrb[0].mxu0 %v1836
        %v1899 = vpop.f32.mrb[0].mxu0
        %v1900 = vadd.f32 0.0, %v1899
        %v1901 = vpop.f32.mrb[0].mxu0
        %v1902 = vpop.f32.mrb[0].mxu0
        %v1903 = vadd.f32 0.0, %v1902
        %v1904 = vpop.f32.mrb[0].mxu0
        %1905 = vmatprep.mubr.bf16.mxu0 0
        %1906 = vmatmul.mubr.bf16.gmra.mrb[0].mxu0 %v1839
        %v1907 = vpop.f32.mrb[0].mxu0
        %v1908 = vadd.f32 0.0, %v1907
        %v1909 = vpop.f32.mrb[0].mxu0
        %v1910 = vpop.f32.mrb[0].mxu0
        %v1911 = vadd.f32 0.0, %v1910
        %v1912 = vpop.f32.mrb[0].mxu0
        %1913 = vmatprep.mubr.bf16.mxu0 0
        %1914 = vmatmul.mubr.bf16.gmra.mrb[0].mxu0 %v1842
        %v1915 = vpop.f32.mrb[0].mxu0
        %v1916 = vadd.f32 0.0, %v1915
        %v1917 = vpop.f32.mrb[0].mxu0
        %v1918 = vpop.f32.mrb[0].mxu0
        %v1919 = vadd.f32 0.0, %v1918
        %v1920 = vpop.f32.mrb[0].mxu0
        %1921 = vmatprep.mubr.bf16.mxu0 0
        %1922 = vmatmul.mubr.bf16.gmra.mrb[0].mxu0 %v1845
        %v1923 = vpop.f32.mrb[0].mxu0
        %v1924 = vadd.f32 0.0, %v1923
        %v1925 = vpop.f32.mrb[0].mxu0
        %v1926 = vpop.f32.mrb[0].mxu0
        %v1927 = vadd.f32 0.0, %v1926
        %v1928 = vpop.f32.mrb[0].mxu0
        %1929 = vmatprep.mubr.bf16.mxu0 0
        %1930 = vmatmul.mubr.bf16.gmra.mrb[0].mxu0 %v1848
        %v1931 = vpop.f32.mrb[0].mxu0
        %v1932 = vadd.f32 0.0, %v1931
        %v1933 = vpop.f32.mrb[0].mxu0
        %v1934 = vpop.f32.mrb[0].mxu0
        %v1935 = vadd.f32 0.0, %v1934
        %v1936 = vpop.f32.mrb[0].mxu0
        %1937 = vmatprep.mubr.bf16.mxu0 0
        %1938 = vmatmul.mubr.bf16.gmra.mrb[0].mxu0 %v1851
        %v1939 = vpop.f32.mrb[0].mxu0
        %v1940 = vadd.f32 0.0, %v1939
        %v1941 = vpop.f32.mrb[0].mxu0
        %v1942 = vpop.f32.mrb[0].mxu0
        %v1943 = vadd.f32 0.0, %v1942
        %v1944 = vpop.f32.mrb[0].mxu0
        %1945 = vmatprep.mubr.bf16.mxu0 0
        %1946 = vmatmul.mubr.bf16.gmra.mrb[0].mxu0 %v1854
        %v1947 = vpop.f32.mrb[0].mxu0
        %v1948 = vadd.f32 0.0, %v1947
        %v1949 = vpop.f32.mrb[0].mxu0
        %v1950 = vpop.f32.mrb[0].mxu0
        %v1951 = vadd.f32 0.0, %v1950
        %v1952 = vpop.f32.mrb[0].mxu0
        %1953 = vmatprep.mubr.bf16.mxu0 0
        %1954 = vmatmul.mubr.bf16.gmra.mrb[0].mxu0 %v1857
        %v1955 = vpop.f32.mrb[0].mxu0
        %v1956 = vadd.f32 0.0, %v1955
        %v1957 = vpop.f32.mrb[0].mxu0
        %v1958 = vpop.f32.mrb[0].mxu0
        %v1959 = vadd.f32 0.0, %v1958
        %v1960 = vpop.f32.mrb[0].mxu0
        %1961 = vmatprep.mubr.bf16.mxu0 0
        %1962 = vmatmul.mubr.bf16.gmra.mrb[0].mxu0 %v1860
        %v1963 = vpop.f32.mrb[0].mxu0
        %v1964 = vadd.f32 0.0, %v1963
        %v1965 = vpop.f32.mrb[0].mxu0
        %v1966 = vpop.f32.mrb[0].mxu0
        %v1967 = vadd.f32 0.0, %v1966
        %v1968 = vpop.f32.mrb[0].mxu0
        %1969 = vdwg.mxu0
        %v1970 = vld [vmem:[#allocation2] sm:$0xff]
        %v1971 = vld [vmem:[#allocation2 + $0x8] sm:$0xff]
        %v1972 = vld [vmem:[#allocation2 + $0x10] sm:$0xff]
        %v1973 = vld [vmem:[#allocation2 + $0x18] sm:$0xff]
        %v1974 = vld [vmem:[#allocation2 + $0x20] sm:$0xff]
        %v1975 = vld [vmem:[#allocation2 + $0x28] sm:$0xff]
        %v1976 = vld [vmem:[#allocation2 + $0x30] sm:$0xff]
        %v1977 = vld [vmem:[#allocation2 + $0x38] sm:$0xff]
        %v1978 = vld [vmem:[#allocation2 + $0x40] sm:$0xff]
        %v1979 = vld [vmem:[#allocation2 + $0x48] sm:$0xff]
        %v1980 = vld [vmem:[#allocation2 + $0x50] sm:$0xff]
        %v1981 = vld [vmem:[#allocation2 + $0x58] sm:$0xff]
        %v1982 = vld [vmem:[#allocation2 + $0x60] sm:$0xff]
        %v1983 = vld [vmem:[#allocation2 + $0x68] sm:$0xff]
        %v1984 = vld [vmem:[#allocation2 + $0x70] sm:$0xff]
        %v1985 = vld [vmem:[#allocation2 + $0x78] sm:$0xff]
        %v1986 = vld [vmem:[#allocation2 + $0x80] sm:$0xff]
        %v1987 = vld [vmem:[#allocation2 + $0x88] sm:$0xff]
        %v1988 = vadd.f32 %v1970, %v1900
        %v1989 = vadd.f32 %v1971, %v1903
        %v1990 = vadd.f32 %v1972, %v1908
        %v1991 = vadd.f32 %v1973, %v1911
        %v1992 = vadd.f32 %v1974, %v1916
        %v1993 = vadd.f32 %v1975, %v1919
        %v1994 = vadd.f32 %v1976, %v1924
        %v1995 = vadd.f32 %v1977, %v1927
        %v1996 = vadd.f32 %v1978, %v1932
        %v1997 = vadd.f32 %v1979, %v1935
        %v1998 = vadd.f32 %v1980, %v1940
        %v1999 = vadd.f32 %v1981, %v1943
        %v2000 = vadd.f32 %v1982, %v1948
        %v2001 = vadd.f32 %v1983, %v1951
        %v2002 = vadd.f32 %v1984, %v1956
        %v2003 = vadd.f32 %v1985, %v1959
        %v2004 = vadd.f32 %v1986, %v1964
        %v2005 = vadd.f32 %v1987, %v1967
        %2006 = vst.msk [vmem:[#allocation2] sm:$0xff] %vm273, %v1988
        %2007 = vst.msk [vmem:[#allocation2 + $0x8] sm:$0xff] %vm273, %v1989
        %2008 = vst.msk [vmem:[#allocation2 + $0x10] sm:$0xff] %vm273, %v1990
        %2009 = vst.msk [vmem:[#allocation2 + $0x18] sm:$0xff] %vm273, %v1991
        %2010 = vst.msk [vmem:[#allocation2 + $0x20] sm:$0xff] %vm273, %v1992
        %2011 = vst.msk [vmem:[#allocation2 + $0x28] sm:$0xff] %vm273, %v1993
        %2012 = vst.msk [vmem:[#allocation2 + $0x30] sm:$0xff] %vm273, %v1994
        %2013 = vst.msk [vmem:[#allocation2 + $0x38] sm:$0xff] %vm273, %v1995
        %2014 = vst.msk [vmem:[#allocation2 + $0x40] sm:$0xff] %vm273, %v1996
        %2015 = vst.msk [vmem:[#allocation2 + $0x48] sm:$0xff] %vm273, %v1997
        %2016 = vst.msk [vmem:[#allocation2 + $0x50] sm:$0xff] %vm273, %v1998
        %2017 = vst.msk [vmem:[#allocation2 + $0x58] sm:$0xff] %vm273, %v1999
        %2018 = vst.msk [vmem:[#allocation2 + $0x60] sm:$0xff] %vm273, %v2000
        %2019 = vst.msk [vmem:[#allocation2 + $0x68] sm:$0xff] %vm273, %v2001
        %2020 = vst.msk [vmem:[#allocation2 + $0x70] sm:$0xff] %vm273, %v2002
        %2021 = vst.msk [vmem:[#allocation2 + $0x78] sm:$0xff] %vm273, %v2003
        %2022 = vst.msk [vmem:[#allocation2 + $0x80] sm:$0xff] %vm273, %v2004
        %2023 = vst.msk [vmem:[#allocation2 + $0x88] sm:$0xff] %vm273, %v2005
        %v2024 = vld [vmem:[%s205 + $0x8] sm:$0xe]
        %v2025 = vld [vmem:[%s205 + $0xc] sm:$0xf]
        %v2026 = vld [vmem:[%s205 + $0x10] sm:$0xf]
        %v2027 = vld [vmem:[%s205 + $0x14] sm:$0xf]
        %v2028 = vld [vmem:[%s205 + $0x18] sm:$0xf]
        %v2029 = vld [vmem:[%s205 + $0x1c] sm:$0xf]
        %v2030 = vld [vmem:[%s205 + $0x20] sm:$0xf]
        %v2031 = vld [vmem:[%s205 + $0x24] sm:$0xf]
        %v2032 = vld [vmem:[%s205 + $0x28] sm:$0xf]
        %v2033 = vld [vmem:[%s205 + $0x2c] sm:$0xf]
        %v2034 = vld [vmem:[%s205 + $0x30] sm:$0xf]
        %v2035 = vld [vmem:[%s205 + $0x34] sm:$0xf]
        %v2036 = vld [vmem:[%s205 + $0x38] sm:$0xf]
        %v2037 = vld [vmem:[%s205 + $0x3c] sm:$0xf]
        %v2038 = vld [vmem:[%s205 + $0x40] sm:$0xf]
        %v2039 = vld [vmem:[%s205 + $0x44] sm:$0xf]
        %v2040 = vld [vmem:[%s205 + $0x48] sm:$0xf]
        %v2041 = vld [vmem:[%s205 + $0x4c] sm:$0xf]
        %v2042 = vld [vmem:[%s205 + $0x50] sm:$0x3]
        %s2043 = scalar_lea.vmem %s1, 12
        %v2044 = vld [vmem:[%s2043] sm:$0x3]
        %v2064 = vunpack.c.l.b16 %v2024
        %v2065 = vunpack.c.l.b16 %v2025
        %v2066 = vunpack.c.l.b16 %v2026
        %v2067 = vunpack.c.l.b16 %v2027
        %v2068 = vunpack.c.l.b16 %v2028
        %v2069 = vunpack.c.l.b16 %v2029
        %v2070 = vunpack.c.l.b16 %v2030
        %v2071 = vunpack.c.l.b16 %v2031
        %v2072 = vunpack.c.l.b16 %v2032
        %v2073 = vunpack.c.l.b16 %v2033
        %v2074 = vunpack.c.l.b16 %v2034
        %v2075 = vunpack.c.l.b16 %v2035
        %v2076 = vunpack.c.l.b16 %v2036
        %v2077 = vunpack.c.l.b16 %v2037
        %v2078 = vunpack.c.l.b16 %v2038
        %v2079 = vunpack.c.l.b16 %v2039
        %v2080 = vunpack.c.l.b16 %v2040
        %v2081 = vunpack.c.l.b16 %v2041
        %v2082 = vunpack.c.l.b16 %v2042
        %v2083 = vpack.c.b16 %v2065, %v2064
        %v2084 = vpack.c.b16 %v2067, %v2066
        %v2085 = vpack.c.b16 %v2069, %v2068
        %v2086 = vpack.c.b16 %v2071, %v2070
        %v2087 = vpack.c.b16 %v2073, %v2072
        %v2088 = vpack.c.b16 %v2075, %v2074
        %v2089 = vpack.c.b16 %v2077, %v2076
        %v2090 = vpack.c.b16 %v2079, %v2078
        %v2091 = vpack.c.b16 %v2081, %v2080
        %v2092 = vpack.c.b16 %v2082, %v2082
        %v2094 = vshrl.u32 %v2083, 16
        %v2096 = vrot.slane %v2094, 1
        %v2097 = vshll.u32 %v2083, 16
        %v2099 = vrot.slane %v2097, 2
        %v2100 = vor.u32 %v2096, %v2099
        %v2102 = vshrl.u32 %v2084, 16
        %v2104 = vrot.slane %v2102, 1
        %v2105 = vshll.u32 %v2084, 16
        %v2107 = vrot.slane %v2105, 2
        %v2108 = vor.u32 %v2104, %v2107
        %v2109 = vsel %vm1110, %v2100, %v2108
        %v2111 = vshrl.u32 %v2085, 16
        %v2113 = vrot.slane %v2111, 1
        %v2114 = vshll.u32 %v2085, 16
        %v2116 = vrot.slane %v2114, 2
        %v2117 = vor.u32 %v2113, %v2116
        %v2118 = vsel %vm1110, %v2108, %v2117
        %v2120 = vshrl.u32 %v2086, 16
        %v2122 = vrot.slane %v2120, 1
        %v2123 = vshll.u32 %v2086, 16
        %v2125 = vrot.slane %v2123, 2
        %v2126 = vor.u32 %v2122, %v2125
        %v2127 = vsel %vm1110, %v2117, %v2126
        %v2129 = vshrl.u32 %v2087, 16
        %v2131 = vrot.slane %v2129, 1
        %v2132 = vshll.u32 %v2087, 16
        %v2134 = vrot.slane %v2132, 2
        %v2135 = vor.u32 %v2131, %v2134
        %v2136 = vsel %vm1110, %v2126, %v2135
        %v2138 = vshrl.u32 %v2088, 16
        %v2140 = vrot.slane %v2138, 1
        %v2141 = vshll.u32 %v2088, 16
        %v2143 = vrot.slane %v2141, 2
        %v2144 = vor.u32 %v2140, %v2143
        %v2145 = vsel %vm1110, %v2135, %v2144
        %v2147 = vshrl.u32 %v2089, 16
        %v2149 = vrot.slane %v2147, 1
        %v2150 = vshll.u32 %v2089, 16
        %v2152 = vrot.slane %v2150, 2
        %v2153 = vor.u32 %v2149, %v2152
        %v2154 = vsel %vm1110, %v2144, %v2153
        %v2156 = vshrl.u32 %v2090, 16
        %v2158 = vrot.slane %v2156, 1
        %v2159 = vshll.u32 %v2090, 16
        %v2161 = vrot.slane %v2159, 2
        %v2162 = vor.u32 %v2158, %v2161
        %v2163 = vsel %vm1110, %v2153, %v2162
        %v2165 = vshrl.u32 %v2091, 16
        %v2167 = vrot.slane %v2165, 1
        %v2168 = vshll.u32 %v2091, 16
        %v2170 = vrot.slane %v2168, 2
        %v2171 = vor.u32 %v2167, %v2170
        %v2172 = vsel %vm1110, %v2162, %v2171
        %v2174 = vshrl.u32 %v2092, 16
        %v2176 = vrot.slane %v2174, 1
        %v2177 = vshll.u32 %v2092, 16
        %v2179 = vrot.slane %v2177, 2
        %v2180 = vor.u32 %v2176, %v2179
        %v2181 = vsel %vm1110, %v2171, %v2180
        %v2183 = vsel %vm273, %v2109, 0
        %v2186 = vsel %vm273, %v2118, 0
        %v2189 = vsel %vm273, %v2127, 0
        %v2192 = vsel %vm273, %v2136, 0
        %v2195 = vsel %vm273, %v2145, 0
        %v2198 = vsel %vm273, %v2154, 0
        %v2201 = vsel %vm273, %v2163, 0
        %v2204 = vsel %vm273, %v2172, 0
        %v2207 = vsel %vm273, %v2181, 0
        %v2210 = vsel %vm301, %v2044, 0
        %2212 = vmatprep.subr.bf16.mxu0 0
        %2213 = vmatpush1.bf16.msra.mxu0 %v2210
        %2214 = vmatprep.subr.bf16.mxu0 0
        %2215 = vmatpush1.bf16.msra.mxu0 0
        %2216 = vmatprep.subr.bf16.mxu0 0
        %2217 = vmatpush1.bf16.msra.mxu0 0
        %2218 = vmatprep.subr.bf16.mxu0 0
        %2219 = vmatpush1.bf16.msra.mxu0 0
        %2220 = vmatprep.subr.bf16.mxu0 0
        %2221 = vmatpush1.bf16.msra.mxu0 0
        %2222 = vmatprep.subr.bf16.mxu0 0
        %2223 = vmatpush1.bf16.msra.mxu0 0
        %2224 = vmatprep.subr.bf16.mxu0 0
        %2225 = vmatpush1.bf16.msra.mxu0 0
        %2226 = vmatprep.subr.bf16.mxu0 0
        %2227 = vmatpush1.bf16.msra.mxu0 0
        %2228 = vmatprep.subr.bf16.mxu0 0
        %2229 = vmatpush1.bf16.msra.mxu0 0
        %2230 = vmatprep.subr.bf16.mxu0 0
        %2231 = vmatpush1.bf16.msra.mxu0 0
        %2232 = vmatprep.subr.bf16.mxu0 0
        %2233 = vmatpush1.bf16.msra.mxu0 0
        %2234 = vmatprep.subr.bf16.mxu0 0
        %2235 = vmatpush1.bf16.msra.mxu0 0
        %2236 = vmatprep.subr.bf16.mxu0 0
        %2237 = vmatpush1.bf16.msra.mxu0 0
        %2238 = vmatprep.subr.bf16.mxu0 0
        %2239 = vmatpush1.bf16.msra.mxu0 0
        %2240 = vmatprep.subr.bf16.mxu0 0
        %2241 = vmatpush1.bf16.msra.mxu0 0
        %2242 = vmatprep.subr.bf16.mxu0 0
        %2243 = vmatpush1.bf16.msra.mxu0 0
        %2244 = vmatprep.mubr.bf16.mxu0 0
        %2245 = vmatmul.mubr.bf16.gmra.mrb[0].mxu0 %v2183
        %v2246 = vpop.f32.mrb[0].mxu0
        %v2247 = vadd.f32 0.0, %v2246
        %v2248 = vpop.f32.mrb[0].mxu0
        %v2249 = vpop.f32.mrb[0].mxu0
        %v2250 = vadd.f32 0.0, %v2249
        %v2251 = vpop.f32.mrb[0].mxu0
        %2252 = vmatprep.mubr.bf16.mxu0 0
        %2253 = vmatmul.mubr.bf16.gmra.mrb[0].mxu0 %v2186
        %v2254 = vpop.f32.mrb[0].mxu0
        %v2255 = vadd.f32 0.0, %v2254
        %v2256 = vpop.f32.mrb[0].mxu0
        %v2257 = vpop.f32.mrb[0].mxu0
        %v2258 = vadd.f32 0.0, %v2257
        %v2259 = vpop.f32.mrb[0].mxu0
        %2260 = vmatprep.mubr.bf16.mxu0 0
        %2261 = vmatmul.mubr.bf16.gmra.mrb[0].mxu0 %v2189
        %v2262 = vpop.f32.mrb[0].mxu0
        %v2263 = vadd.f32 0.0, %v2262
        %v2264 = vpop.f32.mrb[0].mxu0
        %v2265 = vpop.f32.mrb[0].mxu0
        %v2266 = vadd.f32 0.0, %v2265
        %v2267 = vpop.f32.mrb[0].mxu0
        %2268 = vmatprep.mubr.bf16.mxu0 0
        %2269 = vmatmul.mubr.bf16.gmra.mrb[0].mxu0 %v2192
        %v2270 = vpop.f32.mrb[0].mxu0
        %v2271 = vadd.f32 0.0, %v2270
        %v2272 = vpop.f32.mrb[0].mxu0
        %v2273 = vpop.f32.mrb[0].mxu0
        %v2274 = vadd.f32 0.0, %v2273
        %v2275 = vpop.f32.mrb[0].mxu0
        %2276 = vmatprep.mubr.bf16.mxu0 0
        %2277 = vmatmul.mubr.bf16.gmra.mrb[0].mxu0 %v2195
        %v2278 = vpop.f32.mrb[0].mxu0
        %v2279 = vadd.f32 0.0, %v2278
        %v2280 = vpop.f32.mrb[0].mxu0
        %v2281 = vpop.f32.mrb[0].mxu0
        %v2282 = vadd.f32 0.0, %v2281
        %v2283 = vpop.f32.mrb[0].mxu0
        %2284 = vmatprep.mubr.bf16.mxu0 0
        %2285 = vmatmul.mubr.bf16.gmra.mrb[0].mxu0 %v2198
        %v2286 = vpop.f32.mrb[0].mxu0
        %v2287 = vadd.f32 0.0, %v2286
        %v2288 = vpop.f32.mrb[0].mxu0
        %v2289 = vpop.f32.mrb[0].mxu0
        %v2290 = vadd.f32 0.0, %v2289
        %v2291 = vpop.f32.mrb[0].mxu0
        %2292 = vmatprep.mubr.bf16.mxu0 0
        %2293 = vmatmul.mubr.bf16.gmra.mrb[0].mxu0 %v2201
        %v2294 = vpop.f32.mrb[0].mxu0
        %v2295 = vadd.f32 0.0, %v2294
        %v2296 = vpop.f32.mrb[0].mxu0
        %v2297 = vpop.f32.mrb[0].mxu0
        %v2298 = vadd.f32 0.0, %v2297
        %v2299 = vpop.f32.mrb[0].mxu0
        %2300 = vmatprep.mubr.bf16.mxu0 0
        %2301 = vmatmul.mubr.bf16.gmra.mrb[0].mxu0 %v2204
        %v2302 = vpop.f32.mrb[0].mxu0
        %v2303 = vadd.f32 0.0, %v2302
        %v2304 = vpop.f32.mrb[0].mxu0
        %v2305 = vpop.f32.mrb[0].mxu0
        %v2306 = vadd.f32 0.0, %v2305
        %v2307 = vpop.f32.mrb[0].mxu0
        %2308 = vmatprep.mubr.bf16.mxu0 0
        %2309 = vmatmul.mubr.bf16.gmra.mrb[0].mxu0 %v2207
        %v2310 = vpop.f32.mrb[0].mxu0
        %v2311 = vadd.f32 0.0, %v2310
        %v2312 = vpop.f32.mrb[0].mxu0
        %v2313 = vpop.f32.mrb[0].mxu0
        %v2314 = vadd.f32 0.0, %v2313
        %v2315 = vpop.f32.mrb[0].mxu0
        %2316 = vdwg.mxu0
        %v2317 = vld [vmem:[#allocation2] sm:$0xff]
        %v2318 = vld [vmem:[#allocation2 + $0x8] sm:$0xff]
        %v2319 = vld [vmem:[#allocation2 + $0x10] sm:$0xff]
        %v2320 = vld [vmem:[#allocation2 + $0x18] sm:$0xff]
        %v2321 = vld [vmem:[#allocation2 + $0x20] sm:$0xff]
        %v2322 = vld [vmem:[#allocation2 + $0x28] sm:$0xff]
        %v2323 = vld [vmem:[#allocation2 + $0x30] sm:$0xff]
        %v2324 = vld [vmem:[#allocation2 + $0x38] sm:$0xff]
        %v2325 = vld [vmem:[#allocation2 + $0x40] sm:$0xff]
        %v2326 = vld [vmem:[#allocation2 + $0x48] sm:$0xff]
        %v2327 = vld [vmem:[#allocation2 + $0x50] sm:$0xff]
        %v2328 = vld [vmem:[#allocation2 + $0x58] sm:$0xff]
        %v2329 = vld [vmem:[#allocation2 + $0x60] sm:$0xff]
        %v2330 = vld [vmem:[#allocation2 + $0x68] sm:$0xff]
        %v2331 = vld [vmem:[#allocation2 + $0x70] sm:$0xff]
        %v2332 = vld [vmem:[#allocation2 + $0x78] sm:$0xff]
        %v2333 = vld [vmem:[#allocation2 + $0x80] sm:$0xff]
        %v2334 = vld [vmem:[#allocation2 + $0x88] sm:$0xff]
        %v2335 = vadd.f32 %v2317, %v2247
        %v2336 = vadd.f32 %v2318, %v2250
        %v2337 = vadd.f32 %v2319, %v2255
        %v2338 = vadd.f32 %v2320, %v2258
        %v2339 = vadd.f32 %v2321, %v2263
        %v2340 = vadd.f32 %v2322, %v2266
        %v2341 = vadd.f32 %v2323, %v2271
        %v2342 = vadd.f32 %v2324, %v2274
        %v2343 = vadd.f32 %v2325, %v2279
        %v2344 = vadd.f32 %v2326, %v2282
        %v2345 = vadd.f32 %v2327, %v2287
        %v2346 = vadd.f32 %v2328, %v2290
        %v2347 = vadd.f32 %v2329, %v2295
        %v2348 = vadd.f32 %v2330, %v2298
        %v2349 = vadd.f32 %v2331, %v2303
        %v2350 = vadd.f32 %v2332, %v2306
        %v2351 = vadd.f32 %v2333, %v2311
        %v2352 = vadd.f32 %v2334, %v2314
        %2353 = vst.msk [vmem:[#allocation2] sm:$0xff] %vm273, %v2335
        %2354 = vst.msk [vmem:[#allocation2 + $0x8] sm:$0xff] %vm273, %v2336
        %2355 = vst.msk [vmem:[#allocation2 + $0x10] sm:$0xff] %vm273, %v2337
        %2356 = vst.msk [vmem:[#allocation2 + $0x18] sm:$0xff] %vm273, %v2338
        %2357 = vst.msk [vmem:[#allocation2 + $0x20] sm:$0xff] %vm273, %v2339
        %2358 = vst.msk [vmem:[#allocation2 + $0x28] sm:$0xff] %vm273, %v2340
        %2359 = vst.msk [vmem:[#allocation2 + $0x30] sm:$0xff] %vm273, %v2341
        %2360 = vst.msk [vmem:[#allocation2 + $0x38] sm:$0xff] %vm273, %v2342
        %2361 = vst.msk [vmem:[#allocation2 + $0x40] sm:$0xff] %vm273, %v2343
        %2362 = vst.msk [vmem:[#allocation2 + $0x48] sm:$0xff] %vm273, %v2344
        %2363 = vst.msk [vmem:[#allocation2 + $0x50] sm:$0xff] %vm273, %v2345
        %2364 = vst.msk [vmem:[#allocation2 + $0x58] sm:$0xff] %vm273, %v2346
        %2365 = vst.msk [vmem:[#allocation2 + $0x60] sm:$0xff] %vm273, %v2347
        %2366 = vst.msk [vmem:[#allocation2 + $0x68] sm:$0xff] %vm273, %v2348
        %2367 = vst.msk [vmem:[#allocation2 + $0x70] sm:$0xff] %vm273, %v2349
        %2368 = vst.msk [vmem:[#allocation2 + $0x78] sm:$0xff] %vm273, %v2350
        %2369 = vst.msk [vmem:[#allocation2 + $0x80] sm:$0xff] %vm273, %v2351
        %2370 = vst.msk [vmem:[#allocation2 + $0x88] sm:$0xff] %vm273, %v2352
        %v2371 = vld [vmem:[%s205 + $0x8] sm:$0xc]
        %v2372 = vld [vmem:[%s205 + $0xc] sm:$0xf]
        %v2373 = vld [vmem:[%s205 + $0x10] sm:$0xf]
        %v2374 = vld [vmem:[%s205 + $0x14] sm:$0xf]
        %v2375 = vld [vmem:[%s205 + $0x18] sm:$0xf]
        %v2376 = vld [vmem:[%s205 + $0x1c] sm:$0xf]
        %v2377 = vld [vmem:[%s205 + $0x20] sm:$0xf]
        %v2378 = vld [vmem:[%s205 + $0x24] sm:$0xf]
        %v2379 = vld [vmem:[%s205 + $0x28] sm:$0xf]
        %v2380 = vld [vmem:[%s205 + $0x2c] sm:$0xf]
        %v2381 = vld [vmem:[%s205 + $0x30] sm:$0xf]
        %v2382 = vld [vmem:[%s205 + $0x34] sm:$0xf]
        %v2383 = vld [vmem:[%s205 + $0x38] sm:$0xf]
        %v2384 = vld [vmem:[%s205 + $0x3c] sm:$0xf]
        %v2385 = vld [vmem:[%s205 + $0x40] sm:$0xf]
        %v2386 = vld [vmem:[%s205 + $0x44] sm:$0xf]
        %v2387 = vld [vmem:[%s205 + $0x48] sm:$0xf]
        %v2388 = vld [vmem:[%s205 + $0x4c] sm:$0xf]
        %v2389 = vld [vmem:[%s205 + $0x50] sm:$0x3]
        %s2390 = scalar_lea.vmem %s1, 14
        %v2391 = vld [vmem:[%s2390] sm:$0x3]
        %v2411 = vunpack.c.l.b16 %v2371
        %v2412 = vunpack.c.l.b16 %v2372
        %v2413 = vunpack.c.l.b16 %v2373
        %v2414 = vunpack.c.l.b16 %v2374
        %v2415 = vunpack.c.l.b16 %v2375
        %v2416 = vunpack.c.l.b16 %v2376
        %v2417 = vunpack.c.l.b16 %v2377
        %v2418 = vunpack.c.l.b16 %v2378
        %v2419 = vunpack.c.l.b16 %v2379
        %v2420 = vunpack.c.l.b16 %v2380
        %v2421 = vunpack.c.l.b16 %v2381
        %v2422 = vunpack.c.l.b16 %v2382
        %v2423 = vunpack.c.l.b16 %v2383
        %v2424 = vunpack.c.l.b16 %v2384
        %v2425 = vunpack.c.l.b16 %v2385
        %v2426 = vunpack.c.l.b16 %v2386
        %v2427 = vunpack.c.l.b16 %v2387
        %v2428 = vunpack.c.l.b16 %v2388
        %v2429 = vunpack.c.l.b16 %v2389
        %v2430 = vpack.c.b16 %v2412, %v2411
        %v2431 = vpack.c.b16 %v2414, %v2413
        %v2432 = vpack.c.b16 %v2416, %v2415
        %v2433 = vpack.c.b16 %v2418, %v2417
        %v2434 = vpack.c.b16 %v2420, %v2419
        %v2435 = vpack.c.b16 %v2422, %v2421
        %v2436 = vpack.c.b16 %v2424, %v2423
        %v2437 = vpack.c.b16 %v2426, %v2425
        %v2438 = vpack.c.b16 %v2428, %v2427
        %v2439 = vpack.c.b16 %v2429, %v2429
        %vm2440 = vcmask 1045504
        %v2441 = vrot.slane %v2430, 2
        %v2442 = vrot.slane %v2431, 2
        %v2443 = vsel %vm2440, %v2441, %v2442
        %v2444 = vrot.slane %v2432, 2
        %v2445 = vsel %vm2440, %v2442, %v2444
        %v2446 = vrot.slane %v2433, 2
        %v2447 = vsel %vm2440, %v2444, %v2446
        %v2448 = vrot.slane %v2434, 2
        %v2449 = vsel %vm2440, %v2446, %v2448
        %v2450 = vrot.slane %v2435, 2
        %v2451 = vsel %vm2440, %v2448, %v2450
        %v2452 = vrot.slane %v2436, 2
        %v2453 = vsel %vm2440, %v2450, %v2452
        %v2454 = vrot.slane %v2437, 2
        %v2455 = vsel %vm2440, %v2452, %v2454
        %v2456 = vrot.slane %v2438, 2
        %v2457 = vsel %vm2440, %v2454, %v2456
        %v2458 = vrot.slane %v2439, 2
        %v2459 = vsel %vm2440, %v2456, %v2458
        %v2461 = vsel %vm273, %v2443, 0
        %v2464 = vsel %vm273, %v2445, 0
        %v2467 = vsel %vm273, %v2447, 0
        %v2470 = vsel %vm273, %v2449, 0
        %v2473 = vsel %vm273, %v2451, 0
        %v2476 = vsel %vm273, %v2453, 0
        %v2479 = vsel %vm273, %v2455, 0
        %v2482 = vsel %vm273, %v2457, 0
        %v2485 = vsel %vm273, %v2459, 0
        %v2488 = vsel %vm301, %v2391, 0
        %2490 = vmatprep.subr.bf16.mxu0 0
        %2491 = vmatpush1.bf16.msra.mxu0 %v2488
        %2492 = vmatprep.subr.bf16.mxu0 0
        %2493 = vmatpush1.bf16.msra.mxu0 0
        %2494 = vmatprep.subr.bf16.mxu0 0
        %2495 = vmatpush1.bf16.msra.mxu0 0
        %2496 = vmatprep.subr.bf16.mxu0 0
        %2497 = vmatpush1.bf16.msra.mxu0 0
        %2498 = vmatprep.subr.bf16.mxu0 0
        %2499 = vmatpush1.bf16.msra.mxu0 0
        %2500 = vmatprep.subr.bf16.mxu0 0
        %2501 = vmatpush1.bf16.msra.mxu0 0
        %2502 = vmatprep.subr.bf16.mxu0 0
        %2503 = vmatpush1.bf16.msra.mxu0 0
        %2504 = vmatprep.subr.bf16.mxu0 0
        %2505 = vmatpush1.bf16.msra.mxu0 0
        %2506 = vmatprep.subr.bf16.mxu0 0
        %2507 = vmatpush1.bf16.msra.mxu0 0
        %2508 = vmatprep.subr.bf16.mxu0 0
        %2509 = vmatpush1.bf16.msra.mxu0 0
        %2510 = vmatprep.subr.bf16.mxu0 0
        %2511 = vmatpush1.bf16.msra.mxu0 0
        %2512 = vmatprep.subr.bf16.mxu0 0
        %2513 = vmatpush1.bf16.msra.mxu0 0
        %2514 = vmatprep.subr.bf16.mxu0 0
        %2515 = vmatpush1.bf16.msra.mxu0 0
        %2516 = vmatprep.subr.bf16.mxu0 0
        %2517 = vmatpush1.bf16.msra.mxu0 0
        %2518 = vmatprep.subr.bf16.mxu0 0
        %2519 = vmatpush1.bf16.msra.mxu0 0
        %2520 = vmatprep.subr.bf16.mxu0 0
        %2521 = vmatpush1.bf16.msra.mxu0 0
        %2522 = vmatprep.mubr.bf16.mxu0 0
        %2523 = vmatmul.mubr.bf16.gmra.mrb[0].mxu0 %v2461
        %v2524 = vpop.f32.mrb[0].mxu0
        %v2525 = vadd.f32 0.0, %v2524
        %v2526 = vpop.f32.mrb[0].mxu0
        %v2527 = vpop.f32.mrb[0].mxu0
        %v2528 = vadd.f32 0.0, %v2527
        %v2529 = vpop.f32.mrb[0].mxu0
        %2530 = vmatprep.mubr.bf16.mxu0 0
        %2531 = vmatmul.mubr.bf16.gmra.mrb[0].mxu0 %v2464
        %v2532 = vpop.f32.mrb[0].mxu0
        %v2533 = vadd.f32 0.0, %v2532
        %v2534 = vpop.f32.mrb[0].mxu0
        %v2535 = vpop.f32.mrb[0].mxu0
        %v2536 = vadd.f32 0.0, %v2535
        %v2537 = vpop.f32.mrb[0].mxu0
        %2538 = vmatprep.mubr.bf16.mxu0 0
        %2539 = vmatmul.mubr.bf16.gmra.mrb[0].mxu0 %v2467
        %v2540 = vpop.f32.mrb[0].mxu0
        %v2541 = vadd.f32 0.0, %v2540
        %v2542 = vpop.f32.mrb[0].mxu0
        %v2543 = vpop.f32.mrb[0].mxu0
        %v2544 = vadd.f32 0.0, %v2543
        %v2545 = vpop.f32.mrb[0].mxu0
        %2546 = vmatprep.mubr.bf16.mxu0 0
        %2547 = vmatmul.mubr.bf16.gmra.mrb[0].mxu0 %v2470
        %v2548 = vpop.f32.mrb[0].mxu0
        %v2549 = vadd.f32 0.0, %v2548
        %v2550 = vpop.f32.mrb[0].mxu0
        %v2551 = vpop.f32.mrb[0].mxu0
        %v2552 = vadd.f32 0.0, %v2551
        %v2553 = vpop.f32.mrb[0].mxu0
        %2554 = vmatprep.mubr.bf16.mxu0 0
        %2555 = vmatmul.mubr.bf16.gmra.mrb[0].mxu0 %v2473
        %v2556 = vpop.f32.mrb[0].mxu0
        %v2557 = vadd.f32 0.0, %v2556
        %v2558 = vpop.f32.mrb[0].mxu0
        %v2559 = vpop.f32.mrb[0].mxu0
        %v2560 = vadd.f32 0.0, %v2559
        %v2561 = vpop.f32.mrb[0].mxu0
        %2562 = vmatprep.mubr.bf16.mxu0 0
        %2563 = vmatmul.mubr.bf16.gmra.mrb[0].mxu0 %v2476
        %v2564 = vpop.f32.mrb[0].mxu0
        %v2565 = vadd.f32 0.0, %v2564
        %v2566 = vpop.f32.mrb[0].mxu0
        %v2567 = vpop.f32.mrb[0].mxu0
        %v2568 = vadd.f32 0.0, %v2567
        %v2569 = vpop.f32.mrb[0].mxu0
        %2570 = vmatprep.mubr.bf16.mxu0 0
        %2571 = vmatmul.mubr.bf16.gmra.mrb[0].mxu0 %v2479
        %v2572 = vpop.f32.mrb[0].mxu0
        %v2573 = vadd.f32 0.0, %v2572
        %v2574 = vpop.f32.mrb[0].mxu0
        %v2575 = vpop.f32.mrb[0].mxu0
        %v2576 = vadd.f32 0.0, %v2575
        %v2577 = vpop.f32.mrb[0].mxu0
        %2578 = vmatprep.mubr.bf16.mxu0 0
        %2579 = vmatmul.mubr.bf16.gmra.mrb[0].mxu0 %v2482
        %v2580 = vpop.f32.mrb[0].mxu0
        %v2581 = vadd.f32 0.0, %v2580
        %v2582 = vpop.f32.mrb[0].mxu0
        %v2583 = vpop.f32.mrb[0].mxu0
        %v2584 = vadd.f32 0.0, %v2583
        %v2585 = vpop.f32.mrb[0].mxu0
        %2586 = vmatprep.mubr.bf16.mxu0 0
        %2587 = vmatmul.mubr.bf16.gmra.mrb[0].mxu0 %v2485
        %v2588 = vpop.f32.mrb[0].mxu0
        %v2589 = vadd.f32 0.0, %v2588
        %v2590 = vpop.f32.mrb[0].mxu0
        %v2591 = vpop.f32.mrb[0].mxu0
        %v2592 = vadd.f32 0.0, %v2591
        %v2593 = vpop.f32.mrb[0].mxu0
        %2594 = vdwg.mxu0
        %v2595 = vld [vmem:[#allocation2] sm:$0xff]
        %v2596 = vld [vmem:[#allocation2 + $0x8] sm:$0xff]
        %v2597 = vld [vmem:[#allocation2 + $0x10] sm:$0xff]
        %v2598 = vld [vmem:[#allocation2 + $0x18] sm:$0xff]
        %v2599 = vld [vmem:[#allocation2 + $0x20] sm:$0xff]
        %v2600 = vld [vmem:[#allocation2 + $0x28] sm:$0xff]
        %v2601 = vld [vmem:[#allocation2 + $0x30] sm:$0xff]
        %v2602 = vld [vmem:[#allocation2 + $0x38] sm:$0xff]
        %v2603 = vld [vmem:[#allocation2 + $0x40] sm:$0xff]
        %v2604 = vld [vmem:[#allocation2 + $0x48] sm:$0xff]
        %v2605 = vld [vmem:[#allocation2 + $0x50] sm:$0xff]
        %v2606 = vld [vmem:[#allocation2 + $0x58] sm:$0xff]
        %v2607 = vld [vmem:[#allocation2 + $0x60] sm:$0xff]
        %v2608 = vld [vmem:[#allocation2 + $0x68] sm:$0xff]
        %v2609 = vld [vmem:[#allocation2 + $0x70] sm:$0xff]
        %v2610 = vld [vmem:[#allocation2 + $0x78] sm:$0xff]
        %v2611 = vld [vmem:[#allocation2 + $0x80] sm:$0xff]
        %v2612 = vld [vmem:[#allocation2 + $0x88] sm:$0xff]
        %v2613 = vadd.f32 %v2595, %v2525
        %v2614 = vadd.f32 %v2596, %v2528
        %v2615 = vadd.f32 %v2597, %v2533
        %v2616 = vadd.f32 %v2598, %v2536
        %v2617 = vadd.f32 %v2599, %v2541
        %v2618 = vadd.f32 %v2600, %v2544
        %v2619 = vadd.f32 %v2601, %v2549
        %v2620 = vadd.f32 %v2602, %v2552
        %v2621 = vadd.f32 %v2603, %v2557
        %v2622 = vadd.f32 %v2604, %v2560
        %v2623 = vadd.f32 %v2605, %v2565
        %v2624 = vadd.f32 %v2606, %v2568
        %v2625 = vadd.f32 %v2607, %v2573
        %v2626 = vadd.f32 %v2608, %v2576
        %v2627 = vadd.f32 %v2609, %v2581
        %v2628 = vadd.f32 %v2610, %v2584
        %v2629 = vadd.f32 %v2611, %v2589
        %v2630 = vadd.f32 %v2612, %v2592
        %2631 = vst.msk [vmem:[#allocation2] sm:$0xff] %vm273, %v2613
        %2632 = vst.msk [vmem:[#allocation2 + $0x8] sm:$0xff] %vm273, %v2614
        %2633 = vst.msk [vmem:[#allocation2 + $0x10] sm:$0xff] %vm273, %v2615
        %2634 = vst.msk [vmem:[#allocation2 + $0x18] sm:$0xff] %vm273, %v2616
        %2635 = vst.msk [vmem:[#allocation2 + $0x20] sm:$0xff] %vm273, %v2617
        %2636 = vst.msk [vmem:[#allocation2 + $0x28] sm:$0xff] %vm273, %v2618
        %2637 = vst.msk [vmem:[#allocation2 + $0x30] sm:$0xff] %vm273, %v2619
        %2638 = vst.msk [vmem:[#allocation2 + $0x38] sm:$0xff] %vm273, %v2620
        %2639 = vst.msk [vmem:[#allocation2 + $0x40] sm:$0xff] %vm273, %v2621
        %2640 = vst.msk [vmem:[#allocation2 + $0x48] sm:$0xff] %vm273, %v2622
        %2641 = vst.msk [vmem:[#allocation2 + $0x50] sm:$0xff] %vm273, %v2623
        %2642 = vst.msk [vmem:[#allocation2 + $0x58] sm:$0xff] %vm273, %v2624
        %2643 = vst.msk [vmem:[#allocation2 + $0x60] sm:$0xff] %vm273, %v2625
        %2644 = vst.msk [vmem:[#allocation2 + $0x68] sm:$0xff] %vm273, %v2626
        %2645 = vst.msk [vmem:[#allocation2 + $0x70] sm:$0xff] %vm273, %v2627
        %2646 = vst.msk [vmem:[#allocation2 + $0x78] sm:$0xff] %vm273, %v2628
        %2647 = vst.msk [vmem:[#allocation2 + $0x80] sm:$0xff] %vm273, %v2629
        %2648 = vst.msk [vmem:[#allocation2 + $0x88] sm:$0xff] %vm273, %v2630
        %v2649 = vld [vmem:[#allocation2] sm:$0xff]
        %v2650 = vld [vmem:[#allocation2 + $0x8] sm:$0xff]
        %v2651 = vld [vmem:[#allocation2 + $0x10] sm:$0xff]
        %v2652 = vld [vmem:[#allocation2 + $0x18] sm:$0xff]
        %v2653 = vld [vmem:[#allocation2 + $0x20] sm:$0xff]
        %v2654 = vld [vmem:[#allocation2 + $0x28] sm:$0xff]
        %v2655 = vld [vmem:[#allocation2 + $0x30] sm:$0xff]
        %v2656 = vld [vmem:[#allocation2 + $0x38] sm:$0xff]
        %v2657 = vld [vmem:[#allocation2 + $0x40] sm:$0xff]
        %v2658 = vld [vmem:[#allocation2 + $0x48] sm:$0xff]
        %v2659 = vld [vmem:[#allocation2 + $0x50] sm:$0xff]
        %v2660 = vld [vmem:[#allocation2 + $0x58] sm:$0xff]
        %v2661 = vld [vmem:[#allocation2 + $0x60] sm:$0xff]
        %v2662 = vld [vmem:[#allocation2 + $0x68] sm:$0xff]
        %v2663 = vld [vmem:[#allocation2 + $0x70] sm:$0xff]
        %v2664 = vld [vmem:[#allocation2 + $0x78] sm:$0xff]
        %v2665 = vld [vmem:[#allocation2 + $0x80] sm:$0xff]
        %v2666 = vld [vmem:[#allocation2 + $0x88] sm:$0xff]
        %v2667 = vadd.f32 %v2649, %v1411
        %v2668 = vadd.f32 %v2650, %v1411
        %v2669 = vadd.f32 %v2651, %v1411
        %v2670 = vadd.f32 %v2652, %v1411
        %v2671 = vadd.f32 %v2653, %v1411
        %v2672 = vadd.f32 %v2654, %v1411
        %v2673 = vadd.f32 %v2655, %v1411
        %v2674 = vadd.f32 %v2656, %v1411
        %v2675 = vadd.f32 %v2657, %v1411
        %v2676 = vadd.f32 %v2658, %v1411
        %v2677 = vadd.f32 %v2659, %v1411
        %v2678 = vadd.f32 %v2660, %v1411
        %v2679 = vadd.f32 %v2661, %v1411
        %v2680 = vadd.f32 %v2662, %v1411
        %v2681 = vadd.f32 %v2663, %v1411
        %v2682 = vadd.f32 %v2664, %v1411
        %v2683 = vadd.f32 %v2665, %v1411
        %v2684 = vadd.f32 %v2666, %v1411
        %s2685 = scalar_lea.vmem %s196, 144 [#allocation5]
        %2686 = vst.msk [vmem:[%s2685] sm:$0xff] %vm273, %v2667
        %2687 = vst.msk [vmem:[%s2685 + $0x8] sm:$0xff] %vm273, %v2668
        %2688 = vst.msk [vmem:[%s2685 + $0x10] sm:$0xff] %vm273, %v2669
        %2689 = vst.msk [vmem:[%s2685 + $0x18] sm:$0xff] %vm273, %v2670
        %2690 = vst.msk [vmem:[%s2685 + $0x20] sm:$0xff] %vm273, %v2671
        %2691 = vst.msk [vmem:[%s2685 + $0x28] sm:$0xff] %vm273, %v2672
        %2692 = vst.msk [vmem:[%s2685 + $0x30] sm:$0xff] %vm273, %v2673
        %2693 = vst.msk [vmem:[%s2685 + $0x38] sm:$0xff] %vm273, %v2674
        %2694 = vst.msk [vmem:[%s2685 + $0x40] sm:$0xff] %vm273, %v2675
        %2695 = vst.msk [vmem:[%s2685 + $0x48] sm:$0xff] %vm273, %v2676
        %2696 = vst.msk [vmem:[%s2685 + $0x50] sm:$0xff] %vm273, %v2677
        %2697 = vst.msk [vmem:[%s2685 + $0x58] sm:$0xff] %vm273, %v2678
        %2698 = vst.msk [vmem:[%s2685 + $0x60] sm:$0xff] %vm273, %v2679
        %2699 = vst.msk [vmem:[%s2685 + $0x68] sm:$0xff] %vm273, %v2680
        %2700 = vst.msk [vmem:[%s2685 + $0x70] sm:$0xff] %vm273, %v2681
        %2701 = vst.msk [vmem:[%s2685 + $0x78] sm:$0xff] %vm273, %v2682
        %2702 = vst.msk [vmem:[%s2685 + $0x80] sm:$0xff] %vm273, %v2683
        %2703 = vst.msk [vmem:[%s2685 + $0x88] sm:$0xff] %vm273, %v2684
        %v2704 = vld [vmem:[%s205 + $0x8] sm:$0xe]
        %v2705 = vld [vmem:[%s205 + $0xc] sm:$0xf]
        %v2706 = vld [vmem:[%s205 + $0x10] sm:$0xf]
        %v2707 = vld [vmem:[%s205 + $0x14] sm:$0xf]
        %v2708 = vld [vmem:[%s205 + $0x18] sm:$0xf]
        %v2709 = vld [vmem:[%s205 + $0x1c] sm:$0xf]
        %v2710 = vld [vmem:[%s205 + $0x20] sm:$0xf]
        %v2711 = vld [vmem:[%s205 + $0x24] sm:$0xf]
        %v2712 = vld [vmem:[%s205 + $0x28] sm:$0xf]
        %v2713 = vld [vmem:[%s205 + $0x2c] sm:$0xf]
        %v2714 = vld [vmem:[%s205 + $0x30] sm:$0xf]
        %v2715 = vld [vmem:[%s205 + $0x34] sm:$0xf]
        %v2716 = vld [vmem:[%s205 + $0x38] sm:$0xf]
        %v2717 = vld [vmem:[%s205 + $0x3c] sm:$0xf]
        %v2718 = vld [vmem:[%s205 + $0x40] sm:$0xf]
        %v2719 = vld [vmem:[%s205 + $0x44] sm:$0xf]
        %v2720 = vld [vmem:[%s205 + $0x48] sm:$0xf]
        %v2721 = vld [vmem:[%s205 + $0x4c] sm:$0xf]
        %v2722 = vld [vmem:[%s205 + $0x50] sm:$0x1]
        %s2723 = scalar_lea.vmem %s1, 16
        %v2724 = vld [vmem:[%s2723] sm:$0x3]
        %v2744 = vunpack.c.l.b16 %v2704
        %v2745 = vunpack.c.l.b16 %v2705
        %v2746 = vunpack.c.l.b16 %v2706
        %v2747 = vunpack.c.l.b16 %v2707
        %v2748 = vunpack.c.l.b16 %v2708
        %v2749 = vunpack.c.l.b16 %v2709
        %v2750 = vunpack.c.l.b16 %v2710
        %v2751 = vunpack.c.l.b16 %v2711
        %v2752 = vunpack.c.l.b16 %v2712
        %v2753 = vunpack.c.l.b16 %v2713
        %v2754 = vunpack.c.l.b16 %v2714
        %v2755 = vunpack.c.l.b16 %v2715
        %v2756 = vunpack.c.l.b16 %v2716
        %v2757 = vunpack.c.l.b16 %v2717
        %v2758 = vunpack.c.l.b16 %v2718
        %v2759 = vunpack.c.l.b16 %v2719
        %v2760 = vunpack.c.l.b16 %v2720
        %v2761 = vunpack.c.l.b16 %v2721
        %v2762 = vunpack.c.l.b16 %v2722
        %v2763 = vpack.c.b16 %v2745, %v2744
        %v2764 = vpack.c.b16 %v2747, %v2746
        %v2765 = vpack.c.b16 %v2749, %v2748
        %v2766 = vpack.c.b16 %v2751, %v2750
        %v2767 = vpack.c.b16 %v2753, %v2752
        %v2768 = vpack.c.b16 %v2755, %v2754
        %v2769 = vpack.c.b16 %v2757, %v2756
        %v2770 = vpack.c.b16 %v2759, %v2758
        %v2771 = vpack.c.b16 %v2761, %v2760
        %v2772 = vpack.c.b16 %v2762, %v2762
        %v2773 = vrot.slane %v2763, 1
        %v2774 = vrot.slane %v2764, 1
        %v2775 = vsel %vm832, %v2773, %v2774
        %v2776 = vrot.slane %v2765, 1
        %v2777 = vsel %vm832, %v2774, %v2776
        %v2778 = vrot.slane %v2766, 1
        %v2779 = vsel %vm832, %v2776, %v2778
        %v2780 = vrot.slane %v2767, 1
        %v2781 = vsel %vm832, %v2778, %v2780
        %v2782 = vrot.slane %v2768, 1
        %v2783 = vsel %vm832, %v2780, %v2782
        %v2784 = vrot.slane %v2769, 1
        %v2785 = vsel %vm832, %v2782, %v2784
        %v2786 = vrot.slane %v2770, 1
        %v2787 = vsel %vm832, %v2784, %v2786
        %v2788 = vrot.slane %v2771, 1
        %v2789 = vsel %vm832, %v2786, %v2788
        %v2790 = vrot.slane %v2772, 1
        %v2791 = vsel %vm832, %v2788, %v2790
        %v2793 = vsel %vm273, %v2775, 0
        %v2796 = vsel %vm273, %v2777, 0
        %v2799 = vsel %vm273, %v2779, 0
        %v2802 = vsel %vm273, %v2781, 0
        %v2805 = vsel %vm273, %v2783, 0
        %v2808 = vsel %vm273, %v2785, 0
        %v2811 = vsel %vm273, %v2787, 0
        %v2814 = vsel %vm273, %v2789, 0
        %v2817 = vsel %vm273, %v2791, 0
        %v2820 = vsel %vm301, %v2724, 0
        %2822 = vmatprep.subr.bf16.mxu0 0
        %2823 = vmatpush1.bf16.msra.mxu0 %v2820
        %2824 = vmatprep.subr.bf16.mxu0 0
        %2825 = vmatpush1.bf16.msra.mxu0 0
        %2826 = vmatprep.subr.bf16.mxu0 0
        %2827 = vmatpush1.bf16.msra.mxu0 0
        %2828 = vmatprep.subr.bf16.mxu0 0
        %2829 = vmatpush1.bf16.msra.mxu0 0
        %2830 = vmatprep.subr.bf16.mxu0 0
        %2831 = vmatpush1.bf16.msra.mxu0 0
        %2832 = vmatprep.subr.bf16.mxu0 0
        %2833 = vmatpush1.bf16.msra.mxu0 0
        %2834 = vmatprep.subr.bf16.mxu0 0
        %2835 = vmatpush1.bf16.msra.mxu0 0
        %2836 = vmatprep.subr.bf16.mxu0 0
        %2837 = vmatpush1.bf16.msra.mxu0 0
        %2838 = vmatprep.subr.bf16.mxu0 0
        %2839 = vmatpush1.bf16.msra.mxu0 0
        %2840 = vmatprep.subr.bf16.mxu0 0
        %2841 = vmatpush1.bf16.msra.mxu0 0
        %2842 = vmatprep.subr.bf16.mxu0 0
        %2843 = vmatpush1.bf16.msra.mxu0 0
        %2844 = vmatprep.subr.bf16.mxu0 0
        %2845 = vmatpush1.bf16.msra.mxu0 0
        %2846 = vmatprep.subr.bf16.mxu0 0
        %2847 = vmatpush1.bf16.msra.mxu0 0
        %2848 = vmatprep.subr.bf16.mxu0 0
        %2849 = vmatpush1.bf16.msra.mxu0 0
        %2850 = vmatprep.subr.bf16.mxu0 0
        %2851 = vmatpush1.bf16.msra.mxu0 0
        %2852 = vmatprep.subr.bf16.mxu0 0
        %2853 = vmatpush1.bf16.msra.mxu0 0
        %2854 = vmatprep.mubr.bf16.mxu0 0
        %2855 = vmatmul.mubr.bf16.gmra.mrb[0].mxu0 %v2793
        %v2856 = vpop.f32.mrb[0].mxu0
        %v2857 = vadd.f32 0.0, %v2856
        %v2858 = vpop.f32.mrb[0].mxu0
        %v2859 = vpop.f32.mrb[0].mxu0
        %v2860 = vadd.f32 0.0, %v2859
        %v2861 = vpop.f32.mrb[0].mxu0
        %2862 = vmatprep.mubr.bf16.mxu0 0
        %2863 = vmatmul.mubr.bf16.gmra.mrb[0].mxu0 %v2796
        %v2864 = vpop.f32.mrb[0].mxu0
        %v2865 = vadd.f32 0.0, %v2864
        %v2866 = vpop.f32.mrb[0].mxu0
        %v2867 = vpop.f32.mrb[0].mxu0
        %v2868 = vadd.f32 0.0, %v2867
        %v2869 = vpop.f32.mrb[0].mxu0
        %2870 = vmatprep.mubr.bf16.mxu0 0
        %2871 = vmatmul.mubr.bf16.gmra.mrb[0].mxu0 %v2799
        %v2872 = vpop.f32.mrb[0].mxu0
        %v2873 = vadd.f32 0.0, %v2872
        %v2874 = vpop.f32.mrb[0].mxu0
        %v2875 = vpop.f32.mrb[0].mxu0
        %v2876 = vadd.f32 0.0, %v2875
        %v2877 = vpop.f32.mrb[0].mxu0
        %2878 = vmatprep.mubr.bf16.mxu0 0
        %2879 = vmatmul.mubr.bf16.gmra.mrb[0].mxu0 %v2802
        %v2880 = vpop.f32.mrb[0].mxu0
        %v2881 = vadd.f32 0.0, %v2880
        %v2882 = vpop.f32.mrb[0].mxu0
        %v2883 = vpop.f32.mrb[0].mxu0
        %v2884 = vadd.f32 0.0, %v2883
        %v2885 = vpop.f32.mrb[0].mxu0
        %2886 = vmatprep.mubr.bf16.mxu0 0
        %2887 = vmatmul.mubr.bf16.gmra.mrb[0].mxu0 %v2805
        %v2888 = vpop.f32.mrb[0].mxu0
        %v2889 = vadd.f32 0.0, %v2888
        %v2890 = vpop.f32.mrb[0].mxu0
        %v2891 = vpop.f32.mrb[0].mxu0
        %v2892 = vadd.f32 0.0, %v2891
        %v2893 = vpop.f32.mrb[0].mxu0
        %2894 = vmatprep.mubr.bf16.mxu0 0
        %2895 = vmatmul.mubr.bf16.gmra.mrb[0].mxu0 %v2808
        %v2896 = vpop.f32.mrb[0].mxu0
        %v2897 = vadd.f32 0.0, %v2896
        %v2898 = vpop.f32.mrb[0].mxu0
        %v2899 = vpop.f32.mrb[0].mxu0
        %v2900 = vadd.f32 0.0, %v2899
        %v2901 = vpop.f32.mrb[0].mxu0
        %2902 = vmatprep.mubr.bf16.mxu0 0
        %2903 = vmatmul.mubr.bf16.gmra.mrb[0].mxu0 %v2811
        %v2904 = vpop.f32.mrb[0].mxu0
        %v2905 = vadd.f32 0.0, %v2904
        %v2906 = vpop.f32.mrb[0].mxu0
        %v2907 = vpop.f32.mrb[0].mxu0
        %v2908 = vadd.f32 0.0, %v2907
        %v2909 = vpop.f32.mrb[0].mxu0
        %2910 = vmatprep.mubr.bf16.mxu0 0
        %2911 = vmatmul.mubr.bf16.gmra.mrb[0].mxu0 %v2814
        %v2912 = vpop.f32.mrb[0].mxu0
        %v2913 = vadd.f32 0.0, %v2912
        %v2914 = vpop.f32.mrb[0].mxu0
        %v2915 = vpop.f32.mrb[0].mxu0
        %v2916 = vadd.f32 0.0, %v2915
        %v2917 = vpop.f32.mrb[0].mxu0
        %2918 = vmatprep.mubr.bf16.mxu0 0
        %2919 = vmatmul.mubr.bf16.gmra.mrb[0].mxu0 %v2817
        %v2920 = vpop.f32.mrb[0].mxu0
        %v2921 = vadd.f32 0.0, %v2920
        %v2922 = vpop.f32.mrb[0].mxu0
        %v2923 = vpop.f32.mrb[0].mxu0
        %v2924 = vadd.f32 0.0, %v2923
        %v2925 = vpop.f32.mrb[0].mxu0
        %2926 = vdwg.mxu0
        %2927 = vst.msk [vmem:[#allocation2] sm:$0xff] %vm273, %v2857
        %2928 = vst.msk [vmem:[#allocation2 + $0x8] sm:$0xff] %vm273, %v2860
        %2929 = vst.msk [vmem:[#allocation2 + $0x10] sm:$0xff] %vm273, %v2865
        %2930 = vst.msk [vmem:[#allocation2 + $0x18] sm:$0xff] %vm273, %v2868
        %2931 = vst.msk [vmem:[#allocation2 + $0x20] sm:$0xff] %vm273, %v2873
        %2932 = vst.msk [vmem:[#allocation2 + $0x28] sm:$0xff] %vm273, %v2876
        %2933 = vst.msk [vmem:[#allocation2 + $0x30] sm:$0xff] %vm273, %v2881
        %2934 = vst.msk [vmem:[#allocation2 + $0x38] sm:$0xff] %vm273, %v2884
        %2935 = vst.msk [vmem:[#allocation2 + $0x40] sm:$0xff] %vm273, %v2889
        %2936 = vst.msk [vmem:[#allocation2 + $0x48] sm:$0xff] %vm273, %v2892
        %2937 = vst.msk [vmem:[#allocation2 + $0x50] sm:$0xff] %vm273, %v2897
        %2938 = vst.msk [vmem:[#allocation2 + $0x58] sm:$0xff] %vm273, %v2900
        %2939 = vst.msk [vmem:[#allocation2 + $0x60] sm:$0xff] %vm273, %v2905
        %2940 = vst.msk [vmem:[#allocation2 + $0x68] sm:$0xff] %vm273, %v2908
        %2941 = vst.msk [vmem:[#allocation2 + $0x70] sm:$0xff] %vm273, %v2913
        %2942 = vst.msk [vmem:[#allocation2 + $0x78] sm:$0xff] %vm273, %v2916
        %2943 = vst.msk [vmem:[#allocation2 + $0x80] sm:$0xff] %vm273, %v2921
        %2944 = vst.msk [vmem:[#allocation2 + $0x88] sm:$0xff] %vm273, %v2924
        %v2945 = vld [vmem:[%s205 + $0x8] sm:$0xe]
        %v2946 = vld [vmem:[%s205 + $0xc] sm:$0xf]
        %v2947 = vld [vmem:[%s205 + $0x10] sm:$0xf]
        %v2948 = vld [vmem:[%s205 + $0x14] sm:$0xf]
        %v2949 = vld [vmem:[%s205 + $0x18] sm:$0xf]
        %v2950 = vld [vmem:[%s205 + $0x1c] sm:$0xf]
        %v2951 = vld [vmem:[%s205 + $0x20] sm:$0xf]
        %v2952 = vld [vmem:[%s205 + $0x24] sm:$0xf]
        %v2953 = vld [vmem:[%s205 + $0x28] sm:$0xf]
        %v2954 = vld [vmem:[%s205 + $0x2c] sm:$0xf]
        %v2955 = vld [vmem:[%s205 + $0x30] sm:$0xf]
        %v2956 = vld [vmem:[%s205 + $0x34] sm:$0xf]
        %v2957 = vld [vmem:[%s205 + $0x38] sm:$0xf]
        %v2958 = vld [vmem:[%s205 + $0x3c] sm:$0xf]
        %v2959 = vld [vmem:[%s205 + $0x40] sm:$0xf]
        %v2960 = vld [vmem:[%s205 + $0x44] sm:$0xf]
        %v2961 = vld [vmem:[%s205 + $0x48] sm:$0xf]
        %v2962 = vld [vmem:[%s205 + $0x4c] sm:$0xf]
        %v2963 = vld [vmem:[%s205 + $0x50] sm:$0x3]
        %s2964 = scalar_lea.vmem %s1, 18
        %v2965 = vld [vmem:[%s2964] sm:$0x3]
        %v2985 = vunpack.c.l.b16 %v2945
        %v2986 = vunpack.c.l.b16 %v2946
        %v2987 = vunpack.c.l.b16 %v2947
        %v2988 = vunpack.c.l.b16 %v2948
        %v2989 = vunpack.c.l.b16 %v2949
        %v2990 = vunpack.c.l.b16 %v2950
        %v2991 = vunpack.c.l.b16 %v2951
        %v2992 = vunpack.c.l.b16 %v2952
        %v2993 = vunpack.c.l.b16 %v2953
        %v2994 = vunpack.c.l.b16 %v2954
        %v2995 = vunpack.c.l.b16 %v2955
        %v2996 = vunpack.c.l.b16 %v2956
        %v2997 = vunpack.c.l.b16 %v2957
        %v2998 = vunpack.c.l.b16 %v2958
        %v2999 = vunpack.c.l.b16 %v2959
        %v3000 = vunpack.c.l.b16 %v2960
        %v3001 = vunpack.c.l.b16 %v2961
        %v3002 = vunpack.c.l.b16 %v2962
        %v3003 = vunpack.c.l.b16 %v2963
        %v3004 = vpack.c.b16 %v2986, %v2985
        %v3005 = vpack.c.b16 %v2988, %v2987
        %v3006 = vpack.c.b16 %v2990, %v2989
        %v3007 = vpack.c.b16 %v2992, %v2991
        %v3008 = vpack.c.b16 %v2994, %v2993
        %v3009 = vpack.c.b16 %v2996, %v2995
        %v3010 = vpack.c.b16 %v2998, %v2997
        %v3011 = vpack.c.b16 %v3000, %v2999
        %v3012 = vpack.c.b16 %v3002, %v3001
        %v3013 = vpack.c.b16 %v3003, %v3003
        %v3015 = vshrl.u32 %v3004, 16
        %v3017 = vrot.slane %v3015, 1
        %v3018 = vshll.u32 %v3004, 16
        %v3020 = vrot.slane %v3018, 2
        %v3021 = vor.u32 %v3017, %v3020
        %v3023 = vshrl.u32 %v3005, 16
        %v3025 = vrot.slane %v3023, 1
        %v3026 = vshll.u32 %v3005, 16
        %v3028 = vrot.slane %v3026, 2
        %v3029 = vor.u32 %v3025, %v3028
        %v3030 = vsel %vm1110, %v3021, %v3029
        %v3032 = vshrl.u32 %v3006, 16
        %v3034 = vrot.slane %v3032, 1
        %v3035 = vshll.u32 %v3006, 16
        %v3037 = vrot.slane %v3035, 2
        %v3038 = vor.u32 %v3034, %v3037
        %v3039 = vsel %vm1110, %v3029, %v3038
        %v3041 = vshrl.u32 %v3007, 16
        %v3043 = vrot.slane %v3041, 1
        %v3044 = vshll.u32 %v3007, 16
        %v3046 = vrot.slane %v3044, 2
        %v3047 = vor.u32 %v3043, %v3046
        %v3048 = vsel %vm1110, %v3038, %v3047
        %v3050 = vshrl.u32 %v3008, 16
        %v3052 = vrot.slane %v3050, 1
        %v3053 = vshll.u32 %v3008, 16
        %v3055 = vrot.slane %v3053, 2
        %v3056 = vor.u32 %v3052, %v3055
        %v3057 = vsel %vm1110, %v3047, %v3056
        %v3059 = vshrl.u32 %v3009, 16
        %v3061 = vrot.slane %v3059, 1
        %v3062 = vshll.u32 %v3009, 16
        %v3064 = vrot.slane %v3062, 2
        %v3065 = vor.u32 %v3061, %v3064
        %v3066 = vsel %vm1110, %v3056, %v3065
        %v3068 = vshrl.u32 %v3010, 16
        %v3070 = vrot.slane %v3068, 1
        %v3071 = vshll.u32 %v3010, 16
        %v3073 = vrot.slane %v3071, 2
        %v3074 = vor.u32 %v3070, %v3073
        %v3075 = vsel %vm1110, %v3065, %v3074
        %v3077 = vshrl.u32 %v3011, 16
        %v3079 = vrot.slane %v3077, 1
        %v3080 = vshll.u32 %v3011, 16
        %v3082 = vrot.slane %v3080, 2
        %v3083 = vor.u32 %v3079, %v3082
        %v3084 = vsel %vm1110, %v3074, %v3083
        %v3086 = vshrl.u32 %v3012, 16
        %v3088 = vrot.slane %v3086, 1
        %v3089 = vshll.u32 %v3012, 16
        %v3091 = vrot.slane %v3089, 2
        %v3092 = vor.u32 %v3088, %v3091
        %v3093 = vsel %vm1110, %v3083, %v3092
        %v3095 = vshrl.u32 %v3013, 16
        %v3097 = vrot.slane %v3095, 1
        %v3098 = vshll.u32 %v3013, 16
        %v3100 = vrot.slane %v3098, 2
        %v3101 = vor.u32 %v3097, %v3100
        %v3102 = vsel %vm1110, %v3092, %v3101
        %v3104 = vsel %vm273, %v3030, 0
        %v3107 = vsel %vm273, %v3039, 0
        %v3110 = vsel %vm273, %v3048, 0
        %v3113 = vsel %vm273, %v3057, 0
        %v3116 = vsel %vm273, %v3066, 0
        %v3119 = vsel %vm273, %v3075, 0
        %v3122 = vsel %vm273, %v3084, 0
        %v3125 = vsel %vm273, %v3093, 0
        %v3128 = vsel %vm273, %v3102, 0
        %v3131 = vsel %vm301, %v2965, 0
        %3133 = vmatprep.subr.bf16.mxu0 0
        %3134 = vmatpush1.bf16.msra.mxu0 %v3131
        %3135 = vmatprep.subr.bf16.mxu0 0
        %3136 = vmatpush1.bf16.msra.mxu0 0
        %3137 = vmatprep.subr.bf16.mxu0 0
        %3138 = vmatpush1.bf16.msra.mxu0 0
        %3139 = vmatprep.subr.bf16.mxu0 0
        %3140 = vmatpush1.bf16.msra.mxu0 0
        %3141 = vmatprep.subr.bf16.mxu0 0
        %3142 = vmatpush1.bf16.msra.mxu0 0
        %3143 = vmatprep.subr.bf16.mxu0 0
        %3144 = vmatpush1.bf16.msra.mxu0 0
        %3145 = vmatprep.subr.bf16.mxu0 0
        %3146 = vmatpush1.bf16.msra.mxu0 0
        %3147 = vmatprep.subr.bf16.mxu0 0
        %3148 = vmatpush1.bf16.msra.mxu0 0
        %3149 = vmatprep.subr.bf16.mxu0 0
        %3150 = vmatpush1.bf16.msra.mxu0 0
        %3151 = vmatprep.subr.bf16.mxu0 0
        %3152 = vmatpush1.bf16.msra.mxu0 0
        %3153 = vmatprep.subr.bf16.mxu0 0
        %3154 = vmatpush1.bf16.msra.mxu0 0
        %3155 = vmatprep.subr.bf16.mxu0 0
        %3156 = vmatpush1.bf16.msra.mxu0 0
        %3157 = vmatprep.subr.bf16.mxu0 0
        %3158 = vmatpush1.bf16.msra.mxu0 0
        %3159 = vmatprep.subr.bf16.mxu0 0
        %3160 = vmatpush1.bf16.msra.mxu0 0
        %3161 = vmatprep.subr.bf16.mxu0 0
        %3162 = vmatpush1.bf16.msra.mxu0 0
        %3163 = vmatprep.subr.bf16.mxu0 0
        %3164 = vmatpush1.bf16.msra.mxu0 0
        %3165 = vmatprep.mubr.bf16.mxu0 0
        %3166 = vmatmul.mubr.bf16.gmra.mrb[0].mxu0 %v3104
        %v3167 = vpop.f32.mrb[0].mxu0
        %v3168 = vadd.f32 0.0, %v3167
        %v3169 = vpop.f32.mrb[0].mxu0
        %v3170 = vpop.f32.mrb[0].mxu0
        %v3171 = vadd.f32 0.0, %v3170
        %v3172 = vpop.f32.mrb[0].mxu0
        %3173 = vmatprep.mubr.bf16.mxu0 0
        %3174 = vmatmul.mubr.bf16.gmra.mrb[0].mxu0 %v3107
        %v3175 = vpop.f32.mrb[0].mxu0
        %v3176 = vadd.f32 0.0, %v3175
        %v3177 = vpop.f32.mrb[0].mxu0
        %v3178 = vpop.f32.mrb[0].mxu0
        %v3179 = vadd.f32 0.0, %v3178
        %v3180 = vpop.f32.mrb[0].mxu0
        %3181 = vmatprep.mubr.bf16.mxu0 0
        %3182 = vmatmul.mubr.bf16.gmra.mrb[0].mxu0 %v3110
        %v3183 = vpop.f32.mrb[0].mxu0
        %v3184 = vadd.f32 0.0, %v3183
        %v3185 = vpop.f32.mrb[0].mxu0
        %v3186 = vpop.f32.mrb[0].mxu0
        %v3187 = vadd.f32 0.0, %v3186
        %v3188 = vpop.f32.mrb[0].mxu0
        %3189 = vmatprep.mubr.bf16.mxu0 0
        %3190 = vmatmul.mubr.bf16.gmra.mrb[0].mxu0 %v3113
        %v3191 = vpop.f32.mrb[0].mxu0
        %v3192 = vadd.f32 0.0, %v3191
        %v3193 = vpop.f32.mrb[0].mxu0
        %v3194 = vpop.f32.mrb[0].mxu0
        %v3195 = vadd.f32 0.0, %v3194
        %v3196 = vpop.f32.mrb[0].mxu0
        %3197 = vmatprep.mubr.bf16.mxu0 0
        %3198 = vmatmul.mubr.bf16.gmra.mrb[0].mxu0 %v3116
        %v3199 = vpop.f32.mrb[0].mxu0
        %v3200 = vadd.f32 0.0, %v3199
        %v3201 = vpop.f32.mrb[0].mxu0
        %v3202 = vpop.f32.mrb[0].mxu0
        %v3203 = vadd.f32 0.0, %v3202
        %v3204 = vpop.f32.mrb[0].mxu0
        %3205 = vmatprep.mubr.bf16.mxu0 0
        %3206 = vmatmul.mubr.bf16.gmra.mrb[0].mxu0 %v3119
        %v3207 = vpop.f32.mrb[0].mxu0
        %v3208 = vadd.f32 0.0, %v3207
        %v3209 = vpop.f32.mrb[0].mxu0
        %v3210 = vpop.f32.mrb[0].mxu0
        %v3211 = vadd.f32 0.0, %v3210
        %v3212 = vpop.f32.mrb[0].mxu0
        %3213 = vmatprep.mubr.bf16.mxu0 0
        %3214 = vmatmul.mubr.bf16.gmra.mrb[0].mxu0 %v3122
        %v3215 = vpop.f32.mrb[0].mxu0
        %v3216 = vadd.f32 0.0, %v3215
        %v3217 = vpop.f32.mrb[0].mxu0
        %v3218 = vpop.f32.mrb[0].mxu0
        %v3219 = vadd.f32 0.0, %v3218
        %v3220 = vpop.f32.mrb[0].mxu0
        %3221 = vmatprep.mubr.bf16.mxu0 0
        %3222 = vmatmul.mubr.bf16.gmra.mrb[0].mxu0 %v3125
        %v3223 = vpop.f32.mrb[0].mxu0
        %v3224 = vadd.f32 0.0, %v3223
        %v3225 = vpop.f32.mrb[0].mxu0
        %v3226 = vpop.f32.mrb[0].mxu0
        %v3227 = vadd.f32 0.0, %v3226
        %v3228 = vpop.f32.mrb[0].mxu0
        %3229 = vmatprep.mubr.bf16.mxu0 0
        %3230 = vmatmul.mubr.bf16.gmra.mrb[0].mxu0 %v3128
        %v3231 = vpop.f32.mrb[0].mxu0
        %v3232 = vadd.f32 0.0, %v3231
        %v3233 = vpop.f32.mrb[0].mxu0
        %v3234 = vpop.f32.mrb[0].mxu0
        %v3235 = vadd.f32 0.0, %v3234
        %v3236 = vpop.f32.mrb[0].mxu0
        %3237 = vdwg.mxu0
        %v3238 = vld [vmem:[#allocation2] sm:$0xff]
        %v3239 = vld [vmem:[#allocation2 + $0x8] sm:$0xff]
        %v3240 = vld [vmem:[#allocation2 + $0x10] sm:$0xff]
        %v3241 = vld [vmem:[#allocation2 + $0x18] sm:$0xff]
        %v3242 = vld [vmem:[#allocation2 + $0x20] sm:$0xff]
        %v3243 = vld [vmem:[#allocation2 + $0x28] sm:$0xff]
        %v3244 = vld [vmem:[#allocation2 + $0x30] sm:$0xff]
        %v3245 = vld [vmem:[#allocation2 + $0x38] sm:$0xff]
        %v3246 = vld [vmem:[#allocation2 + $0x40] sm:$0xff]
        %v3247 = vld [vmem:[#allocation2 + $0x48] sm:$0xff]
        %v3248 = vld [vmem:[#allocation2 + $0x50] sm:$0xff]
        %v3249 = vld [vmem:[#allocation2 + $0x58] sm:$0xff]
        %v3250 = vld [vmem:[#allocation2 + $0x60] sm:$0xff]
        %v3251 = vld [vmem:[#allocation2 + $0x68] sm:$0xff]
        %v3252 = vld [vmem:[#allocation2 + $0x70] sm:$0xff]
        %v3253 = vld [vmem:[#allocation2 + $0x78] sm:$0xff]
        %v3254 = vld [vmem:[#allocation2 + $0x80] sm:$0xff]
        %v3255 = vld [vmem:[#allocation2 + $0x88] sm:$0xff]
        %v3256 = vadd.f32 %v3238, %v3168
        %v3257 = vadd.f32 %v3239, %v3171
        %v3258 = vadd.f32 %v3240, %v3176
        %v3259 = vadd.f32 %v3241, %v3179
        %v3260 = vadd.f32 %v3242, %v3184
        %v3261 = vadd.f32 %v3243, %v3187
        %v3262 = vadd.f32 %v3244, %v3192
        %v3263 = vadd.f32 %v3245, %v3195
        %v3264 = vadd.f32 %v3246, %v3200
        %v3265 = vadd.f32 %v3247, %v3203
        %v3266 = vadd.f32 %v3248, %v3208
        %v3267 = vadd.f32 %v3249, %v3211
        %v3268 = vadd.f32 %v3250, %v3216
        %v3269 = vadd.f32 %v3251, %v3219
        %v3270 = vadd.f32 %v3252, %v3224
        %v3271 = vadd.f32 %v3253, %v3227
        %v3272 = vadd.f32 %v3254, %v3232
        %v3273 = vadd.f32 %v3255, %v3235
        %3274 = vst.msk [vmem:[#allocation2] sm:$0xff] %vm273, %v3256
        %3275 = vst.msk [vmem:[#allocation2 + $0x8] sm:$0xff] %vm273, %v3257
        %3276 = vst.msk [vmem:[#allocation2 + $0x10] sm:$0xff] %vm273, %v3258
        %3277 = vst.msk [vmem:[#allocation2 + $0x18] sm:$0xff] %vm273, %v3259
        %3278 = vst.msk [vmem:[#allocation2 + $0x20] sm:$0xff] %vm273, %v3260
        %3279 = vst.msk [vmem:[#allocation2 + $0x28] sm:$0xff] %vm273, %v3261
        %3280 = vst.msk [vmem:[#allocation2 + $0x30] sm:$0xff] %vm273, %v3262
        %3281 = vst.msk [vmem:[#allocation2 + $0x38] sm:$0xff] %vm273, %v3263
        %3282 = vst.msk [vmem:[#allocation2 + $0x40] sm:$0xff] %vm273, %v3264
        %3283 = vst.msk [vmem:[#allocation2 + $0x48] sm:$0xff] %vm273, %v3265
        %3284 = vst.msk [vmem:[#allocation2 + $0x50] sm:$0xff] %vm273, %v3266
        %3285 = vst.msk [vmem:[#allocation2 + $0x58] sm:$0xff] %vm273, %v3267
        %3286 = vst.msk [vmem:[#allocation2 + $0x60] sm:$0xff] %vm273, %v3268
        %3287 = vst.msk [vmem:[#allocation2 + $0x68] sm:$0xff] %vm273, %v3269
        %3288 = vst.msk [vmem:[#allocation2 + $0x70] sm:$0xff] %vm273, %v3270
        %3289 = vst.msk [vmem:[#allocation2 + $0x78] sm:$0xff] %vm273, %v3271
        %3290 = vst.msk [vmem:[#allocation2 + $0x80] sm:$0xff] %vm273, %v3272
        %3291 = vst.msk [vmem:[#allocation2 + $0x88] sm:$0xff] %vm273, %v3273
        %v3292 = vld [vmem:[%s205 + $0x10] sm:$0xc]
        %v3293 = vld [vmem:[%s205 + $0x14] sm:$0xf]
        %v3294 = vld [vmem:[%s205 + $0x18] sm:$0xf]
        %v3295 = vld [vmem:[%s205 + $0x1c] sm:$0xf]
        %v3296 = vld [vmem:[%s205 + $0x20] sm:$0xf]
        %v3297 = vld [vmem:[%s205 + $0x24] sm:$0xf]
        %v3298 = vld [vmem:[%s205 + $0x28] sm:$0xf]
        %v3299 = vld [vmem:[%s205 + $0x2c] sm:$0xf]
        %v3300 = vld [vmem:[%s205 + $0x30] sm:$0xf]
        %v3301 = vld [vmem:[%s205 + $0x34] sm:$0xf]
        %v3302 = vld [vmem:[%s205 + $0x38] sm:$0xf]
        %v3303 = vld [vmem:[%s205 + $0x3c] sm:$0xf]
        %v3304 = vld [vmem:[%s205 + $0x40] sm:$0xf]
        %v3305 = vld [vmem:[%s205 + $0x44] sm:$0xf]
        %v3306 = vld [vmem:[%s205 + $0x48] sm:$0xf]
        %v3307 = vld [vmem:[%s205 + $0x4c] sm:$0xf]
        %v3308 = vld [vmem:[%s205 + $0x50] sm:$0xf]
        %v3309 = vld [vmem:[%s205 + $0x54] sm:$0xf]
        %v3310 = vld [vmem:[%s205 + $0x58] sm:$0x3]
        %s3311 = scalar_lea.vmem %s1, 20
        %v3312 = vld [vmem:[%s3311] sm:$0x3]
        %v3332 = vunpack.c.l.b16 %v3292
        %v3333 = vunpack.c.l.b16 %v3293
        %v3334 = vunpack.c.l.b16 %v3294
        %v3335 = vunpack.c.l.b16 %v3295
        %v3336 = vunpack.c.l.b16 %v3296
        %v3337 = vunpack.c.l.b16 %v3297
        %v3338 = vunpack.c.l.b16 %v3298
        %v3339 = vunpack.c.l.b16 %v3299
        %v3340 = vunpack.c.l.b16 %v3300
        %v3341 = vunpack.c.l.b16 %v3301
        %v3342 = vunpack.c.l.b16 %v3302
        %v3343 = vunpack.c.l.b16 %v3303
        %v3344 = vunpack.c.l.b16 %v3304
        %v3345 = vunpack.c.l.b16 %v3305
        %v3346 = vunpack.c.l.b16 %v3306
        %v3347 = vunpack.c.l.b16 %v3307
        %v3348 = vunpack.c.l.b16 %v3308
        %v3349 = vunpack.c.l.b16 %v3309
        %v3350 = vunpack.c.l.b16 %v3310
        %v3351 = vpack.c.b16 %v3333, %v3332
        %v3352 = vpack.c.b16 %v3335, %v3334
        %v3353 = vpack.c.b16 %v3337, %v3336
        %v3354 = vpack.c.b16 %v3339, %v3338
        %v3355 = vpack.c.b16 %v3341, %v3340
        %v3356 = vpack.c.b16 %v3343, %v3342
        %v3357 = vpack.c.b16 %v3345, %v3344
        %v3358 = vpack.c.b16 %v3347, %v3346
        %v3359 = vpack.c.b16 %v3349, %v3348
        %v3360 = vpack.c.b16 %v3350, %v3350
        %v3361 = vrot.slane %v3351, 2
        %v3362 = vrot.slane %v3352, 2
        %v3363 = vsel %vm2440, %v3361, %v3362
        %v3364 = vrot.slane %v3353, 2
        %v3365 = vsel %vm2440, %v3362, %v3364
        %v3366 = vrot.slane %v3354, 2
        %v3367 = vsel %vm2440, %v3364, %v3366
        %v3368 = vrot.slane %v3355, 2
        %v3369 = vsel %vm2440, %v3366, %v3368
        %v3370 = vrot.slane %v3356, 2
        %v3371 = vsel %vm2440, %v3368, %v3370
        %v3372 = vrot.slane %v3357, 2
        %v3373 = vsel %vm2440, %v3370, %v3372
        %v3374 = vrot.slane %v3358, 2
        %v3375 = vsel %vm2440, %v3372, %v3374
        %v3376 = vrot.slane %v3359, 2
        %v3377 = vsel %vm2440, %v3374, %v3376
        %v3378 = vrot.slane %v3360, 2
        %v3379 = vsel %vm2440, %v3376, %v3378
        %v3381 = vsel %vm273, %v3363, 0
        %v3384 = vsel %vm273, %v3365, 0
        %v3387 = vsel %vm273, %v3367, 0
        %v3390 = vsel %vm273, %v3369, 0
        %v3393 = vsel %vm273, %v3371, 0
        %v3396 = vsel %vm273, %v3373, 0
        %v3399 = vsel %vm273, %v3375, 0
        %v3402 = vsel %vm273, %v3377, 0
        %v3405 = vsel %vm273, %v3379, 0
        %v3408 = vsel %vm301, %v3312, 0
        %3410 = vmatprep.subr.bf16.mxu0 0
        %3411 = vmatpush1.bf16.msra.mxu0 %v3408
        %3412 = vmatprep.subr.bf16.mxu0 0
        %3413 = vmatpush1.bf16.msra.mxu0 0
        %3414 = vmatprep.subr.bf16.mxu0 0
        %3415 = vmatpush1.bf16.msra.mxu0 0
        %3416 = vmatprep.subr.bf16.mxu0 0
        %3417 = vmatpush1.bf16.msra.mxu0 0
        %3418 = vmatprep.subr.bf16.mxu0 0
        %3419 = vmatpush1.bf16.msra.mxu0 0
        %3420 = vmatprep.subr.bf16.mxu0 0
        %3421 = vmatpush1.bf16.msra.mxu0 0
        %3422 = vmatprep.subr.bf16.mxu0 0
        %3423 = vmatpush1.bf16.msra.mxu0 0
        %3424 = vmatprep.subr.bf16.mxu0 0
        %3425 = vmatpush1.bf16.msra.mxu0 0
        %3426 = vmatprep.subr.bf16.mxu0 0
        %3427 = vmatpush1.bf16.msra.mxu0 0
        %3428 = vmatprep.subr.bf16.mxu0 0
        %3429 = vmatpush1.bf16.msra.mxu0 0
        %3430 = vmatprep.subr.bf16.mxu0 0
        %3431 = vmatpush1.bf16.msra.mxu0 0
        %3432 = vmatprep.subr.bf16.mxu0 0
        %3433 = vmatpush1.bf16.msra.mxu0 0
        %3434 = vmatprep.subr.bf16.mxu0 0
        %3435 = vmatpush1.bf16.msra.mxu0 0
        %3436 = vmatprep.subr.bf16.mxu0 0
        %3437 = vmatpush1.bf16.msra.mxu0 0
        %3438 = vmatprep.subr.bf16.mxu0 0
        %3439 = vmatpush1.bf16.msra.mxu0 0
        %3440 = vmatprep.subr.bf16.mxu0 0
        %3441 = vmatpush1.bf16.msra.mxu0 0
        %3442 = vmatprep.mubr.bf16.mxu0 0
        %3443 = vmatmul.mubr.bf16.gmra.mrb[0].mxu0 %v3381
        %v3444 = vpop.f32.mrb[0].mxu0
        %v3445 = vadd.f32 0.0, %v3444
        %v3446 = vpop.f32.mrb[0].mxu0
        %v3447 = vpop.f32.mrb[0].mxu0
        %v3448 = vadd.f32 0.0, %v3447
        %v3449 = vpop.f32.mrb[0].mxu0
        %3450 = vmatprep.mubr.bf16.mxu0 0
        %3451 = vmatmul.mubr.bf16.gmra.mrb[0].mxu0 %v3384
        %v3452 = vpop.f32.mrb[0].mxu0
        %v3453 = vadd.f32 0.0, %v3452
        %v3454 = vpop.f32.mrb[0].mxu0
        %v3455 = vpop.f32.mrb[0].mxu0
        %v3456 = vadd.f32 0.0, %v3455
        %v3457 = vpop.f32.mrb[0].mxu0
        %3458 = vmatprep.mubr.bf16.mxu0 0
        %3459 = vmatmul.mubr.bf16.gmra.mrb[0].mxu0 %v3387
        %v3460 = vpop.f32.mrb[0].mxu0
        %v3461 = vadd.f32 0.0, %v3460
        %v3462 = vpop.f32.mrb[0].mxu0
        %v3463 = vpop.f32.mrb[0].mxu0
        %v3464 = vadd.f32 0.0, %v3463
        %v3465 = vpop.f32.mrb[0].mxu0
        %3466 = vmatprep.mubr.bf16.mxu0 0
        %3467 = vmatmul.mubr.bf16.gmra.mrb[0].mxu0 %v3390
        %v3468 = vpop.f32.mrb[0].mxu0
        %v3469 = vadd.f32 0.0, %v3468
        %v3470 = vpop.f32.mrb[0].mxu0
        %v3471 = vpop.f32.mrb[0].mxu0
        %v3472 = vadd.f32 0.0, %v3471
        %v3473 = vpop.f32.mrb[0].mxu0
        %3474 = vmatprep.mubr.bf16.mxu0 0
        %3475 = vmatmul.mubr.bf16.gmra.mrb[0].mxu0 %v3393
        %v3476 = vpop.f32.mrb[0].mxu0
        %v3477 = vadd.f32 0.0, %v3476
        %v3478 = vpop.f32.mrb[0].mxu0
        %v3479 = vpop.f32.mrb[0].mxu0
        %v3480 = vadd.f32 0.0, %v3479
        %v3481 = vpop.f32.mrb[0].mxu0
        %3482 = vmatprep.mubr.bf16.mxu0 0
        %3483 = vmatmul.mubr.bf16.gmra.mrb[0].mxu0 %v3396
        %v3484 = vpop.f32.mrb[0].mxu0
        %v3485 = vadd.f32 0.0, %v3484
        %v3486 = vpop.f32.mrb[0].mxu0
        %v3487 = vpop.f32.mrb[0].mxu0
        %v3488 = vadd.f32 0.0, %v3487
        %v3489 = vpop.f32.mrb[0].mxu0
        %3490 = vmatprep.mubr.bf16.mxu0 0
        %3491 = vmatmul.mubr.bf16.gmra.mrb[0].mxu0 %v3399
        %v3492 = vpop.f32.mrb[0].mxu0
        %v3493 = vadd.f32 0.0, %v3492
        %v3494 = vpop.f32.mrb[0].mxu0
        %v3495 = vpop.f32.mrb[0].mxu0
        %v3496 = vadd.f32 0.0, %v3495
        %v3497 = vpop.f32.mrb[0].mxu0
        %3498 = vmatprep.mubr.bf16.mxu0 0
        %3499 = vmatmul.mubr.bf16.gmra.mrb[0].mxu0 %v3402
        %v3500 = vpop.f32.mrb[0].mxu0
        %v3501 = vadd.f32 0.0, %v3500
        %v3502 = vpop.f32.mrb[0].mxu0
        %v3503 = vpop.f32.mrb[0].mxu0
        %v3504 = vadd.f32 0.0, %v3503
        %v3505 = vpop.f32.mrb[0].mxu0
        %3506 = vmatprep.mubr.bf16.mxu0 0
        %3507 = vmatmul.mubr.bf16.gmra.mrb[0].mxu0 %v3405
        %v3508 = vpop.f32.mrb[0].mxu0
        %v3509 = vadd.f32 0.0, %v3508
        %v3510 = vpop.f32.mrb[0].mxu0
        %v3511 = vpop.f32.mrb[0].mxu0
        %v3512 = vadd.f32 0.0, %v3511
        %v3513 = vpop.f32.mrb[0].mxu0
        %3514 = vdwg.mxu0
        %v3515 = vld [vmem:[#allocation2] sm:$0xff]
        %v3516 = vld [vmem:[#allocation2 + $0x8] sm:$0xff]
        %v3517 = vld [vmem:[#allocation2 + $0x10] sm:$0xff]
        %v3518 = vld [vmem:[#allocation2 + $0x18] sm:$0xff]
        %v3519 = vld [vmem:[#allocation2 + $0x20] sm:$0xff]
        %v3520 = vld [vmem:[#allocation2 + $0x28] sm:$0xff]
        %v3521 = vld [vmem:[#allocation2 + $0x30] sm:$0xff]
        %v3522 = vld [vmem:[#allocation2 + $0x38] sm:$0xff]
        %v3523 = vld [vmem:[#allocation2 + $0x40] sm:$0xff]
        %v3524 = vld [vmem:[#allocation2 + $0x48] sm:$0xff]
        %v3525 = vld [vmem:[#allocation2 + $0x50] sm:$0xff]
        %v3526 = vld [vmem:[#allocation2 + $0x58] sm:$0xff]
        %v3527 = vld [vmem:[#allocation2 + $0x60] sm:$0xff]
        %v3528 = vld [vmem:[#allocation2 + $0x68] sm:$0xff]
        %v3529 = vld [vmem:[#allocation2 + $0x70] sm:$0xff]
        %v3530 = vld [vmem:[#allocation2 + $0x78] sm:$0xff]
        %v3531 = vld [vmem:[#allocation2 + $0x80] sm:$0xff]
        %v3532 = vld [vmem:[#allocation2 + $0x88] sm:$0xff]
        %v3533 = vadd.f32 %v3515, %v3445
        %v3534 = vadd.f32 %v3516, %v3448
        %v3535 = vadd.f32 %v3517, %v3453
        %v3536 = vadd.f32 %v3518, %v3456
        %v3537 = vadd.f32 %v3519, %v3461
        %v3538 = vadd.f32 %v3520, %v3464
        %v3539 = vadd.f32 %v3521, %v3469
        %v3540 = vadd.f32 %v3522, %v3472
        %v3541 = vadd.f32 %v3523, %v3477
        %v3542 = vadd.f32 %v3524, %v3480
        %v3543 = vadd.f32 %v3525, %v3485
        %v3544 = vadd.f32 %v3526, %v3488
        %v3545 = vadd.f32 %v3527, %v3493
        %v3546 = vadd.f32 %v3528, %v3496
        %v3547 = vadd.f32 %v3529, %v3501
        %v3548 = vadd.f32 %v3530, %v3504
        %v3549 = vadd.f32 %v3531, %v3509
        %v3550 = vadd.f32 %v3532, %v3512
        %3551 = vst.msk [vmem:[#allocation2] sm:$0xff] %vm273, %v3533
        %3552 = vst.msk [vmem:[#allocation2 + $0x8] sm:$0xff] %vm273, %v3534
        %3553 = vst.msk [vmem:[#allocation2 + $0x10] sm:$0xff] %vm273, %v3535
        %3554 = vst.msk [vmem:[#allocation2 + $0x18] sm:$0xff] %vm273, %v3536
        %3555 = vst.msk [vmem:[#allocation2 + $0x20] sm:$0xff] %vm273, %v3537
        %3556 = vst.msk [vmem:[#allocation2 + $0x28] sm:$0xff] %vm273, %v3538
        %3557 = vst.msk [vmem:[#allocation2 + $0x30] sm:$0xff] %vm273, %v3539
        %3558 = vst.msk [vmem:[#allocation2 + $0x38] sm:$0xff] %vm273, %v3540
        %3559 = vst.msk [vmem:[#allocation2 + $0x40] sm:$0xff] %vm273, %v3541
        %3560 = vst.msk [vmem:[#allocation2 + $0x48] sm:$0xff] %vm273, %v3542
        %3561 = vst.msk [vmem:[#allocation2 + $0x50] sm:$0xff] %vm273, %v3543
        %3562 = vst.msk [vmem:[#allocation2 + $0x58] sm:$0xff] %vm273, %v3544
        %3563 = vst.msk [vmem:[#allocation2 + $0x60] sm:$0xff] %vm273, %v3545
        %3564 = vst.msk [vmem:[#allocation2 + $0x68] sm:$0xff] %vm273, %v3546
        %3565 = vst.msk [vmem:[#allocation2 + $0x70] sm:$0xff] %vm273, %v3547
        %3566 = vst.msk [vmem:[#allocation2 + $0x78] sm:$0xff] %vm273, %v3548
        %3567 = vst.msk [vmem:[#allocation2 + $0x80] sm:$0xff] %vm273, %v3549
        %3568 = vst.msk [vmem:[#allocation2 + $0x88] sm:$0xff] %vm273, %v3550
        %v3569 = vld [vmem:[%s205 + $0x10] sm:$0xc]
        %v3570 = vld [vmem:[%s205 + $0x14] sm:$0xf]
        %v3571 = vld [vmem:[%s205 + $0x18] sm:$0xf]
        %v3572 = vld [vmem:[%s205 + $0x1c] sm:$0xf]
        %v3573 = vld [vmem:[%s205 + $0x20] sm:$0xf]
        %v3574 = vld [vmem:[%s205 + $0x24] sm:$0xf]
        %v3575 = vld [vmem:[%s205 + $0x28] sm:$0xf]
        %v3576 = vld [vmem:[%s205 + $0x2c] sm:$0xf]
        %v3577 = vld [vmem:[%s205 + $0x30] sm:$0xf]
        %v3578 = vld [vmem:[%s205 + $0x34] sm:$0xf]
        %v3579 = vld [vmem:[%s205 + $0x38] sm:$0xf]
        %v3580 = vld [vmem:[%s205 + $0x3c] sm:$0xf]
        %v3581 = vld [vmem:[%s205 + $0x40] sm:$0xf]
        %v3582 = vld [vmem:[%s205 + $0x44] sm:$0xf]
        %v3583 = vld [vmem:[%s205 + $0x48] sm:$0xf]
        %v3584 = vld [vmem:[%s205 + $0x4c] sm:$0xf]
        %v3585 = vld [vmem:[%s205 + $0x50] sm:$0xf]
        %v3586 = vld [vmem:[%s205 + $0x54] sm:$0xf]
        %v3587 = vld [vmem:[%s205 + $0x58] sm:$0x7]
        %s3588 = scalar_lea.vmem %s1, 22
        %v3589 = vld [vmem:[%s3588] sm:$0x3]
        %v3609 = vunpack.c.l.b16 %v3569
        %v3610 = vunpack.c.l.b16 %v3570
        %v3611 = vunpack.c.l.b16 %v3571
        %v3612 = vunpack.c.l.b16 %v3572
        %v3613 = vunpack.c.l.b16 %v3573
        %v3614 = vunpack.c.l.b16 %v3574
        %v3615 = vunpack.c.l.b16 %v3575
        %v3616 = vunpack.c.l.b16 %v3576
        %v3617 = vunpack.c.l.b16 %v3577
        %v3618 = vunpack.c.l.b16 %v3578
        %v3619 = vunpack.c.l.b16 %v3579
        %v3620 = vunpack.c.l.b16 %v3580
        %v3621 = vunpack.c.l.b16 %v3581
        %v3622 = vunpack.c.l.b16 %v3582
        %v3623 = vunpack.c.l.b16 %v3583
        %v3624 = vunpack.c.l.b16 %v3584
        %v3625 = vunpack.c.l.b16 %v3585
        %v3626 = vunpack.c.l.b16 %v3586
        %v3627 = vunpack.c.l.b16 %v3587
        %v3628 = vpack.c.b16 %v3610, %v3609
        %v3629 = vpack.c.b16 %v3612, %v3611
        %v3630 = vpack.c.b16 %v3614, %v3613
        %v3631 = vpack.c.b16 %v3616, %v3615
        %v3632 = vpack.c.b16 %v3618, %v3617
        %v3633 = vpack.c.b16 %v3620, %v3619
        %v3634 = vpack.c.b16 %v3622, %v3621
        %v3635 = vpack.c.b16 %v3624, %v3623
        %v3636 = vpack.c.b16 %v3626, %v3625
        %v3637 = vpack.c.b16 %v3627, %v3627
        %vm3638 = vsmask.f32 5376
        %v3640 = vshrl.u32 %v3628, 16
        %v3642 = vrot.slane %v3640, 2
        %v3643 = vshll.u32 %v3628, 16
        %v3645 = vrot.slane %v3643, 3
        %v3646 = vor.u32 %v3642, %v3645
        %v3648 = vshrl.u32 %v3629, 16
        %v3650 = vrot.slane %v3648, 2
        %v3651 = vshll.u32 %v3629, 16
        %v3653 = vrot.slane %v3651, 3
        %v3654 = vor.u32 %v3650, %v3653
        %v3655 = vsel %vm3638, %v3646, %v3654
        %v3657 = vshrl.u32 %v3630, 16
        %v3659 = vrot.slane %v3657, 2
        %v3660 = vshll.u32 %v3630, 16
        %v3662 = vrot.slane %v3660, 3
        %v3663 = vor.u32 %v3659, %v3662
        %v3664 = vsel %vm3638, %v3654, %v3663
        %v3666 = vshrl.u32 %v3631, 16
        %v3668 = vrot.slane %v3666, 2
        %v3669 = vshll.u32 %v3631, 16
        %v3671 = vrot.slane %v3669, 3
        %v3672 = vor.u32 %v3668, %v3671
        %v3673 = vsel %vm3638, %v3663, %v3672
        %v3675 = vshrl.u32 %v3632, 16
        %v3677 = vrot.slane %v3675, 2
        %v3678 = vshll.u32 %v3632, 16
        %v3680 = vrot.slane %v3678, 3
        %v3681 = vor.u32 %v3677, %v3680
        %v3682 = vsel %vm3638, %v3672, %v3681
        %v3684 = vshrl.u32 %v3633, 16
        %v3686 = vrot.slane %v3684, 2
        %v3687 = vshll.u32 %v3633, 16
        %v3689 = vrot.slane %v3687, 3
        %v3690 = vor.u32 %v3686, %v3689
        %v3691 = vsel %vm3638, %v3681, %v3690
        %v3693 = vshrl.u32 %v3634, 16
        %v3695 = vrot.slane %v3693, 2
        %v3696 = vshll.u32 %v3634, 16
        %v3698 = vrot.slane %v3696, 3
        %v3699 = vor.u32 %v3695, %v3698
        %v3700 = vsel %vm3638, %v3690, %v3699
        %v3702 = vshrl.u32 %v3635, 16
        %v3704 = vrot.slane %v3702, 2
        %v3705 = vshll.u32 %v3635, 16
        %v3707 = vrot.slane %v3705, 3
        %v3708 = vor.u32 %v3704, %v3707
        %v3709 = vsel %vm3638, %v3699, %v3708
        %v3711 = vshrl.u32 %v3636, 16
        %v3713 = vrot.slane %v3711, 2
        %v3714 = vshll.u32 %v3636, 16
        %v3716 = vrot.slane %v3714, 3
        %v3717 = vor.u32 %v3713, %v3716
        %v3718 = vsel %vm3638, %v3708, %v3717
        %v3720 = vshrl.u32 %v3637, 16
        %v3722 = vrot.slane %v3720, 2
        %v3723 = vshll.u32 %v3637, 16
        %v3725 = vrot.slane %v3723, 3
        %v3726 = vor.u32 %v3722, %v3725
        %v3727 = vsel %vm3638, %v3717, %v3726
        %v3729 = vsel %vm273, %v3655, 0
        %v3732 = vsel %vm273, %v3664, 0
        %v3735 = vsel %vm273, %v3673, 0
        %v3738 = vsel %vm273, %v3682, 0
        %v3741 = vsel %vm273, %v3691, 0
        %v3744 = vsel %vm273, %v3700, 0
        %v3747 = vsel %vm273, %v3709, 0
        %v3750 = vsel %vm273, %v3718, 0
        %v3753 = vsel %vm273, %v3727, 0
        %v3756 = vsel %vm301, %v3589, 0
        %3758 = vmatprep.subr.bf16.mxu0 0
        %3759 = vmatpush1.bf16.msra.mxu0 %v3756
        %3760 = vmatprep.subr.bf16.mxu0 0
        %3761 = vmatpush1.bf16.msra.mxu0 0
        %3762 = vmatprep.subr.bf16.mxu0 0
        %3763 = vmatpush1.bf16.msra.mxu0 0
        %3764 = vmatprep.subr.bf16.mxu0 0
        %3765 = vmatpush1.bf16.msra.mxu0 0
        %3766 = vmatprep.subr.bf16.mxu0 0
        %3767 = vmatpush1.bf16.msra.mxu0 0
        %3768 = vmatprep.subr.bf16.mxu0 0
        %3769 = vmatpush1.bf16.msra.mxu0 0
        %3770 = vmatprep.subr.bf16.mxu0 0
        %3771 = vmatpush1.bf16.msra.mxu0 0
        %3772 = vmatprep.subr.bf16.mxu0 0
        %3773 = vmatpush1.bf16.msra.mxu0 0
        %3774 = vmatprep.subr.bf16.mxu0 0
        %3775 = vmatpush1.bf16.msra.mxu0 0
        %3776 = vmatprep.subr.bf16.mxu0 0
        %3777 = vmatpush1.bf16.msra.mxu0 0
        %3778 = vmatprep.subr.bf16.mxu0 0
        %3779 = vmatpush1.bf16.msra.mxu0 0
        %3780 = vmatprep.subr.bf16.mxu0 0
        %3781 = vmatpush1.bf16.msra.mxu0 0
        %3782 = vmatprep.subr.bf16.mxu0 0
        %3783 = vmatpush1.bf16.msra.mxu0 0
        %3784 = vmatprep.subr.bf16.mxu0 0
        %3785 = vmatpush1.bf16.msra.mxu0 0
        %3786 = vmatprep.subr.bf16.mxu0 0
        %3787 = vmatpush1.bf16.msra.mxu0 0
        %3788 = vmatprep.subr.bf16.mxu0 0
        %3789 = vmatpush1.bf16.msra.mxu0 0
        %3790 = vmatprep.mubr.bf16.mxu0 0
        %3791 = vmatmul.mubr.bf16.gmra.mrb[0].mxu0 %v3729
        %v3792 = vpop.f32.mrb[0].mxu0
        %v3793 = vadd.f32 0.0, %v3792
        %v3794 = vpop.f32.mrb[0].mxu0
        %v3795 = vpop.f32.mrb[0].mxu0
        %v3796 = vadd.f32 0.0, %v3795
        %v3797 = vpop.f32.mrb[0].mxu0
        %3798 = vmatprep.mubr.bf16.mxu0 0
        %3799 = vmatmul.mubr.bf16.gmra.mrb[0].mxu0 %v3732
        %v3800 = vpop.f32.mrb[0].mxu0
        %v3801 = vadd.f32 0.0, %v3800
        %v3802 = vpop.f32.mrb[0].mxu0
        %v3803 = vpop.f32.mrb[0].mxu0
        %v3804 = vadd.f32 0.0, %v3803
        %v3805 = vpop.f32.mrb[0].mxu0
        %3806 = vmatprep.mubr.bf16.mxu0 0
        %3807 = vmatmul.mubr.bf16.gmra.mrb[0].mxu0 %v3735
        %v3808 = vpop.f32.mrb[0].mxu0
        %v3809 = vadd.f32 0.0, %v3808
        %v3810 = vpop.f32.mrb[0].mxu0
        %v3811 = vpop.f32.mrb[0].mxu0
        %v3812 = vadd.f32 0.0, %v3811
        %v3813 = vpop.f32.mrb[0].mxu0
        %3814 = vmatprep.mubr.bf16.mxu0 0
        %3815 = vmatmul.mubr.bf16.gmra.mrb[0].mxu0 %v3738
        %v3816 = vpop.f32.mrb[0].mxu0
        %v3817 = vadd.f32 0.0, %v3816
        %v3818 = vpop.f32.mrb[0].mxu0
        %v3819 = vpop.f32.mrb[0].mxu0
        %v3820 = vadd.f32 0.0, %v3819
        %v3821 = vpop.f32.mrb[0].mxu0
        %3822 = vmatprep.mubr.bf16.mxu0 0
        %3823 = vmatmul.mubr.bf16.gmra.mrb[0].mxu0 %v3741
        %v3824 = vpop.f32.mrb[0].mxu0
        %v3825 = vadd.f32 0.0, %v3824
        %v3826 = vpop.f32.mrb[0].mxu0
        %v3827 = vpop.f32.mrb[0].mxu0
        %v3828 = vadd.f32 0.0, %v3827
        %v3829 = vpop.f32.mrb[0].mxu0
        %3830 = vmatprep.mubr.bf16.mxu0 0
        %3831 = vmatmul.mubr.bf16.gmra.mrb[0].mxu0 %v3744
        %v3832 = vpop.f32.mrb[0].mxu0
        %v3833 = vadd.f32 0.0, %v3832
        %v3834 = vpop.f32.mrb[0].mxu0
        %v3835 = vpop.f32.mrb[0].mxu0
        %v3836 = vadd.f32 0.0, %v3835
        %v3837 = vpop.f32.mrb[0].mxu0
        %3838 = vmatprep.mubr.bf16.mxu0 0
        %3839 = vmatmul.mubr.bf16.gmra.mrb[0].mxu0 %v3747
        %v3840 = vpop.f32.mrb[0].mxu0
        %v3841 = vadd.f32 0.0, %v3840
        %v3842 = vpop.f32.mrb[0].mxu0
        %v3843 = vpop.f32.mrb[0].mxu0
        %v3844 = vadd.f32 0.0, %v3843
        %v3845 = vpop.f32.mrb[0].mxu0
        %3846 = vmatprep.mubr.bf16.mxu0 0
        %3847 = vmatmul.mubr.bf16.gmra.mrb[0].mxu0 %v3750
        %v3848 = vpop.f32.mrb[0].mxu0
        %v3849 = vadd.f32 0.0, %v3848
        %v3850 = vpop.f32.mrb[0].mxu0
        %v3851 = vpop.f32.mrb[0].mxu0
        %v3852 = vadd.f32 0.0, %v3851
        %v3853 = vpop.f32.mrb[0].mxu0
        %3854 = vmatprep.mubr.bf16.mxu0 0
        %3855 = vmatmul.mubr.bf16.gmra.mrb[0].mxu0 %v3753
        %v3856 = vpop.f32.mrb[0].mxu0
        %v3857 = vadd.f32 0.0, %v3856
        %v3858 = vpop.f32.mrb[0].mxu0
        %v3859 = vpop.f32.mrb[0].mxu0
        %v3860 = vadd.f32 0.0, %v3859
        %v3861 = vpop.f32.mrb[0].mxu0
        %3862 = vdwg.mxu0
        %v3863 = vld [vmem:[#allocation2] sm:$0xff]
        %v3864 = vld [vmem:[#allocation2 + $0x8] sm:$0xff]
        %v3865 = vld [vmem:[#allocation2 + $0x10] sm:$0xff]
        %v3866 = vld [vmem:[#allocation2 + $0x18] sm:$0xff]
        %v3867 = vld [vmem:[#allocation2 + $0x20] sm:$0xff]
        %v3868 = vld [vmem:[#allocation2 + $0x28] sm:$0xff]
        %v3869 = vld [vmem:[#allocation2 + $0x30] sm:$0xff]
        %v3870 = vld [vmem:[#allocation2 + $0x38] sm:$0xff]
        %v3871 = vld [vmem:[#allocation2 + $0x40] sm:$0xff]
        %v3872 = vld [vmem:[#allocation2 + $0x48] sm:$0xff]
        %v3873 = vld [vmem:[#allocation2 + $0x50] sm:$0xff]
        %v3874 = vld [vmem:[#allocation2 + $0x58] sm:$0xff]
        %v3875 = vld [vmem:[#allocation2 + $0x60] sm:$0xff]
        %v3876 = vld [vmem:[#allocation2 + $0x68] sm:$0xff]
        %v3877 = vld [vmem:[#allocation2 + $0x70] sm:$0xff]
        %v3878 = vld [vmem:[#allocation2 + $0x78] sm:$0xff]
        %v3879 = vld [vmem:[#allocation2 + $0x80] sm:$0xff]
        %v3880 = vld [vmem:[#allocation2 + $0x88] sm:$0xff]
        %v3881 = vadd.f32 %v3863, %v3793
        %v3882 = vadd.f32 %v3864, %v3796
        %v3883 = vadd.f32 %v3865, %v3801
        %v3884 = vadd.f32 %v3866, %v3804
        %v3885 = vadd.f32 %v3867, %v3809
        %v3886 = vadd.f32 %v3868, %v3812
        %v3887 = vadd.f32 %v3869, %v3817
        %v3888 = vadd.f32 %v3870, %v3820
        %v3889 = vadd.f32 %v3871, %v3825
        %v3890 = vadd.f32 %v3872, %v3828
        %v3891 = vadd.f32 %v3873, %v3833
        %v3892 = vadd.f32 %v3874, %v3836
        %v3893 = vadd.f32 %v3875, %v3841
        %v3894 = vadd.f32 %v3876, %v3844
        %v3895 = vadd.f32 %v3877, %v3849
        %v3896 = vadd.f32 %v3878, %v3852
        %v3897 = vadd.f32 %v3879, %v3857
        %v3898 = vadd.f32 %v3880, %v3860
        %3899 = vst.msk [vmem:[#allocation2] sm:$0xff] %vm273, %v3881
        %3900 = vst.msk [vmem:[#allocation2 + $0x8] sm:$0xff] %vm273, %v3882
        %3901 = vst.msk [vmem:[#allocation2 + $0x10] sm:$0xff] %vm273, %v3883
        %3902 = vst.msk [vmem:[#allocation2 + $0x18] sm:$0xff] %vm273, %v3884
        %3903 = vst.msk [vmem:[#allocation2 + $0x20] sm:$0xff] %vm273, %v3885
        %3904 = vst.msk [vmem:[#allocation2 + $0x28] sm:$0xff] %vm273, %v3886
        %3905 = vst.msk [vmem:[#allocation2 + $0x30] sm:$0xff] %vm273, %v3887
        %3906 = vst.msk [vmem:[#allocation2 + $0x38] sm:$0xff] %vm273, %v3888
        %3907 = vst.msk [vmem:[#allocation2 + $0x40] sm:$0xff] %vm273, %v3889
        %3908 = vst.msk [vmem:[#allocation2 + $0x48] sm:$0xff] %vm273, %v3890
        %3909 = vst.msk [vmem:[#allocation2 + $0x50] sm:$0xff] %vm273, %v3891
        %3910 = vst.msk [vmem:[#allocation2 + $0x58] sm:$0xff] %vm273, %v3892
        %3911 = vst.msk [vmem:[#allocation2 + $0x60] sm:$0xff] %vm273, %v3893
        %3912 = vst.msk [vmem:[#allocation2 + $0x68] sm:$0xff] %vm273, %v3894
        %3913 = vst.msk [vmem:[#allocation2 + $0x70] sm:$0xff] %vm273, %v3895
        %3914 = vst.msk [vmem:[#allocation2 + $0x78] sm:$0xff] %vm273, %v3896
        %3915 = vst.msk [vmem:[#allocation2 + $0x80] sm:$0xff] %vm273, %v3897
        %3916 = vst.msk [vmem:[#allocation2 + $0x88] sm:$0xff] %vm273, %v3898
        %v3917 = vld [vmem:[#allocation2] sm:$0xff]
        %v3918 = vld [vmem:[#allocation2 + $0x8] sm:$0xff]
        %v3919 = vld [vmem:[#allocation2 + $0x10] sm:$0xff]
        %v3920 = vld [vmem:[#allocation2 + $0x18] sm:$0xff]
        %v3921 = vld [vmem:[#allocation2 + $0x20] sm:$0xff]
        %v3922 = vld [vmem:[#allocation2 + $0x28] sm:$0xff]
        %v3923 = vld [vmem:[#allocation2 + $0x30] sm:$0xff]
        %v3924 = vld [vmem:[#allocation2 + $0x38] sm:$0xff]
        %v3925 = vld [vmem:[#allocation2 + $0x40] sm:$0xff]
        %v3926 = vld [vmem:[#allocation2 + $0x48] sm:$0xff]
        %v3927 = vld [vmem:[#allocation2 + $0x50] sm:$0xff]
        %v3928 = vld [vmem:[#allocation2 + $0x58] sm:$0xff]
        %v3929 = vld [vmem:[#allocation2 + $0x60] sm:$0xff]
        %v3930 = vld [vmem:[#allocation2 + $0x68] sm:$0xff]
        %v3931 = vld [vmem:[#allocation2 + $0x70] sm:$0xff]
        %v3932 = vld [vmem:[#allocation2 + $0x78] sm:$0xff]
        %v3933 = vld [vmem:[#allocation2 + $0x80] sm:$0xff]
        %v3934 = vld [vmem:[#allocation2 + $0x88] sm:$0xff]
        %v3935 = vadd.f32 %v3917, %v1411
        %v3936 = vadd.f32 %v3918, %v1411
        %v3937 = vadd.f32 %v3919, %v1411
        %v3938 = vadd.f32 %v3920, %v1411
        %v3939 = vadd.f32 %v3921, %v1411
        %v3940 = vadd.f32 %v3922, %v1411
        %v3941 = vadd.f32 %v3923, %v1411
        %v3942 = vadd.f32 %v3924, %v1411
        %v3943 = vadd.f32 %v3925, %v1411
        %v3944 = vadd.f32 %v3926, %v1411
        %v3945 = vadd.f32 %v3927, %v1411
        %v3946 = vadd.f32 %v3928, %v1411
        %v3947 = vadd.f32 %v3929, %v1411
        %v3948 = vadd.f32 %v3930, %v1411
        %v3949 = vadd.f32 %v3931, %v1411
        %v3950 = vadd.f32 %v3932, %v1411
        %v3951 = vadd.f32 %v3933, %v1411
        %v3952 = vadd.f32 %v3934, %v1411
        %s3953 = scalar_lea.vmem %s196, 288 [#allocation5]
        %3954 = vst.msk [vmem:[%s3953] sm:$0xff] %vm273, %v3935
        %3955 = vst.msk [vmem:[%s3953 + $0x8] sm:$0xff] %vm273, %v3936
        %3956 = vst.msk [vmem:[%s3953 + $0x10] sm:$0xff] %vm273, %v3937
        %3957 = vst.msk [vmem:[%s3953 + $0x18] sm:$0xff] %vm273, %v3938
        %3958 = vst.msk [vmem:[%s3953 + $0x20] sm:$0xff] %vm273, %v3939
        %3959 = vst.msk [vmem:[%s3953 + $0x28] sm:$0xff] %vm273, %v3940
        %3960 = vst.msk [vmem:[%s3953 + $0x30] sm:$0xff] %vm273, %v3941
        %3961 = vst.msk [vmem:[%s3953 + $0x38] sm:$0xff] %vm273, %v3942
        %3962 = vst.msk [vmem:[%s3953 + $0x40] sm:$0xff] %vm273, %v3943
        %3963 = vst.msk [vmem:[%s3953 + $0x48] sm:$0xff] %vm273, %v3944
        %3964 = vst.msk [vmem:[%s3953 + $0x50] sm:$0xff] %vm273, %v3945
        %3965 = vst.msk [vmem:[%s3953 + $0x58] sm:$0xff] %vm273, %v3946
        %3966 = vst.msk [vmem:[%s3953 + $0x60] sm:$0xff] %vm273, %v3947
        %3967 = vst.msk [vmem:[%s3953 + $0x68] sm:$0xff] %vm273, %v3948
        %3968 = vst.msk [vmem:[%s3953 + $0x70] sm:$0xff] %vm273, %v3949
        %3969 = vst.msk [vmem:[%s3953 + $0x78] sm:$0xff] %vm273, %v3950
        %3970 = vst.msk [vmem:[%s3953 + $0x80] sm:$0xff] %vm273, %v3951
        %3971 = vst.msk [vmem:[%s3953 + $0x88] sm:$0xff] %vm273, %v3952
        %v3972 = vld [vmem:[%s205 + $0x8] sm:$0xe]
        %v3973 = vld [vmem:[%s205 + $0xc] sm:$0xf]
        %v3974 = vld [vmem:[%s205 + $0x10] sm:$0xf]
        %v3975 = vld [vmem:[%s205 + $0x14] sm:$0xf]
        %v3976 = vld [vmem:[%s205 + $0x18] sm:$0xf]
        %v3977 = vld [vmem:[%s205 + $0x1c] sm:$0xf]
        %v3978 = vld [vmem:[%s205 + $0x20] sm:$0xf]
        %v3979 = vld [vmem:[%s205 + $0x24] sm:$0xf]
        %v3980 = vld [vmem:[%s205 + $0x28] sm:$0xf]
        %v3981 = vld [vmem:[%s205 + $0x2c] sm:$0xf]
        %v3982 = vld [vmem:[%s205 + $0x30] sm:$0xf]
        %v3983 = vld [vmem:[%s205 + $0x34] sm:$0xf]
        %v3984 = vld [vmem:[%s205 + $0x38] sm:$0xf]
        %v3985 = vld [vmem:[%s205 + $0x3c] sm:$0xf]
        %v3986 = vld [vmem:[%s205 + $0x40] sm:$0xf]
        %v3987 = vld [vmem:[%s205 + $0x44] sm:$0xf]
        %v3988 = vld [vmem:[%s205 + $0x48] sm:$0xf]
        %v3989 = vld [vmem:[%s205 + $0x4c] sm:$0xf]
        %v3990 = vld [vmem:[%s205 + $0x50] sm:$0x3]
        %s3991 = scalar_lea.vmem %s1, 24
        %v3992 = vld [vmem:[%s3991] sm:$0x3]
        %v4012 = vunpack.c.l.b16 %v3972
        %v4013 = vunpack.c.l.b16 %v3973
        %v4014 = vunpack.c.l.b16 %v3974
        %v4015 = vunpack.c.l.b16 %v3975
        %v4016 = vunpack.c.l.b16 %v3976
        %v4017 = vunpack.c.l.b16 %v3977
        %v4018 = vunpack.c.l.b16 %v3978
        %v4019 = vunpack.c.l.b16 %v3979
        %v4020 = vunpack.c.l.b16 %v3980
        %v4021 = vunpack.c.l.b16 %v3981
        %v4022 = vunpack.c.l.b16 %v3982
        %v4023 = vunpack.c.l.b16 %v3983
        %v4024 = vunpack.c.l.b16 %v3984
        %v4025 = vunpack.c.l.b16 %v3985
        %v4026 = vunpack.c.l.b16 %v3986
        %v4027 = vunpack.c.l.b16 %v3987
        %v4028 = vunpack.c.l.b16 %v3988
        %v4029 = vunpack.c.l.b16 %v3989
        %v4030 = vunpack.c.l.b16 %v3990
        %v4031 = vpack.c.b16 %v4013, %v4012
        %v4032 = vpack.c.b16 %v4015, %v4014
        %v4033 = vpack.c.b16 %v4017, %v4016
        %v4034 = vpack.c.b16 %v4019, %v4018
        %v4035 = vpack.c.b16 %v4021, %v4020
        %v4036 = vpack.c.b16 %v4023, %v4022
        %v4037 = vpack.c.b16 %v4025, %v4024
        %v4038 = vpack.c.b16 %v4027, %v4026
        %v4039 = vpack.c.b16 %v4029, %v4028
        %v4040 = vpack.c.b16 %v4030, %v4030
        %v4042 = vshrl.u32 %v4031, 16
        %v4044 = vrot.slane %v4042, 1
        %v4045 = vshll.u32 %v4031, 16
        %v4047 = vrot.slane %v4045, 2
        %v4048 = vor.u32 %v4044, %v4047
        %v4050 = vshrl.u32 %v4032, 16
        %v4052 = vrot.slane %v4050, 1
        %v4053 = vshll.u32 %v4032, 16
        %v4055 = vrot.slane %v4053, 2
        %v4056 = vor.u32 %v4052, %v4055
        %v4057 = vsel %vm1110, %v4048, %v4056
        %v4059 = vshrl.u32 %v4033, 16
        %v4061 = vrot.slane %v4059, 1
        %v4062 = vshll.u32 %v4033, 16
        %v4064 = vrot.slane %v4062, 2
        %v4065 = vor.u32 %v4061, %v4064
        %v4066 = vsel %vm1110, %v4056, %v4065
        %v4068 = vshrl.u32 %v4034, 16
        %v4070 = vrot.slane %v4068, 1
        %v4071 = vshll.u32 %v4034, 16
        %v4073 = vrot.slane %v4071, 2
        %v4074 = vor.u32 %v4070, %v4073
        %v4075 = vsel %vm1110, %v4065, %v4074
        %v4077 = vshrl.u32 %v4035, 16
        %v4079 = vrot.slane %v4077, 1
        %v4080 = vshll.u32 %v4035, 16
        %v4082 = vrot.slane %v4080, 2
        %v4083 = vor.u32 %v4079, %v4082
        %v4084 = vsel %vm1110, %v4074, %v4083
        %v4086 = vshrl.u32 %v4036, 16
        %v4088 = vrot.slane %v4086, 1
        %v4089 = vshll.u32 %v4036, 16
        %v4091 = vrot.slane %v4089, 2
        %v4092 = vor.u32 %v4088, %v4091
        %v4093 = vsel %vm1110, %v4083, %v4092
        %v4095 = vshrl.u32 %v4037, 16
        %v4097 = vrot.slane %v4095, 1
        %v4098 = vshll.u32 %v4037, 16
        %v4100 = vrot.slane %v4098, 2
        %v4101 = vor.u32 %v4097, %v4100
        %v4102 = vsel %vm1110, %v4092, %v4101
        %v4104 = vshrl.u32 %v4038, 16
        %v4106 = vrot.slane %v4104, 1
        %v4107 = vshll.u32 %v4038, 16
        %v4109 = vrot.slane %v4107, 2
        %v4110 = vor.u32 %v4106, %v4109
        %v4111 = vsel %vm1110, %v4101, %v4110
        %v4113 = vshrl.u32 %v4039, 16
        %v4115 = vrot.slane %v4113, 1
        %v4116 = vshll.u32 %v4039, 16
        %v4118 = vrot.slane %v4116, 2
        %v4119 = vor.u32 %v4115, %v4118
        %v4120 = vsel %vm1110, %v4110, %v4119
        %v4122 = vshrl.u32 %v4040, 16
        %v4124 = vrot.slane %v4122, 1
        %v4125 = vshll.u32 %v4040, 16
        %v4127 = vrot.slane %v4125, 2
        %v4128 = vor.u32 %v4124, %v4127
        %v4129 = vsel %vm1110, %v4119, %v4128
        %v4131 = vsel %vm273, %v4057, 0
        %v4134 = vsel %vm273, %v4066, 0
        %v4137 = vsel %vm273, %v4075, 0
        %v4140 = vsel %vm273, %v4084, 0
        %v4143 = vsel %vm273, %v4093, 0
        %v4146 = vsel %vm273, %v4102, 0
        %v4149 = vsel %vm273, %v4111, 0
        %v4152 = vsel %vm273, %v4120, 0
        %v4155 = vsel %vm273, %v4129, 0
        %v4158 = vsel %vm301, %v3992, 0
        %4160 = vmatprep.subr.bf16.mxu0 0
        %4161 = vmatpush1.bf16.msra.mxu0 %v4158
        %4162 = vmatprep.subr.bf16.mxu0 0
        %4163 = vmatpush1.bf16.msra.mxu0 0
        %4164 = vmatprep.subr.bf16.mxu0 0
        %4165 = vmatpush1.bf16.msra.mxu0 0
        %4166 = vmatprep.subr.bf16.mxu0 0
        %4167 = vmatpush1.bf16.msra.mxu0 0
        %4168 = vmatprep.subr.bf16.mxu0 0
        %4169 = vmatpush1.bf16.msra.mxu0 0
        %4170 = vmatprep.subr.bf16.mxu0 0
        %4171 = vmatpush1.bf16.msra.mxu0 0
        %4172 = vmatprep.subr.bf16.mxu0 0
        %4173 = vmatpush1.bf16.msra.mxu0 0
        %4174 = vmatprep.subr.bf16.mxu0 0
        %4175 = vmatpush1.bf16.msra.mxu0 0
        %4176 = vmatprep.subr.bf16.mxu0 0
        %4177 = vmatpush1.bf16.msra.mxu0 0
        %4178 = vmatprep.subr.bf16.mxu0 0
        %4179 = vmatpush1.bf16.msra.mxu0 0
        %4180 = vmatprep.subr.bf16.mxu0 0
        %4181 = vmatpush1.bf16.msra.mxu0 0
        %4182 = vmatprep.subr.bf16.mxu0 0
        %4183 = vmatpush1.bf16.msra.mxu0 0
        %4184 = vmatprep.subr.bf16.mxu0 0
        %4185 = vmatpush1.bf16.msra.mxu0 0
        %4186 = vmatprep.subr.bf16.mxu0 0
        %4187 = vmatpush1.bf16.msra.mxu0 0
        %4188 = vmatprep.subr.bf16.mxu0 0
        %4189 = vmatpush1.bf16.msra.mxu0 0
        %4190 = vmatprep.subr.bf16.mxu0 0
        %4191 = vmatpush1.bf16.msra.mxu0 0
        %4192 = vmatprep.mubr.bf16.mxu0 0
        %4193 = vmatmul.mubr.bf16.gmra.mrb[0].mxu0 %v4131
        %v4194 = vpop.f32.mrb[0].mxu0
        %v4195 = vadd.f32 0.0, %v4194
        %v4196 = vpop.f32.mrb[0].mxu0
        %v4197 = vpop.f32.mrb[0].mxu0
        %v4198 = vadd.f32 0.0, %v4197
        %v4199 = vpop.f32.mrb[0].mxu0
        %4200 = vmatprep.mubr.bf16.mxu0 0
        %4201 = vmatmul.mubr.bf16.gmra.mrb[0].mxu0 %v4134
        %v4202 = vpop.f32.mrb[0].mxu0
        %v4203 = vadd.f32 0.0, %v4202
        %v4204 = vpop.f32.mrb[0].mxu0
        %v4205 = vpop.f32.mrb[0].mxu0
        %v4206 = vadd.f32 0.0, %v4205
        %v4207 = vpop.f32.mrb[0].mxu0
        %4208 = vmatprep.mubr.bf16.mxu0 0
        %4209 = vmatmul.mubr.bf16.gmra.mrb[0].mxu0 %v4137
        %v4210 = vpop.f32.mrb[0].mxu0
        %v4211 = vadd.f32 0.0, %v4210
        %v4212 = vpop.f32.mrb[0].mxu0
        %v4213 = vpop.f32.mrb[0].mxu0
        %v4214 = vadd.f32 0.0, %v4213
        %v4215 = vpop.f32.mrb[0].mxu0
        %4216 = vmatprep.mubr.bf16.mxu0 0
        %4217 = vmatmul.mubr.bf16.gmra.mrb[0].mxu0 %v4140
        %v4218 = vpop.f32.mrb[0].mxu0
        %v4219 = vadd.f32 0.0, %v4218
        %v4220 = vpop.f32.mrb[0].mxu0
        %v4221 = vpop.f32.mrb[0].mxu0
        %v4222 = vadd.f32 0.0, %v4221
        %v4223 = vpop.f32.mrb[0].mxu0
        %4224 = vmatprep.mubr.bf16.mxu0 0
        %4225 = vmatmul.mubr.bf16.gmra.mrb[0].mxu0 %v4143
        %v4226 = vpop.f32.mrb[0].mxu0
        %v4227 = vadd.f32 0.0, %v4226
        %v4228 = vpop.f32.mrb[0].mxu0
        %v4229 = vpop.f32.mrb[0].mxu0
        %v4230 = vadd.f32 0.0, %v4229
        %v4231 = vpop.f32.mrb[0].mxu0
        %4232 = vmatprep.mubr.bf16.mxu0 0
        %4233 = vmatmul.mubr.bf16.gmra.mrb[0].mxu0 %v4146
        %v4234 = vpop.f32.mrb[0].mxu0
        %v4235 = vadd.f32 0.0, %v4234
        %v4236 = vpop.f32.mrb[0].mxu0
        %v4237 = vpop.f32.mrb[0].mxu0
        %v4238 = vadd.f32 0.0, %v4237
        %v4239 = vpop.f32.mrb[0].mxu0
        %4240 = vmatprep.mubr.bf16.mxu0 0
        %4241 = vmatmul.mubr.bf16.gmra.mrb[0].mxu0 %v4149
        %v4242 = vpop.f32.mrb[0].mxu0
        %v4243 = vadd.f32 0.0, %v4242
        %v4244 = vpop.f32.mrb[0].mxu0
        %v4245 = vpop.f32.mrb[0].mxu0
        %v4246 = vadd.f32 0.0, %v4245
        %v4247 = vpop.f32.mrb[0].mxu0
        %4248 = vmatprep.mubr.bf16.mxu0 0
        %4249 = vmatmul.mubr.bf16.gmra.mrb[0].mxu0 %v4152
        %v4250 = vpop.f32.mrb[0].mxu0
        %v4251 = vadd.f32 0.0, %v4250
        %v4252 = vpop.f32.mrb[0].mxu0
        %v4253 = vpop.f32.mrb[0].mxu0
        %v4254 = vadd.f32 0.0, %v4253
        %v4255 = vpop.f32.mrb[0].mxu0
        %4256 = vmatprep.mubr.bf16.mxu0 0
        %4257 = vmatmul.mubr.bf16.gmra.mrb[0].mxu0 %v4155
        %v4258 = vpop.f32.mrb[0].mxu0
        %v4259 = vadd.f32 0.0, %v4258
        %v4260 = vpop.f32.mrb[0].mxu0
        %v4261 = vpop.f32.mrb[0].mxu0
        %v4262 = vadd.f32 0.0, %v4261
        %v4263 = vpop.f32.mrb[0].mxu0
        %4264 = vdwg.mxu0
        %4265 = vst.msk [vmem:[#allocation2] sm:$0xff] %vm273, %v4195
        %4266 = vst.msk [vmem:[#allocation2 + $0x8] sm:$0xff] %vm273, %v4198
        %4267 = vst.msk [vmem:[#allocation2 + $0x10] sm:$0xff] %vm273, %v4203
        %4268 = vst.msk [vmem:[#allocation2 + $0x18] sm:$0xff] %vm273, %v4206
        %4269 = vst.msk [vmem:[#allocation2 + $0x20] sm:$0xff] %vm273, %v4211
        %4270 = vst.msk [vmem:[#allocation2 + $0x28] sm:$0xff] %vm273, %v4214
        %4271 = vst.msk [vmem:[#allocation2 + $0x30] sm:$0xff] %vm273, %v4219
        %4272 = vst.msk [vmem:[#allocation2 + $0x38] sm:$0xff] %vm273, %v4222
        %4273 = vst.msk [vmem:[#allocation2 + $0x40] sm:$0xff] %vm273, %v4227
        %4274 = vst.msk [vmem:[#allocation2 + $0x48] sm:$0xff] %vm273, %v4230
        %4275 = vst.msk [vmem:[#allocation2 + $0x50] sm:$0xff] %vm273, %v4235
        %4276 = vst.msk [vmem:[#allocation2 + $0x58] sm:$0xff] %vm273, %v4238
        %4277 = vst.msk [vmem:[#allocation2 + $0x60] sm:$0xff] %vm273, %v4243
        %4278 = vst.msk [vmem:[#allocation2 + $0x68] sm:$0xff] %vm273, %v4246
        %4279 = vst.msk [vmem:[#allocation2 + $0x70] sm:$0xff] %vm273, %v4251
        %4280 = vst.msk [vmem:[#allocation2 + $0x78] sm:$0xff] %vm273, %v4254
        %4281 = vst.msk [vmem:[#allocation2 + $0x80] sm:$0xff] %vm273, %v4259
        %4282 = vst.msk [vmem:[#allocation2 + $0x88] sm:$0xff] %vm273, %v4262
        %v4283 = vld [vmem:[%s205 + $0x8] sm:$0xc]
        %v4284 = vld [vmem:[%s205 + $0xc] sm:$0xf]
        %v4285 = vld [vmem:[%s205 + $0x10] sm:$0xf]
        %v4286 = vld [vmem:[%s205 + $0x14] sm:$0xf]
        %v4287 = vld [vmem:[%s205 + $0x18] sm:$0xf]
        %v4288 = vld [vmem:[%s205 + $0x1c] sm:$0xf]
        %v4289 = vld [vmem:[%s205 + $0x20] sm:$0xf]
        %v4290 = vld [vmem:[%s205 + $0x24] sm:$0xf]
        %v4291 = vld [vmem:[%s205 + $0x28] sm:$0xf]
        %v4292 = vld [vmem:[%s205 + $0x2c] sm:$0xf]
        %v4293 = vld [vmem:[%s205 + $0x30] sm:$0xf]
        %v4294 = vld [vmem:[%s205 + $0x34] sm:$0xf]
        %v4295 = vld [vmem:[%s205 + $0x38] sm:$0xf]
        %v4296 = vld [vmem:[%s205 + $0x3c] sm:$0xf]
        %v4297 = vld [vmem:[%s205 + $0x40] sm:$0xf]
        %v4298 = vld [vmem:[%s205 + $0x44] sm:$0xf]
        %v4299 = vld [vmem:[%s205 + $0x48] sm:$0xf]
        %v4300 = vld [vmem:[%s205 + $0x4c] sm:$0xf]
        %v4301 = vld [vmem:[%s205 + $0x50] sm:$0x3]
        %s4302 = scalar_lea.vmem %s1, 26
        %v4303 = vld [vmem:[%s4302] sm:$0x3]
        %v4323 = vunpack.c.l.b16 %v4283
        %v4324 = vunpack.c.l.b16 %v4284
        %v4325 = vunpack.c.l.b16 %v4285
        %v4326 = vunpack.c.l.b16 %v4286
        %v4327 = vunpack.c.l.b16 %v4287
        %v4328 = vunpack.c.l.b16 %v4288
        %v4329 = vunpack.c.l.b16 %v4289
        %v4330 = vunpack.c.l.b16 %v4290
        %v4331 = vunpack.c.l.b16 %v4291
        %v4332 = vunpack.c.l.b16 %v4292
        %v4333 = vunpack.c.l.b16 %v4293
        %v4334 = vunpack.c.l.b16 %v4294
        %v4335 = vunpack.c.l.b16 %v4295
        %v4336 = vunpack.c.l.b16 %v4296
        %v4337 = vunpack.c.l.b16 %v4297
        %v4338 = vunpack.c.l.b16 %v4298
        %v4339 = vunpack.c.l.b16 %v4299
        %v4340 = vunpack.c.l.b16 %v4300
        %v4341 = vunpack.c.l.b16 %v4301
        %v4342 = vpack.c.b16 %v4324, %v4323
        %v4343 = vpack.c.b16 %v4326, %v4325
        %v4344 = vpack.c.b16 %v4328, %v4327
        %v4345 = vpack.c.b16 %v4330, %v4329
        %v4346 = vpack.c.b16 %v4332, %v4331
        %v4347 = vpack.c.b16 %v4334, %v4333
        %v4348 = vpack.c.b16 %v4336, %v4335
        %v4349 = vpack.c.b16 %v4338, %v4337
        %v4350 = vpack.c.b16 %v4340, %v4339
        %v4351 = vpack.c.b16 %v4341, %v4341
        %v4352 = vrot.slane %v4342, 2
        %v4353 = vrot.slane %v4343, 2
        %v4354 = vsel %vm2440, %v4352, %v4353
        %v4355 = vrot.slane %v4344, 2
        %v4356 = vsel %vm2440, %v4353, %v4355
        %v4357 = vrot.slane %v4345, 2
        %v4358 = vsel %vm2440, %v4355, %v4357
        %v4359 = vrot.slane %v4346, 2
        %v4360 = vsel %vm2440, %v4357, %v4359
        %v4361 = vrot.slane %v4347, 2
        %v4362 = vsel %vm2440, %v4359, %v4361
        %v4363 = vrot.slane %v4348, 2
        %v4364 = vsel %vm2440, %v4361, %v4363
        %v4365 = vrot.slane %v4349, 2
        %v4366 = vsel %vm2440, %v4363, %v4365
        %v4367 = vrot.slane %v4350, 2
        %v4368 = vsel %vm2440, %v4365, %v4367
        %v4369 = vrot.slane %v4351, 2
        %v4370 = vsel %vm2440, %v4367, %v4369
        %v4372 = vsel %vm273, %v4354, 0
        %v4375 = vsel %vm273, %v4356, 0
        %v4378 = vsel %vm273, %v4358, 0
        %v4381 = vsel %vm273, %v4360, 0
        %v4384 = vsel %vm273, %v4362, 0
        %v4387 = vsel %vm273, %v4364, 0
        %v4390 = vsel %vm273, %v4366, 0
        %v4393 = vsel %vm273, %v4368, 0
        %v4396 = vsel %vm273, %v4370, 0
        %v4399 = vsel %vm301, %v4303, 0
        %4401 = vmatprep.subr.bf16.mxu0 0
        %4402 = vmatpush1.bf16.msra.mxu0 %v4399
        %4403 = vmatprep.subr.bf16.mxu0 0
        %4404 = vmatpush1.bf16.msra.mxu0 0
        %4405 = vmatprep.subr.bf16.mxu0 0
        %4406 = vmatpush1.bf16.msra.mxu0 0
        %4407 = vmatprep.subr.bf16.mxu0 0
        %4408 = vmatpush1.bf16.msra.mxu0 0
        %4409 = vmatprep.subr.bf16.mxu0 0
        %4410 = vmatpush1.bf16.msra.mxu0 0
        %4411 = vmatprep.subr.bf16.mxu0 0
        %4412 = vmatpush1.bf16.msra.mxu0 0
        %4413 = vmatprep.subr.bf16.mxu0 0
        %4414 = vmatpush1.bf16.msra.mxu0 0
        %4415 = vmatprep.subr.bf16.mxu0 0
        %4416 = vmatpush1.bf16.msra.mxu0 0
        %4417 = vmatprep.subr.bf16.mxu0 0
        %4418 = vmatpush1.bf16.msra.mxu0 0
        %4419 = vmatprep.subr.bf16.mxu0 0
        %4420 = vmatpush1.bf16.msra.mxu0 0
        %4421 = vmatprep.subr.bf16.mxu0 0
        %4422 = vmatpush1.bf16.msra.mxu0 0
        %4423 = vmatprep.subr.bf16.mxu0 0
        %4424 = vmatpush1.bf16.msra.mxu0 0
        %4425 = vmatprep.subr.bf16.mxu0 0
        %4426 = vmatpush1.bf16.msra.mxu0 0
        %4427 = vmatprep.subr.bf16.mxu0 0
        %4428 = vmatpush1.bf16.msra.mxu0 0
        %4429 = vmatprep.subr.bf16.mxu0 0
        %4430 = vmatpush1.bf16.msra.mxu0 0
        %4431 = vmatprep.subr.bf16.mxu0 0
        %4432 = vmatpush1.bf16.msra.mxu0 0
        %4433 = vmatprep.mubr.bf16.mxu0 0
        %4434 = vmatmul.mubr.bf16.gmra.mrb[0].mxu0 %v4372
        %v4435 = vpop.f32.mrb[0].mxu0
        %v4436 = vadd.f32 0.0, %v4435
        %v4437 = vpop.f32.mrb[0].mxu0
        %v4438 = vpop.f32.mrb[0].mxu0
        %v4439 = vadd.f32 0.0, %v4438
        %v4440 = vpop.f32.mrb[0].mxu0
        %4441 = vmatprep.mubr.bf16.mxu0 0
        %4442 = vmatmul.mubr.bf16.gmra.mrb[0].mxu0 %v4375
        %v4443 = vpop.f32.mrb[0].mxu0
        %v4444 = vadd.f32 0.0, %v4443
        %v4445 = vpop.f32.mrb[0].mxu0
        %v4446 = vpop.f32.mrb[0].mxu0
        %v4447 = vadd.f32 0.0, %v4446
        %v4448 = vpop.f32.mrb[0].mxu0
        %4449 = vmatprep.mubr.bf16.mxu0 0
        %4450 = vmatmul.mubr.bf16.gmra.mrb[0].mxu0 %v4378
        %v4451 = vpop.f32.mrb[0].mxu0
        %v4452 = vadd.f32 0.0, %v4451
        %v4453 = vpop.f32.mrb[0].mxu0
        %v4454 = vpop.f32.mrb[0].mxu0
        %v4455 = vadd.f32 0.0, %v4454
        %v4456 = vpop.f32.mrb[0].mxu0
        %4457 = vmatprep.mubr.bf16.mxu0 0
        %4458 = vmatmul.mubr.bf16.gmra.mrb[0].mxu0 %v4381
        %v4459 = vpop.f32.mrb[0].mxu0
        %v4460 = vadd.f32 0.0, %v4459
        %v4461 = vpop.f32.mrb[0].mxu0
        %v4462 = vpop.f32.mrb[0].mxu0
        %v4463 = vadd.f32 0.0, %v4462
        %v4464 = vpop.f32.mrb[0].mxu0
        %4465 = vmatprep.mubr.bf16.mxu0 0
        %4466 = vmatmul.mubr.bf16.gmra.mrb[0].mxu0 %v4384
        %v4467 = vpop.f32.mrb[0].mxu0
        %v4468 = vadd.f32 0.0, %v4467
        %v4469 = vpop.f32.mrb[0].mxu0
        %v4470 = vpop.f32.mrb[0].mxu0
        %v4471 = vadd.f32 0.0, %v4470
        %v4472 = vpop.f32.mrb[0].mxu0
        %4473 = vmatprep.mubr.bf16.mxu0 0
        %4474 = vmatmul.mubr.bf16.gmra.mrb[0].mxu0 %v4387
        %v4475 = vpop.f32.mrb[0].mxu0
        %v4476 = vadd.f32 0.0, %v4475
        %v4477 = vpop.f32.mrb[0].mxu0
        %v4478 = vpop.f32.mrb[0].mxu0
        %v4479 = vadd.f32 0.0, %v4478
        %v4480 = vpop.f32.mrb[0].mxu0
        %4481 = vmatprep.mubr.bf16.mxu0 0
        %4482 = vmatmul.mubr.bf16.gmra.mrb[0].mxu0 %v4390
        %v4483 = vpop.f32.mrb[0].mxu0
        %v4484 = vadd.f32 0.0, %v4483
        %v4485 = vpop.f32.mrb[0].mxu0
        %v4486 = vpop.f32.mrb[0].mxu0
        %v4487 = vadd.f32 0.0, %v4486
        %v4488 = vpop.f32.mrb[0].mxu0
        %4489 = vmatprep.mubr.bf16.mxu0 0
        %4490 = vmatmul.mubr.bf16.gmra.mrb[0].mxu0 %v4393
        %v4491 = vpop.f32.mrb[0].mxu0
        %v4492 = vadd.f32 0.0, %v4491
        %v4493 = vpop.f32.mrb[0].mxu0
        %v4494 = vpop.f32.mrb[0].mxu0
        %v4495 = vadd.f32 0.0, %v4494
        %v4496 = vpop.f32.mrb[0].mxu0
        %4497 = vmatprep.mubr.bf16.mxu0 0
        %4498 = vmatmul.mubr.bf16.gmra.mrb[0].mxu0 %v4396
        %v4499 = vpop.f32.mrb[0].mxu0
        %v4500 = vadd.f32 0.0, %v4499
        %v4501 = vpop.f32.mrb[0].mxu0
        %v4502 = vpop.f32.mrb[0].mxu0
        %v4503 = vadd.f32 0.0, %v4502
        %v4504 = vpop.f32.mrb[0].mxu0
        %4505 = vdwg.mxu0
        %v4506 = vld [vmem:[#allocation2] sm:$0xff]
        %v4507 = vld [vmem:[#allocation2 + $0x8] sm:$0xff]
        %v4508 = vld [vmem:[#allocation2 + $0x10] sm:$0xff]
        %v4509 = vld [vmem:[#allocation2 + $0x18] sm:$0xff]
        %v4510 = vld [vmem:[#allocation2 + $0x20] sm:$0xff]
        %v4511 = vld [vmem:[#allocation2 + $0x28] sm:$0xff]
        %v4512 = vld [vmem:[#allocation2 + $0x30] sm:$0xff]
        %v4513 = vld [vmem:[#allocation2 + $0x38] sm:$0xff]
        %v4514 = vld [vmem:[#allocation2 + $0x40] sm:$0xff]
        %v4515 = vld [vmem:[#allocation2 + $0x48] sm:$0xff]
        %v4516 = vld [vmem:[#allocation2 + $0x50] sm:$0xff]
        %v4517 = vld [vmem:[#allocation2 + $0x58] sm:$0xff]
        %v4518 = vld [vmem:[#allocation2 + $0x60] sm:$0xff]
        %v4519 = vld [vmem:[#allocation2 + $0x68] sm:$0xff]
        %v4520 = vld [vmem:[#allocation2 + $0x70] sm:$0xff]
        %v4521 = vld [vmem:[#allocation2 + $0x78] sm:$0xff]
        %v4522 = vld [vmem:[#allocation2 + $0x80] sm:$0xff]
        %v4523 = vld [vmem:[#allocation2 + $0x88] sm:$0xff]
        %v4524 = vadd.f32 %v4506, %v4436
        %v4525 = vadd.f32 %v4507, %v4439
        %v4526 = vadd.f32 %v4508, %v4444
        %v4527 = vadd.f32 %v4509, %v4447
        %v4528 = vadd.f32 %v4510, %v4452
        %v4529 = vadd.f32 %v4511, %v4455
        %v4530 = vadd.f32 %v4512, %v4460
        %v4531 = vadd.f32 %v4513, %v4463
        %v4532 = vadd.f32 %v4514, %v4468
        %v4533 = vadd.f32 %v4515, %v4471
        %v4534 = vadd.f32 %v4516, %v4476
        %v4535 = vadd.f32 %v4517, %v4479
        %v4536 = vadd.f32 %v4518, %v4484
        %v4537 = vadd.f32 %v4519, %v4487
        %v4538 = vadd.f32 %v4520, %v4492
        %v4539 = vadd.f32 %v4521, %v4495
        %v4540 = vadd.f32 %v4522, %v4500
        %v4541 = vadd.f32 %v4523, %v4503
        %4542 = vst.msk [vmem:[#allocation2] sm:$0xff] %vm273, %v4524
        %4543 = vst.msk [vmem:[#allocation2 + $0x8] sm:$0xff] %vm273, %v4525
        %4544 = vst.msk [vmem:[#allocation2 + $0x10] sm:$0xff] %vm273, %v4526
        %4545 = vst.msk [vmem:[#allocation2 + $0x18] sm:$0xff] %vm273, %v4527
        %4546 = vst.msk [vmem:[#allocation2 + $0x20] sm:$0xff] %vm273, %v4528
        %4547 = vst.msk [vmem:[#allocation2 + $0x28] sm:$0xff] %vm273, %v4529
        %4548 = vst.msk [vmem:[#allocation2 + $0x30] sm:$0xff] %vm273, %v4530
        %4549 = vst.msk [vmem:[#allocation2 + $0x38] sm:$0xff] %vm273, %v4531
        %4550 = vst.msk [vmem:[#allocation2 + $0x40] sm:$0xff] %vm273, %v4532
        %4551 = vst.msk [vmem:[#allocation2 + $0x48] sm:$0xff] %vm273, %v4533
        %4552 = vst.msk [vmem:[#allocation2 + $0x50] sm:$0xff] %vm273, %v4534
        %4553 = vst.msk [vmem:[#allocation2 + $0x58] sm:$0xff] %vm273, %v4535
        %4554 = vst.msk [vmem:[#allocation2 + $0x60] sm:$0xff] %vm273, %v4536
        %4555 = vst.msk [vmem:[#allocation2 + $0x68] sm:$0xff] %vm273, %v4537
        %4556 = vst.msk [vmem:[#allocation2 + $0x70] sm:$0xff] %vm273, %v4538
        %4557 = vst.msk [vmem:[#allocation2 + $0x78] sm:$0xff] %vm273, %v4539
        %4558 = vst.msk [vmem:[#allocation2 + $0x80] sm:$0xff] %vm273, %v4540
        %4559 = vst.msk [vmem:[#allocation2 + $0x88] sm:$0xff] %vm273, %v4541
        %v4560 = vld [vmem:[%s205 + $0x10] sm:$0xc]
        %v4561 = vld [vmem:[%s205 + $0x14] sm:$0xf]
        %v4562 = vld [vmem:[%s205 + $0x18] sm:$0xf]
        %v4563 = vld [vmem:[%s205 + $0x1c] sm:$0xf]
        %v4564 = vld [vmem:[%s205 + $0x20] sm:$0xf]
        %v4565 = vld [vmem:[%s205 + $0x24] sm:$0xf]
        %v4566 = vld [vmem:[%s205 + $0x28] sm:$0xf]
        %v4567 = vld [vmem:[%s205 + $0x2c] sm:$0xf]
        %v4568 = vld [vmem:[%s205 + $0x30] sm:$0xf]
        %v4569 = vld [vmem:[%s205 + $0x34] sm:$0xf]
        %v4570 = vld [vmem:[%s205 + $0x38] sm:$0xf]
        %v4571 = vld [vmem:[%s205 + $0x3c] sm:$0xf]
        %v4572 = vld [vmem:[%s205 + $0x40] sm:$0xf]
        %v4573 = vld [vmem:[%s205 + $0x44] sm:$0xf]
        %v4574 = vld [vmem:[%s205 + $0x48] sm:$0xf]
        %v4575 = vld [vmem:[%s205 + $0x4c] sm:$0xf]
        %v4576 = vld [vmem:[%s205 + $0x50] sm:$0xf]
        %v4577 = vld [vmem:[%s205 + $0x54] sm:$0xf]
        %v4578 = vld [vmem:[%s205 + $0x58] sm:$0x7]
        %s4579 = scalar_lea.vmem %s1, 28
        %v4580 = vld [vmem:[%s4579] sm:$0x3]
        %v4600 = vunpack.c.l.b16 %v4560
        %v4601 = vunpack.c.l.b16 %v4561
        %v4602 = vunpack.c.l.b16 %v4562
        %v4603 = vunpack.c.l.b16 %v4563
        %v4604 = vunpack.c.l.b16 %v4564
        %v4605 = vunpack.c.l.b16 %v4565
        %v4606 = vunpack.c.l.b16 %v4566
        %v4607 = vunpack.c.l.b16 %v4567
        %v4608 = vunpack.c.l.b16 %v4568
        %v4609 = vunpack.c.l.b16 %v4569
        %v4610 = vunpack.c.l.b16 %v4570
        %v4611 = vunpack.c.l.b16 %v4571
        %v4612 = vunpack.c.l.b16 %v4572
        %v4613 = vunpack.c.l.b16 %v4573
        %v4614 = vunpack.c.l.b16 %v4574
        %v4615 = vunpack.c.l.b16 %v4575
        %v4616 = vunpack.c.l.b16 %v4576
        %v4617 = vunpack.c.l.b16 %v4577
        %v4618 = vunpack.c.l.b16 %v4578
        %v4619 = vpack.c.b16 %v4601, %v4600
        %v4620 = vpack.c.b16 %v4603, %v4602
        %v4621 = vpack.c.b16 %v4605, %v4604
        %v4622 = vpack.c.b16 %v4607, %v4606
        %v4623 = vpack.c.b16 %v4609, %v4608
        %v4624 = vpack.c.b16 %v4611, %v4610
        %v4625 = vpack.c.b16 %v4613, %v4612
        %v4626 = vpack.c.b16 %v4615, %v4614
        %v4627 = vpack.c.b16 %v4617, %v4616
        %v4628 = vpack.c.b16 %v4618, %v4618
        %v4630 = vshrl.u32 %v4619, 16
        %v4632 = vrot.slane %v4630, 2
        %v4633 = vshll.u32 %v4619, 16
        %v4635 = vrot.slane %v4633, 3
        %v4636 = vor.u32 %v4632, %v4635
        %v4638 = vshrl.u32 %v4620, 16
        %v4640 = vrot.slane %v4638, 2
        %v4641 = vshll.u32 %v4620, 16
        %v4643 = vrot.slane %v4641, 3
        %v4644 = vor.u32 %v4640, %v4643
        %v4645 = vsel %vm3638, %v4636, %v4644
        %v4647 = vshrl.u32 %v4621, 16
        %v4649 = vrot.slane %v4647, 2
        %v4650 = vshll.u32 %v4621, 16
        %v4652 = vrot.slane %v4650, 3
        %v4653 = vor.u32 %v4649, %v4652
        %v4654 = vsel %vm3638, %v4644, %v4653
        %v4656 = vshrl.u32 %v4622, 16
        %v4658 = vrot.slane %v4656, 2
        %v4659 = vshll.u32 %v4622, 16
        %v4661 = vrot.slane %v4659, 3
        %v4662 = vor.u32 %v4658, %v4661
        %v4663 = vsel %vm3638, %v4653, %v4662
        %v4665 = vshrl.u32 %v4623, 16
        %v4667 = vrot.slane %v4665, 2
        %v4668 = vshll.u32 %v4623, 16
        %v4670 = vrot.slane %v4668, 3
        %v4671 = vor.u32 %v4667, %v4670
        %v4672 = vsel %vm3638, %v4662, %v4671
        %v4674 = vshrl.u32 %v4624, 16
        %v4676 = vrot.slane %v4674, 2
        %v4677 = vshll.u32 %v4624, 16
        %v4679 = vrot.slane %v4677, 3
        %v4680 = vor.u32 %v4676, %v4679
        %v4681 = vsel %vm3638, %v4671, %v4680
        %v4683 = vshrl.u32 %v4625, 16
        %v4685 = vrot.slane %v4683, 2
        %v4686 = vshll.u32 %v4625, 16
        %v4688 = vrot.slane %v4686, 3
        %v4689 = vor.u32 %v4685, %v4688
        %v4690 = vsel %vm3638, %v4680, %v4689
        %v4692 = vshrl.u32 %v4626, 16
        %v4694 = vrot.slane %v4692, 2
        %v4695 = vshll.u32 %v4626, 16
        %v4697 = vrot.slane %v4695, 3
        %v4698 = vor.u32 %v4694, %v4697
        %v4699 = vsel %vm3638, %v4689, %v4698
        %v4701 = vshrl.u32 %v4627, 16
        %v4703 = vrot.slane %v4701, 2
        %v4704 = vshll.u32 %v4627, 16
        %v4706 = vrot.slane %v4704, 3
        %v4707 = vor.u32 %v4703, %v4706
        %v4708 = vsel %vm3638, %v4698, %v4707
        %v4710 = vshrl.u32 %v4628, 16
        %v4712 = vrot.slane %v4710, 2
        %v4713 = vshll.u32 %v4628, 16
        %v4715 = vrot.slane %v4713, 3
        %v4716 = vor.u32 %v4712, %v4715
        %v4717 = vsel %vm3638, %v4707, %v4716
        %v4719 = vsel %vm273, %v4645, 0
        %v4722 = vsel %vm273, %v4654, 0
        %v4725 = vsel %vm273, %v4663, 0
        %v4728 = vsel %vm273, %v4672, 0
        %v4731 = vsel %vm273, %v4681, 0
        %v4734 = vsel %vm273, %v4690, 0
        %v4737 = vsel %vm273, %v4699, 0
        %v4740 = vsel %vm273, %v4708, 0
        %v4743 = vsel %vm273, %v4717, 0
        %v4746 = vsel %vm301, %v4580, 0
        %4748 = vmatprep.subr.bf16.mxu0 0
        %4749 = vmatpush1.bf16.msra.mxu0 %v4746
        %4750 = vmatprep.subr.bf16.mxu0 0
        %4751 = vmatpush1.bf16.msra.mxu0 0
        %4752 = vmatprep.subr.bf16.mxu0 0
        %4753 = vmatpush1.bf16.msra.mxu0 0
        %4754 = vmatprep.subr.bf16.mxu0 0
        %4755 = vmatpush1.bf16.msra.mxu0 0
        %4756 = vmatprep.subr.bf16.mxu0 0
        %4757 = vmatpush1.bf16.msra.mxu0 0
        %4758 = vmatprep.subr.bf16.mxu0 0
        %4759 = vmatpush1.bf16.msra.mxu0 0
        %4760 = vmatprep.subr.bf16.mxu0 0
        %4761 = vmatpush1.bf16.msra.mxu0 0
        %4762 = vmatprep.subr.bf16.mxu0 0
        %4763 = vmatpush1.bf16.msra.mxu0 0
        %4764 = vmatprep.subr.bf16.mxu0 0
        %4765 = vmatpush1.bf16.msra.mxu0 0
        %4766 = vmatprep.subr.bf16.mxu0 0
        %4767 = vmatpush1.bf16.msra.mxu0 0
        %4768 = vmatprep.subr.bf16.mxu0 0
        %4769 = vmatpush1.bf16.msra.mxu0 0
        %4770 = vmatprep.subr.bf16.mxu0 0
        %4771 = vmatpush1.bf16.msra.mxu0 0
        %4772 = vmatprep.subr.bf16.mxu0 0
        %4773 = vmatpush1.bf16.msra.mxu0 0
        %4774 = vmatprep.subr.bf16.mxu0 0
        %4775 = vmatpush1.bf16.msra.mxu0 0
        %4776 = vmatprep.subr.bf16.mxu0 0
        %4777 = vmatpush1.bf16.msra.mxu0 0
        %4778 = vmatprep.subr.bf16.mxu0 0
        %4779 = vmatpush1.bf16.msra.mxu0 0
        %4780 = vmatprep.mubr.bf16.mxu0 0
        %4781 = vmatmul.mubr.bf16.gmra.mrb[0].mxu0 %v4719
        %v4782 = vpop.f32.mrb[0].mxu0
        %v4783 = vadd.f32 0.0, %v4782
        %v4784 = vpop.f32.mrb[0].mxu0
        %v4785 = vpop.f32.mrb[0].mxu0
        %v4786 = vadd.f32 0.0, %v4785
        %v4787 = vpop.f32.mrb[0].mxu0
        %4788 = vmatprep.mubr.bf16.mxu0 0
        %4789 = vmatmul.mubr.bf16.gmra.mrb[0].mxu0 %v4722
        %v4790 = vpop.f32.mrb[0].mxu0
        %v4791 = vadd.f32 0.0, %v4790
        %v4792 = vpop.f32.mrb[0].mxu0
        %v4793 = vpop.f32.mrb[0].mxu0
        %v4794 = vadd.f32 0.0, %v4793
        %v4795 = vpop.f32.mrb[0].mxu0
        %4796 = vmatprep.mubr.bf16.mxu0 0
        %4797 = vmatmul.mubr.bf16.gmra.mrb[0].mxu0 %v4725
        %v4798 = vpop.f32.mrb[0].mxu0
        %v4799 = vadd.f32 0.0, %v4798
        %v4800 = vpop.f32.mrb[0].mxu0
        %v4801 = vpop.f32.mrb[0].mxu0
        %v4802 = vadd.f32 0.0, %v4801
        %v4803 = vpop.f32.mrb[0].mxu0
        %4804 = vmatprep.mubr.bf16.mxu0 0
        %4805 = vmatmul.mubr.bf16.gmra.mrb[0].mxu0 %v4728
        %v4806 = vpop.f32.mrb[0].mxu0
        %v4807 = vadd.f32 0.0, %v4806
        %v4808 = vpop.f32.mrb[0].mxu0
        %v4809 = vpop.f32.mrb[0].mxu0
        %v4810 = vadd.f32 0.0, %v4809
        %v4811 = vpop.f32.mrb[0].mxu0
        %4812 = vmatprep.mubr.bf16.mxu0 0
        %4813 = vmatmul.mubr.bf16.gmra.mrb[0].mxu0 %v4731
        %v4814 = vpop.f32.mrb[0].mxu0
        %v4815 = vadd.f32 0.0, %v4814
        %v4816 = vpop.f32.mrb[0].mxu0
        %v4817 = vpop.f32.mrb[0].mxu0
        %v4818 = vadd.f32 0.0, %v4817
        %v4819 = vpop.f32.mrb[0].mxu0
        %4820 = vmatprep.mubr.bf16.mxu0 0
        %4821 = vmatmul.mubr.bf16.gmra.mrb[0].mxu0 %v4734
        %v4822 = vpop.f32.mrb[0].mxu0
        %v4823 = vadd.f32 0.0, %v4822
        %v4824 = vpop.f32.mrb[0].mxu0
        %v4825 = vpop.f32.mrb[0].mxu0
        %v4826 = vadd.f32 0.0, %v4825
        %v4827 = vpop.f32.mrb[0].mxu0
        %4828 = vmatprep.mubr.bf16.mxu0 0
        %4829 = vmatmul.mubr.bf16.gmra.mrb[0].mxu0 %v4737
        %v4830 = vpop.f32.mrb[0].mxu0
        %v4831 = vadd.f32 0.0, %v4830
        %v4832 = vpop.f32.mrb[0].mxu0
        %v4833 = vpop.f32.mrb[0].mxu0
        %v4834 = vadd.f32 0.0, %v4833
        %v4835 = vpop.f32.mrb[0].mxu0
        %4836 = vmatprep.mubr.bf16.mxu0 0
        %4837 = vmatmul.mubr.bf16.gmra.mrb[0].mxu0 %v4740
        %v4838 = vpop.f32.mrb[0].mxu0
        %v4839 = vadd.f32 0.0, %v4838
        %v4840 = vpop.f32.mrb[0].mxu0
        %v4841 = vpop.f32.mrb[0].mxu0
        %v4842 = vadd.f32 0.0, %v4841
        %v4843 = vpop.f32.mrb[0].mxu0
        %4844 = vmatprep.mubr.bf16.mxu0 0
        %4845 = vmatmul.mubr.bf16.gmra.mrb[0].mxu0 %v4743
        %v4846 = vpop.f32.mrb[0].mxu0
        %v4847 = vadd.f32 0.0, %v4846
        %v4848 = vpop.f32.mrb[0].mxu0
        %v4849 = vpop.f32.mrb[0].mxu0
        %v4850 = vadd.f32 0.0, %v4849
        %v4851 = vpop.f32.mrb[0].mxu0
        %4852 = vdwg.mxu0
        %v4853 = vld [vmem:[#allocation2] sm:$0xff]
        %v4854 = vld [vmem:[#allocation2 + $0x8] sm:$0xff]
        %v4855 = vld [vmem:[#allocation2 + $0x10] sm:$0xff]
        %v4856 = vld [vmem:[#allocation2 + $0x18] sm:$0xff]
        %v4857 = vld [vmem:[#allocation2 + $0x20] sm:$0xff]
        %v4858 = vld [vmem:[#allocation2 + $0x28] sm:$0xff]
        %v4859 = vld [vmem:[#allocation2 + $0x30] sm:$0xff]
        %v4860 = vld [vmem:[#allocation2 + $0x38] sm:$0xff]
        %v4861 = vld [vmem:[#allocation2 + $0x40] sm:$0xff]
        %v4862 = vld [vmem:[#allocation2 + $0x48] sm:$0xff]
        %v4863 = vld [vmem:[#allocation2 + $0x50] sm:$0xff]
        %v4864 = vld [vmem:[#allocation2 + $0x58] sm:$0xff]
        %v4865 = vld [vmem:[#allocation2 + $0x60] sm:$0xff]
        %v4866 = vld [vmem:[#allocation2 + $0x68] sm:$0xff]
        %v4867 = vld [vmem:[#allocation2 + $0x70] sm:$0xff]
        %v4868 = vld [vmem:[#allocation2 + $0x78] sm:$0xff]
        %v4869 = vld [vmem:[#allocation2 + $0x80] sm:$0xff]
        %v4870 = vld [vmem:[#allocation2 + $0x88] sm:$0xff]
        %v4871 = vadd.f32 %v4853, %v4783
        %v4872 = vadd.f32 %v4854, %v4786
        %v4873 = vadd.f32 %v4855, %v4791
        %v4874 = vadd.f32 %v4856, %v4794
        %v4875 = vadd.f32 %v4857, %v4799
        %v4876 = vadd.f32 %v4858, %v4802
        %v4877 = vadd.f32 %v4859, %v4807
        %v4878 = vadd.f32 %v4860, %v4810
        %v4879 = vadd.f32 %v4861, %v4815
        %v4880 = vadd.f32 %v4862, %v4818
        %v4881 = vadd.f32 %v4863, %v4823
        %v4882 = vadd.f32 %v4864, %v4826
        %v4883 = vadd.f32 %v4865, %v4831
        %v4884 = vadd.f32 %v4866, %v4834
        %v4885 = vadd.f32 %v4867, %v4839
        %v4886 = vadd.f32 %v4868, %v4842
        %v4887 = vadd.f32 %v4869, %v4847
        %v4888 = vadd.f32 %v4870, %v4850
        %4889 = vst.msk [vmem:[#allocation2] sm:$0xff] %vm273, %v4871
        %4890 = vst.msk [vmem:[#allocation2 + $0x8] sm:$0xff] %vm273, %v4872
        %4891 = vst.msk [vmem:[#allocation2 + $0x10] sm:$0xff] %vm273, %v4873
        %4892 = vst.msk [vmem:[#allocation2 + $0x18] sm:$0xff] %vm273, %v4874
        %4893 = vst.msk [vmem:[#allocation2 + $0x20] sm:$0xff] %vm273, %v4875
        %4894 = vst.msk [vmem:[#allocation2 + $0x28] sm:$0xff] %vm273, %v4876
        %4895 = vst.msk [vmem:[#allocation2 + $0x30] sm:$0xff] %vm273, %v4877
        %4896 = vst.msk [vmem:[#allocation2 + $0x38] sm:$0xff] %vm273, %v4878
        %4897 = vst.msk [vmem:[#allocation2 + $0x40] sm:$0xff] %vm273, %v4879
        %4898 = vst.msk [vmem:[#allocation2 + $0x48] sm:$0xff] %vm273, %v4880
        %4899 = vst.msk [vmem:[#allocation2 + $0x50] sm:$0xff] %vm273, %v4881
        %4900 = vst.msk [vmem:[#allocation2 + $0x58] sm:$0xff] %vm273, %v4882
        %4901 = vst.msk [vmem:[#allocation2 + $0x60] sm:$0xff] %vm273, %v4883
        %4902 = vst.msk [vmem:[#allocation2 + $0x68] sm:$0xff] %vm273, %v4884
        %4903 = vst.msk [vmem:[#allocation2 + $0x70] sm:$0xff] %vm273, %v4885
        %4904 = vst.msk [vmem:[#allocation2 + $0x78] sm:$0xff] %vm273, %v4886
        %4905 = vst.msk [vmem:[#allocation2 + $0x80] sm:$0xff] %vm273, %v4887
        %4906 = vst.msk [vmem:[#allocation2 + $0x88] sm:$0xff] %vm273, %v4888
        %v4907 = vld [vmem:[%s205 + $0x10] sm:$0x8]
        %v4908 = vld [vmem:[%s205 + $0x14] sm:$0xf]
        %v4909 = vld [vmem:[%s205 + $0x18] sm:$0xf]
        %v4910 = vld [vmem:[%s205 + $0x1c] sm:$0xf]
        %v4911 = vld [vmem:[%s205 + $0x20] sm:$0xf]
        %v4912 = vld [vmem:[%s205 + $0x24] sm:$0xf]
        %v4913 = vld [vmem:[%s205 + $0x28] sm:$0xf]
        %v4914 = vld [vmem:[%s205 + $0x2c] sm:$0xf]
        %v4915 = vld [vmem:[%s205 + $0x30] sm:$0xf]
        %v4916 = vld [vmem:[%s205 + $0x34] sm:$0xf]
        %v4917 = vld [vmem:[%s205 + $0x38] sm:$0xf]
        %v4918 = vld [vmem:[%s205 + $0x3c] sm:$0xf]
        %v4919 = vld [vmem:[%s205 + $0x40] sm:$0xf]
        %v4920 = vld [vmem:[%s205 + $0x44] sm:$0xf]
        %v4921 = vld [vmem:[%s205 + $0x48] sm:$0xf]
        %v4922 = vld [vmem:[%s205 + $0x4c] sm:$0xf]
        %v4923 = vld [vmem:[%s205 + $0x50] sm:$0xf]
        %v4924 = vld [vmem:[%s205 + $0x54] sm:$0xf]
        %v4925 = vld [vmem:[%s205 + $0x58] sm:$0x7]
        %s4926 = scalar_lea.vmem %s1, 30
        %v4927 = vld [vmem:[%s4926] sm:$0x3]
        %v4947 = vunpack.c.l.b16 %v4907
        %v4948 = vunpack.c.l.b16 %v4908
        %v4949 = vunpack.c.l.b16 %v4909
        %v4950 = vunpack.c.l.b16 %v4910
        %v4951 = vunpack.c.l.b16 %v4911
        %v4952 = vunpack.c.l.b16 %v4912
        %v4953 = vunpack.c.l.b16 %v4913
        %v4954 = vunpack.c.l.b16 %v4914
        %v4955 = vunpack.c.l.b16 %v4915
        %v4956 = vunpack.c.l.b16 %v4916
        %v4957 = vunpack.c.l.b16 %v4917
        %v4958 = vunpack.c.l.b16 %v4918
        %v4959 = vunpack.c.l.b16 %v4919
        %v4960 = vunpack.c.l.b16 %v4920
        %v4961 = vunpack.c.l.b16 %v4921
        %v4962 = vunpack.c.l.b16 %v4922
        %v4963 = vunpack.c.l.b16 %v4923
        %v4964 = vunpack.c.l.b16 %v4924
        %v4965 = vunpack.c.l.b16 %v4925
        %v4966 = vpack.c.b16 %v4948, %v4947
        %v4967 = vpack.c.b16 %v4950, %v4949
        %v4968 = vpack.c.b16 %v4952, %v4951
        %v4969 = vpack.c.b16 %v4954, %v4953
        %v4970 = vpack.c.b16 %v4956, %v4955
        %v4971 = vpack.c.b16 %v4958, %v4957
        %v4972 = vpack.c.b16 %v4960, %v4959
        %v4973 = vpack.c.b16 %v4962, %v4961
        %v4974 = vpack.c.b16 %v4964, %v4963
        %v4975 = vpack.c.b16 %v4965, %v4965
        %vm4976 = vcmask 1044480
        %v4977 = vrot.slane %v4966, 3
        %v4978 = vrot.slane %v4967, 3
        %v4979 = vsel %vm4976, %v4977, %v4978
        %v4980 = vrot.slane %v4968, 3
        %v4981 = vsel %vm4976, %v4978, %v4980
        %v4982 = vrot.slane %v4969, 3
        %v4983 = vsel %vm4976, %v4980, %v4982
        %v4984 = vrot.slane %v4970, 3
        %v4985 = vsel %vm4976, %v4982, %v4984
        %v4986 = vrot.slane %v4971, 3
        %v4987 = vsel %vm4976, %v4984, %v4986
        %v4988 = vrot.slane %v4972, 3
        %v4989 = vsel %vm4976, %v4986, %v4988
        %v4990 = vrot.slane %v4973, 3
        %v4991 = vsel %vm4976, %v4988, %v4990
        %v4992 = vrot.slane %v4974, 3
        %v4993 = vsel %vm4976, %v4990, %v4992
        %v4994 = vrot.slane %v4975, 3
        %v4995 = vsel %vm4976, %v4992, %v4994
        %v4997 = vsel %vm273, %v4979, 0
        %v5000 = vsel %vm273, %v4981, 0
        %v5003 = vsel %vm273, %v4983, 0
        %v5006 = vsel %vm273, %v4985, 0
        %v5009 = vsel %vm273, %v4987, 0
        %v5012 = vsel %vm273, %v4989, 0
        %v5015 = vsel %vm273, %v4991, 0
        %v5018 = vsel %vm273, %v4993, 0
        %v5021 = vsel %vm273, %v4995, 0
        %v5024 = vsel %vm301, %v4927, 0
        %5026 = vmatprep.subr.bf16.mxu0 0
        %5027 = vmatpush1.bf16.msra.mxu0 %v5024
        %5028 = vmatprep.subr.bf16.mxu0 0
        %5029 = vmatpush1.bf16.msra.mxu0 0
        %5030 = vmatprep.subr.bf16.mxu0 0
        %5031 = vmatpush1.bf16.msra.mxu0 0
        %5032 = vmatprep.subr.bf16.mxu0 0
        %5033 = vmatpush1.bf16.msra.mxu0 0
        %5034 = vmatprep.subr.bf16.mxu0 0
        %5035 = vmatpush1.bf16.msra.mxu0 0
        %5036 = vmatprep.subr.bf16.mxu0 0
        %5037 = vmatpush1.bf16.msra.mxu0 0
        %5038 = vmatprep.subr.bf16.mxu0 0
        %5039 = vmatpush1.bf16.msra.mxu0 0
        %5040 = vmatprep.subr.bf16.mxu0 0
        %5041 = vmatpush1.bf16.msra.mxu0 0
        %5042 = vmatprep.subr.bf16.mxu0 0
        %5043 = vmatpush1.bf16.msra.mxu0 0
        %5044 = vmatprep.subr.bf16.mxu0 0
        %5045 = vmatpush1.bf16.msra.mxu0 0
        %5046 = vmatprep.subr.bf16.mxu0 0
        %5047 = vmatpush1.bf16.msra.mxu0 0
        %5048 = vmatprep.subr.bf16.mxu0 0
        %5049 = vmatpush1.bf16.msra.mxu0 0
        %5050 = vmatprep.subr.bf16.mxu0 0
        %5051 = vmatpush1.bf16.msra.mxu0 0
        %5052 = vmatprep.subr.bf16.mxu0 0
        %5053 = vmatpush1.bf16.msra.mxu0 0
        %5054 = vmatprep.subr.bf16.mxu0 0
        %5055 = vmatpush1.bf16.msra.mxu0 0
        %5056 = vmatprep.subr.bf16.mxu0 0
        %5057 = vmatpush1.bf16.msra.mxu0 0
        %5058 = vmatprep.mubr.bf16.mxu0 0
        %5059 = vmatmul.mubr.bf16.gmra.mrb[0].mxu0 %v4997
        %v5060 = vpop.f32.mrb[0].mxu0
        %v5061 = vadd.f32 0.0, %v5060
        %v5062 = vpop.f32.mrb[0].mxu0
        %v5063 = vpop.f32.mrb[0].mxu0
        %v5064 = vadd.f32 0.0, %v5063
        %v5065 = vpop.f32.mrb[0].mxu0
        %5066 = vmatprep.mubr.bf16.mxu0 0
        %5067 = vmatmul.mubr.bf16.gmra.mrb[0].mxu0 %v5000
        %v5068 = vpop.f32.mrb[0].mxu0
        %v5069 = vadd.f32 0.0, %v5068
        %v5070 = vpop.f32.mrb[0].mxu0
        %v5071 = vpop.f32.mrb[0].mxu0
        %v5072 = vadd.f32 0.0, %v5071
        %v5073 = vpop.f32.mrb[0].mxu0
        %5074 = vmatprep.mubr.bf16.mxu0 0
        %5075 = vmatmul.mubr.bf16.gmra.mrb[0].mxu0 %v5003
        %v5076 = vpop.f32.mrb[0].mxu0
        %v5077 = vadd.f32 0.0, %v5076
        %v5078 = vpop.f32.mrb[0].mxu0
        %v5079 = vpop.f32.mrb[0].mxu0
        %v5080 = vadd.f32 0.0, %v5079
        %v5081 = vpop.f32.mrb[0].mxu0
        %5082 = vmatprep.mubr.bf16.mxu0 0
        %5083 = vmatmul.mubr.bf16.gmra.mrb[0].mxu0 %v5006
        %v5084 = vpop.f32.mrb[0].mxu0
        %v5085 = vadd.f32 0.0, %v5084
        %v5086 = vpop.f32.mrb[0].mxu0
        %v5087 = vpop.f32.mrb[0].mxu0
        %v5088 = vadd.f32 0.0, %v5087
        %v5089 = vpop.f32.mrb[0].mxu0
        %5090 = vmatprep.mubr.bf16.mxu0 0
        %5091 = vmatmul.mubr.bf16.gmra.mrb[0].mxu0 %v5009
        %v5092 = vpop.f32.mrb[0].mxu0
        %v5093 = vadd.f32 0.0, %v5092
        %v5094 = vpop.f32.mrb[0].mxu0
        %v5095 = vpop.f32.mrb[0].mxu0
        %v5096 = vadd.f32 0.0, %v5095
        %v5097 = vpop.f32.mrb[0].mxu0
        %5098 = vmatprep.mubr.bf16.mxu0 0
        %5099 = vmatmul.mubr.bf16.gmra.mrb[0].mxu0 %v5012
        %v5100 = vpop.f32.mrb[0].mxu0
        %v5101 = vadd.f32 0.0, %v5100
        %v5102 = vpop.f32.mrb[0].mxu0
        %v5103 = vpop.f32.mrb[0].mxu0
        %v5104 = vadd.f32 0.0, %v5103
        %v5105 = vpop.f32.mrb[0].mxu0
        %5106 = vmatprep.mubr.bf16.mxu0 0
        %5107 = vmatmul.mubr.bf16.gmra.mrb[0].mxu0 %v5015
        %v5108 = vpop.f32.mrb[0].mxu0
        %v5109 = vadd.f32 0.0, %v5108
        %v5110 = vpop.f32.mrb[0].mxu0
        %v5111 = vpop.f32.mrb[0].mxu0
        %v5112 = vadd.f32 0.0, %v5111
        %v5113 = vpop.f32.mrb[0].mxu0
        %5114 = vmatprep.mubr.bf16.mxu0 0
        %5115 = vmatmul.mubr.bf16.gmra.mrb[0].mxu0 %v5018
        %v5116 = vpop.f32.mrb[0].mxu0
        %v5117 = vadd.f32 0.0, %v5116
        %v5118 = vpop.f32.mrb[0].mxu0
        %v5119 = vpop.f32.mrb[0].mxu0
        %v5120 = vadd.f32 0.0, %v5119
        %v5121 = vpop.f32.mrb[0].mxu0
        %5122 = vmatprep.mubr.bf16.mxu0 0
        %5123 = vmatmul.mubr.bf16.gmra.mrb[0].mxu0 %v5021
        %v5124 = vpop.f32.mrb[0].mxu0
        %v5125 = vadd.f32 0.0, %v5124
        %v5126 = vpop.f32.mrb[0].mxu0
        %v5127 = vpop.f32.mrb[0].mxu0
        %v5128 = vadd.f32 0.0, %v5127
        %v5129 = vpop.f32.mrb[0].mxu0
        %5130 = vdwg.mxu0
        %v5131 = vld [vmem:[#allocation2] sm:$0xff]
        %v5132 = vld [vmem:[#allocation2 + $0x8] sm:$0xff]
        %v5133 = vld [vmem:[#allocation2 + $0x10] sm:$0xff]
        %v5134 = vld [vmem:[#allocation2 + $0x18] sm:$0xff]
        %v5135 = vld [vmem:[#allocation2 + $0x20] sm:$0xff]
        %v5136 = vld [vmem:[#allocation2 + $0x28] sm:$0xff]
        %v5137 = vld [vmem:[#allocation2 + $0x30] sm:$0xff]
        %v5138 = vld [vmem:[#allocation2 + $0x38] sm:$0xff]
        %v5139 = vld [vmem:[#allocation2 + $0x40] sm:$0xff]
        %v5140 = vld [vmem:[#allocation2 + $0x48] sm:$0xff]
        %v5141 = vld [vmem:[#allocation2 + $0x50] sm:$0xff]
        %v5142 = vld [vmem:[#allocation2 + $0x58] sm:$0xff]
        %v5143 = vld [vmem:[#allocation2 + $0x60] sm:$0xff]
        %v5144 = vld [vmem:[#allocation2 + $0x68] sm:$0xff]
        %v5145 = vld [vmem:[#allocation2 + $0x70] sm:$0xff]
        %v5146 = vld [vmem:[#allocation2 + $0x78] sm:$0xff]
        %v5147 = vld [vmem:[#allocation2 + $0x80] sm:$0xff]
        %v5148 = vld [vmem:[#allocation2 + $0x88] sm:$0xff]
        %v5149 = vadd.f32 %v5131, %v5061
        %v5150 = vadd.f32 %v5132, %v5064
        %v5151 = vadd.f32 %v5133, %v5069
        %v5152 = vadd.f32 %v5134, %v5072
        %v5153 = vadd.f32 %v5135, %v5077
        %v5154 = vadd.f32 %v5136, %v5080
        %v5155 = vadd.f32 %v5137, %v5085
        %v5156 = vadd.f32 %v5138, %v5088
        %v5157 = vadd.f32 %v5139, %v5093
        %v5158 = vadd.f32 %v5140, %v5096
        %v5159 = vadd.f32 %v5141, %v5101
        %v5160 = vadd.f32 %v5142, %v5104
        %v5161 = vadd.f32 %v5143, %v5109
        %v5162 = vadd.f32 %v5144, %v5112
        %v5163 = vadd.f32 %v5145, %v5117
        %v5164 = vadd.f32 %v5146, %v5120
        %v5165 = vadd.f32 %v5147, %v5125
        %v5166 = vadd.f32 %v5148, %v5128
        %5167 = vst.msk [vmem:[#allocation2] sm:$0xff] %vm273, %v5149
        %5168 = vst.msk [vmem:[#allocation2 + $0x8] sm:$0xff] %vm273, %v5150
        %5169 = vst.msk [vmem:[#allocation2 + $0x10] sm:$0xff] %vm273, %v5151
        %5170 = vst.msk [vmem:[#allocation2 + $0x18] sm:$0xff] %vm273, %v5152
        %5171 = vst.msk [vmem:[#allocation2 + $0x20] sm:$0xff] %vm273, %v5153
        %5172 = vst.msk [vmem:[#allocation2 + $0x28] sm:$0xff] %vm273, %v5154
        %5173 = vst.msk [vmem:[#allocation2 + $0x30] sm:$0xff] %vm273, %v5155
        %5174 = vst.msk [vmem:[#allocation2 + $0x38] sm:$0xff] %vm273, %v5156
        %5175 = vst.msk [vmem:[#allocation2 + $0x40] sm:$0xff] %vm273, %v5157
        %5176 = vst.msk [vmem:[#allocation2 + $0x48] sm:$0xff] %vm273, %v5158
        %5177 = vst.msk [vmem:[#allocation2 + $0x50] sm:$0xff] %vm273, %v5159
        %5178 = vst.msk [vmem:[#allocation2 + $0x58] sm:$0xff] %vm273, %v5160
        %5179 = vst.msk [vmem:[#allocation2 + $0x60] sm:$0xff] %vm273, %v5161
        %5180 = vst.msk [vmem:[#allocation2 + $0x68] sm:$0xff] %vm273, %v5162
        %5181 = vst.msk [vmem:[#allocation2 + $0x70] sm:$0xff] %vm273, %v5163
        %5182 = vst.msk [vmem:[#allocation2 + $0x78] sm:$0xff] %vm273, %v5164
        %5183 = vst.msk [vmem:[#allocation2 + $0x80] sm:$0xff] %vm273, %v5165
        %5184 = vst.msk [vmem:[#allocation2 + $0x88] sm:$0xff] %vm273, %v5166
        %v5185 = vld [vmem:[#allocation2] sm:$0xff]
        %v5186 = vld [vmem:[#allocation2 + $0x8] sm:$0xff]
        %v5187 = vld [vmem:[#allocation2 + $0x10] sm:$0xff]
        %v5188 = vld [vmem:[#allocation2 + $0x18] sm:$0xff]
        %v5189 = vld [vmem:[#allocation2 + $0x20] sm:$0xff]
        %v5190 = vld [vmem:[#allocation2 + $0x28] sm:$0xff]
        %v5191 = vld [vmem:[#allocation2 + $0x30] sm:$0xff]
        %v5192 = vld [vmem:[#allocation2 + $0x38] sm:$0xff]
        %v5193 = vld [vmem:[#allocation2 + $0x40] sm:$0xff]
        %v5194 = vld [vmem:[#allocation2 + $0x48] sm:$0xff]
        %v5195 = vld [vmem:[#allocation2 + $0x50] sm:$0xff]
        %v5196 = vld [vmem:[#allocation2 + $0x58] sm:$0xff]
        %v5197 = vld [vmem:[#allocation2 + $0x60] sm:$0xff]
        %v5198 = vld [vmem:[#allocation2 + $0x68] sm:$0xff]
        %v5199 = vld [vmem:[#allocation2 + $0x70] sm:$0xff]
        %v5200 = vld [vmem:[#allocation2 + $0x78] sm:$0xff]
        %v5201 = vld [vmem:[#allocation2 + $0x80] sm:$0xff]
        %v5202 = vld [vmem:[#allocation2 + $0x88] sm:$0xff]
        %v5203 = vadd.f32 %v5185, %v1411
        %v5204 = vadd.f32 %v5186, %v1411
        %v5205 = vadd.f32 %v5187, %v1411
        %v5206 = vadd.f32 %v5188, %v1411
        %v5207 = vadd.f32 %v5189, %v1411
        %v5208 = vadd.f32 %v5190, %v1411
        %v5209 = vadd.f32 %v5191, %v1411
        %v5210 = vadd.f32 %v5192, %v1411
        %v5211 = vadd.f32 %v5193, %v1411
        %v5212 = vadd.f32 %v5194, %v1411
        %v5213 = vadd.f32 %v5195, %v1411
        %v5214 = vadd.f32 %v5196, %v1411
        %v5215 = vadd.f32 %v5197, %v1411
        %v5216 = vadd.f32 %v5198, %v1411
        %v5217 = vadd.f32 %v5199, %v1411
        %v5218 = vadd.f32 %v5200, %v1411
        %v5219 = vadd.f32 %v5201, %v1411
        %v5220 = vadd.f32 %v5202, %v1411
        %s5221 = scalar_lea.vmem %s196, 432 [#allocation5]
        %5222 = vst.msk [vmem:[%s5221] sm:$0xff] %vm273, %v5203
        %5223 = vst.msk [vmem:[%s5221 + $0x8] sm:$0xff] %vm273, %v5204
        %5224 = vst.msk [vmem:[%s5221 + $0x10] sm:$0xff] %vm273, %v5205
        %5225 = vst.msk [vmem:[%s5221 + $0x18] sm:$0xff] %vm273, %v5206
        %5226 = vst.msk [vmem:[%s5221 + $0x20] sm:$0xff] %vm273, %v5207
        %5227 = vst.msk [vmem:[%s5221 + $0x28] sm:$0xff] %vm273, %v5208
        %5228 = vst.msk [vmem:[%s5221 + $0x30] sm:$0xff] %vm273, %v5209
        %5229 = vst.msk [vmem:[%s5221 + $0x38] sm:$0xff] %vm273, %v5210
        %5230 = vst.msk [vmem:[%s5221 + $0x40] sm:$0xff] %vm273, %v5211
        %5231 = vst.msk [vmem:[%s5221 + $0x48] sm:$0xff] %vm273, %v5212
        %5232 = vst.msk [vmem:[%s5221 + $0x50] sm:$0xff] %vm273, %v5213
        %5233 = vst.msk [vmem:[%s5221 + $0x58] sm:$0xff] %vm273, %v5214
        %5234 = vst.msk [vmem:[%s5221 + $0x60] sm:$0xff] %vm273, %v5215
        %5235 = vst.msk [vmem:[%s5221 + $0x68] sm:$0xff] %vm273, %v5216
        %5236 = vst.msk [vmem:[%s5221 + $0x70] sm:$0xff] %vm273, %v5217
        %5237 = vst.msk [vmem:[%s5221 + $0x78] sm:$0xff] %vm273, %v5218
        %5238 = vst.msk [vmem:[%s5221 + $0x80] sm:$0xff] %vm273, %v5219
        %5239 = vst.msk [vmem:[%s5221 + $0x88] sm:$0xff] %vm273, %v5220
        %s5240 = sand.u32 %s107, 1
        %s5241 = sand.u32 %s107, 1
        %s5242 = smul.addr %s5241, 576
        %s5243 = scalar_lea.vmem [#allocation5], %s5242
        // Predicated region
        $region37: #{tpu_custom_call.1} parent=31 // pred_check
          %p5244 = pneg %p117
        $region38: #{tpu_custom_call.1} parent=31 // pred_check_branch
          %5246 = sbr.rel (%p5244) target = $region40
        $region39: #{tpu_custom_call.1} parent=31 // pred_region
          %s5247 = smul.u32 18, %s20
          %s5248 = smul.addr %s19, 144
          %s5249 = sadd.s32 %s5247, %s5248
          %s5250 = smul.addr %s5249, 8
          %s5251 = scalar_lea.vmem %s3, %s5250
          // Predicated region
          $region41: #{tpu_custom_call.1} parent=39 // pred_check
            _
          $region42: #{tpu_custom_call.1} parent=39 // pred_check_branch
            %5253 = sbr.rel (0) target = $region44
          $region43: #{tpu_custom_call.1} parent=39 // pred_region
            // Predicated region
            $region45: #{tpu_custom_call.1} parent=43 // pred_check
              _
            $region46: #{tpu_custom_call.1} parent=43 // pred_check_branch
              %5255 = sbr.rel (0) target = $region48
            $region47: #{tpu_custom_call.1} parent=43 // pred_region
              // Predicated region
              $region60: #{tpu_custom_call.1} parent=47 // pred_check
                _
              $region61: #{tpu_custom_call.1} parent=47 // pred_check_branch
                %5412 = sbr.rel (0) target = $region63
              $region62: #{tpu_custom_call.1} parent=47 // pred_region
                loop: start=0, step=1, limit=1
                $region64: #{tpu_custom_call.1} parent=62 // loop_pre_header
                  _
                $region65: #{tpu_custom_call.1} parent=62 // loop_header
                  %s5414 = sphi 0, %s5418
                  %p5415 = scmp.ge.s32.totalorder %s5414, 1
                  %s5419 = sphi %s5243, %s5243
                  %s5420 = sphi %s5251, %s5251
                $region66: #{tpu_custom_call.1} parent=62 // loop_header_branch
                  %5417 = sbr.rel (%p5415) target = $region70
                $region67: #{tpu_custom_call.1} parent=62 // loop_body
                  %v5421 = vld [vmem:[%s5419] sm:$0xff]
                  %5422 = vst [vmem:[%s5420] sm:$0xff] %v5421
                  %v5423 = vld [vmem:[%s5419 + $0x8] sm:$0xff]
                  %5424 = vst [vmem:[%s5420 + $0x8] sm:$0xff] %v5423
                  %v5425 = vld [vmem:[%s5419 + $0x10] sm:$0xff]
                  %5426 = vst [vmem:[%s5420 + $0x10] sm:$0xff] %v5425
                  %v5427 = vld [vmem:[%s5419 + $0x18] sm:$0xff]
                  %5428 = vst [vmem:[%s5420 + $0x18] sm:$0xff] %v5427
                  %v5429 = vld [vmem:[%s5419 + $0x20] sm:$0xff]
                  %5430 = vst [vmem:[%s5420 + $0x20] sm:$0xff] %v5429
                  %v5431 = vld [vmem:[%s5419 + $0x28] sm:$0xff]
                  %5432 = vst [vmem:[%s5420 + $0x28] sm:$0xff] %v5431
                  %v5433 = vld [vmem:[%s5419 + $0x30] sm:$0xff]
                  %5434 = vst [vmem:[%s5420 + $0x30] sm:$0xff] %v5433
                  %v5435 = vld [vmem:[%s5419 + $0x38] sm:$0xff]
                  %5436 = vst [vmem:[%s5420 + $0x38] sm:$0xff] %v5435
                  %v5437 = vld [vmem:[%s5419 + $0x40] sm:$0xff]
                  %5438 = vst [vmem:[%s5420 + $0x40] sm:$0xff] %v5437
                  %v5439 = vld [vmem:[%s5419 + $0x48] sm:$0xff]
                  %5440 = vst [vmem:[%s5420 + $0x48] sm:$0xff] %v5439
                  %v5441 = vld [vmem:[%s5419 + $0x50] sm:$0xff]
                  %5442 = vst [vmem:[%s5420 + $0x50] sm:$0xff] %v5441
                  %v5443 = vld [vmem:[%s5419 + $0x58] sm:$0xff]
                  %5444 = vst [vmem:[%s5420 + $0x58] sm:$0xff] %v5443
                  %v5445 = vld [vmem:[%s5419 + $0x60] sm:$0xff]
                  %5446 = vst [vmem:[%s5420 + $0x60] sm:$0xff] %v5445
                  %v5447 = vld [vmem:[%s5419 + $0x68] sm:$0xff]
                  %5448 = vst [vmem:[%s5420 + $0x68] sm:$0xff] %v5447
                  %v5449 = vld [vmem:[%s5419 + $0x70] sm:$0xff]
                  %5450 = vst [vmem:[%s5420 + $0x70] sm:$0xff] %v5449
                  %v5451 = vld [vmem:[%s5419 + $0x78] sm:$0xff]
                  %5452 = vst [vmem:[%s5420 + $0x78] sm:$0xff] %v5451
                  %v5453 = vld [vmem:[%s5419 + $0x80] sm:$0xff]
                  %5454 = vst [vmem:[%s5420 + $0x80] sm:$0xff] %v5453
                  %v5455 = vld [vmem:[%s5419 + $0x88] sm:$0xff]
                  %5456 = vst [vmem:[%s5420 + $0x88] sm:$0xff] %v5455
                  %v5457 = vld [vmem:[%s5419 + $0x90] sm:$0xff]
                  %5458 = vst [vmem:[%s5420 + $0x120] sm:$0xff] %v5457
                  %v5459 = vld [vmem:[%s5419 + $0x98] sm:$0xff]
                  %5460 = vst [vmem:[%s5420 + $0x128] sm:$0xff] %v5459
                  %v5461 = vld [vmem:[%s5419 + $0xa0] sm:$0xff]
                  %5462 = vst [vmem:[%s5420 + $0x130] sm:$0xff] %v5461
                  %v5463 = vld [vmem:[%s5419 + $0xa8] sm:$0xff]
                  %5464 = vst [vmem:[%s5420 + $0x138] sm:$0xff] %v5463
                  %v5465 = vld [vmem:[%s5419 + $0xb0] sm:$0xff]
                  %5466 = vst [vmem:[%s5420 + $0x140] sm:$0xff] %v5465
                  %v5467 = vld [vmem:[%s5419 + $0xb8] sm:$0xff]
                  %5468 = vst [vmem:[%s5420 + $0x148] sm:$0xff] %v5467
                  %v5469 = vld [vmem:[%s5419 + $0xc0] sm:$0xff]
                  %5470 = vst [vmem:[%s5420 + $0x150] sm:$0xff] %v5469
                  %v5471 = vld [vmem:[%s5419 + $0xc8] sm:$0xff]
                  %5472 = vst [vmem:[%s5420 + $0x158] sm:$0xff] %v5471
                  %v5473 = vld [vmem:[%s5419 + $0xd0] sm:$0xff]
                  %5474 = vst [vmem:[%s5420 + $0x160] sm:$0xff] %v5473
                  %v5475 = vld [vmem:[%s5419 + $0xd8] sm:$0xff]
                  %5476 = vst [vmem:[%s5420 + $0x168] sm:$0xff] %v5475
                  %v5477 = vld [vmem:[%s5419 + $0xe0] sm:$0xff]
                  %5478 = vst [vmem:[%s5420 + $0x170] sm:$0xff] %v5477
                  %v5479 = vld [vmem:[%s5419 + $0xe8] sm:$0xff]
                  %5480 = vst [vmem:[%s5420 + $0x178] sm:$0xff] %v5479
                  %v5481 = vld [vmem:[%s5419 + $0xf0] sm:$0xff]
                  %5482 = vst [vmem:[%s5420 + $0x180] sm:$0xff] %v5481
                  %v5483 = vld [vmem:[%s5419 + $0xf8] sm:$0xff]
                  %5484 = vst [vmem:[%s5420 + $0x188] sm:$0xff] %v5483
                  %v5485 = vld [vmem:[%s5419 + $0x100] sm:$0xff]
                  %5486 = vst [vmem:[%s5420 + $0x190] sm:$0xff] %v5485
                  %v5487 = vld [vmem:[%s5419 + $0x108] sm:$0xff]
                  %5488 = vst [vmem:[%s5420 + $0x198] sm:$0xff] %v5487
                  %v5489 = vld [vmem:[%s5419 + $0x110] sm:$0xff]
                  %5490 = vst [vmem:[%s5420 + $0x1a0] sm:$0xff] %v5489
                  %v5491 = vld [vmem:[%s5419 + $0x118] sm:$0xff]
                  %5492 = vst [vmem:[%s5420 + $0x1a8] sm:$0xff] %v5491
                  %v5493 = vld [vmem:[%s5419 + $0x120] sm:$0xff]
                  %5494 = vst [vmem:[%s5420 + $0x240] sm:$0xff] %v5493
                  %v5495 = vld [vmem:[%s5419 + $0x128] sm:$0xff]
                  %5496 = vst [vmem:[%s5420 + $0x248] sm:$0xff] %v5495
                  %v5497 = vld [vmem:[%s5419 + $0x130] sm:$0xff]
                  %5498 = vst [vmem:[%s5420 + $0x250] sm:$0xff] %v5497
                  %v5499 = vld [vmem:[%s5419 + $0x138] sm:$0xff]
                  %5500 = vst [vmem:[%s5420 + $0x258] sm:$0xff] %v5499
                  %v5501 = vld [vmem:[%s5419 + $0x140] sm:$0xff]
                  %5502 = vst [vmem:[%s5420 + $0x260] sm:$0xff] %v5501
                  %v5503 = vld [vmem:[%s5419 + $0x148] sm:$0xff]
                  %5504 = vst [vmem:[%s5420 + $0x268] sm:$0xff] %v5503
                  %v5505 = vld [vmem:[%s5419 + $0x150] sm:$0xff]
                  %5506 = vst [vmem:[%s5420 + $0x270] sm:$0xff] %v5505
                  %v5507 = vld [vmem:[%s5419 + $0x158] sm:$0xff]
                  %5508 = vst [vmem:[%s5420 + $0x278] sm:$0xff] %v5507
                  %v5509 = vld [vmem:[%s5419 + $0x160] sm:$0xff]
                  %5510 = vst [vmem:[%s5420 + $0x280] sm:$0xff] %v5509
                  %v5511 = vld [vmem:[%s5419 + $0x168] sm:$0xff]
                  %5512 = vst [vmem:[%s5420 + $0x288] sm:$0xff] %v5511
                  %v5513 = vld [vmem:[%s5419 + $0x170] sm:$0xff]
                  %5514 = vst [vmem:[%s5420 + $0x290] sm:$0xff] %v5513
                  %v5515 = vld [vmem:[%s5419 + $0x178] sm:$0xff]
                  %5516 = vst [vmem:[%s5420 + $0x298] sm:$0xff] %v5515
                  %v5517 = vld [vmem:[%s5419 + $0x180] sm:$0xff]
                  %5518 = vst [vmem:[%s5420 + $0x2a0] sm:$0xff] %v5517
                  %v5519 = vld [vmem:[%s5419 + $0x188] sm:$0xff]
                  %5520 = vst [vmem:[%s5420 + $0x2a8] sm:$0xff] %v5519
                  %v5521 = vld [vmem:[%s5419 + $0x190] sm:$0xff]
                  %5522 = vst [vmem:[%s5420 + $0x2b0] sm:$0xff] %v5521
                  %v5523 = vld [vmem:[%s5419 + $0x198] sm:$0xff]
                  %5524 = vst [vmem:[%s5420 + $0x2b8] sm:$0xff] %v5523
                  %v5525 = vld [vmem:[%s5419 + $0x1a0] sm:$0xff]
                  %5526 = vst [vmem:[%s5420 + $0x2c0] sm:$0xff] %v5525
                  %v5527 = vld [vmem:[%s5419 + $0x1a8] sm:$0xff]
                  %5528 = vst [vmem:[%s5420 + $0x2c8] sm:$0xff] %v5527
                  %v5529 = vld [vmem:[%s5419 + $0x1b0] sm:$0xff]
                  %5530 = vst [vmem:[%s5420 + $0x360] sm:$0xff] %v5529
                  %v5531 = vld [vmem:[%s5419 + $0x1b8] sm:$0xff]
                  %5532 = vst [vmem:[%s5420 + $0x368] sm:$0xff] %v5531
                  %v5533 = vld [vmem:[%s5419 + $0x1c0] sm:$0xff]
                  %5534 = vst [vmem:[%s5420 + $0x370] sm:$0xff] %v5533
                  %v5535 = vld [vmem:[%s5419 + $0x1c8] sm:$0xff]
                  %5536 = vst [vmem:[%s5420 + $0x378] sm:$0xff] %v5535
                  %v5537 = vld [vmem:[%s5419 + $0x1d0] sm:$0xff]
                  %5538 = vst [vmem:[%s5420 + $0x380] sm:$0xff] %v5537
                  %v5539 = vld [vmem:[%s5419 + $0x1d8] sm:$0xff]
                  %5540 = vst [vmem:[%s5420 + $0x388] sm:$0xff] %v5539
                  %v5541 = vld [vmem:[%s5419 + $0x1e0] sm:$0xff]
                  %5542 = vst [vmem:[%s5420 + $0x390] sm:$0xff] %v5541
                  %v5543 = vld [vmem:[%s5419 + $0x1e8] sm:$0xff]
                  %5544 = vst [vmem:[%s5420 + $0x398] sm:$0xff] %v5543
                  %v5545 = vld [vmem:[%s5419 + $0x1f0] sm:$0xff]
                  %5546 = vst [vmem:[%s5420 + $0x3a0] sm:$0xff] %v5545
                  %v5547 = vld [vmem:[%s5419 + $0x1f8] sm:$0xff]
                  %5548 = vst [vmem:[%s5420 + $0x3a8] sm:$0xff] %v5547
                  %v5549 = vld [vmem:[%s5419 + $0x200] sm:$0xff]
                  %5550 = vst [vmem:[%s5420 + $0x3b0] sm:$0xff] %v5549
                  %v5551 = vld [vmem:[%s5419 + $0x208] sm:$0xff]
                  %5552 = vst [vmem:[%s5420 + $0x3b8] sm:$0xff] %v5551
                  %v5553 = vld [vmem:[%s5419 + $0x210] sm:$0xff]
                  %5554 = vst [vmem:[%s5420 + $0x3c0] sm:$0xff] %v5553
                  %v5555 = vld [vmem:[%s5419 + $0x218] sm:$0xff]
                  %5556 = vst [vmem:[%s5420 + $0x3c8] sm:$0xff] %v5555
                  %v5557 = vld [vmem:[%s5419 + $0x220] sm:$0xff]
                  %5558 = vst [vmem:[%s5420 + $0x3d0] sm:$0xff] %v5557
                  %v5559 = vld [vmem:[%s5419 + $0x228] sm:$0xff]
                  %5560 = vst [vmem:[%s5420 + $0x3d8] sm:$0xff] %v5559
                  %v5561 = vld [vmem:[%s5419 + $0x230] sm:$0xff]
                  %5562 = vst [vmem:[%s5420 + $0x3e0] sm:$0xff] %v5561
                  %v5563 = vld [vmem:[%s5419 + $0x238] sm:$0xff]
                  %5564 = vst [vmem:[%s5420 + $0x3e8] sm:$0xff] %v5563
                $region68: #{tpu_custom_call.1} parent=62 // loop_footer
                  %s5418 = sadd.s32 1, %s5414
                $region69: #{tpu_custom_call.1} parent=62 // loop_footer_branch
                  %5413 = sbr.rel target = $region65
                $region70: #{tpu_custom_call.1} parent=62 // loop_exit
                  _
              $region63: #{tpu_custom_call.1} parent=47 // pred_fallthru
                _
              // Predicated region
              $region71: #{tpu_custom_call.1} parent=47 // pred_check
                _
              $region72: #{tpu_custom_call.1} parent=47 // pred_check_branch
                %5566 = sbr.rel target = $region74
              $region73: #{tpu_custom_call.1} parent=47 // pred_region
                _
              $region74: #{tpu_custom_call.1} parent=47 // pred_fallthru
                _
            $region48: #{tpu_custom_call.1} parent=43 // pred_fallthru
              _
            // Predicated region
            $region49: #{tpu_custom_call.1} parent=43 // pred_check
              _
            $region50: #{tpu_custom_call.1} parent=43 // pred_check_branch
              %5257 = sbr.rel target = $region52
            $region51: #{tpu_custom_call.1} parent=43 // pred_region
              loop: start=0, step=1, limit=1
              $region53: #{tpu_custom_call.1} parent=51 // loop_pre_header
                _
              $region54: #{tpu_custom_call.1} parent=51 // loop_header
                %s5260 = sphi 0, %s5264
                %p5261 = scmp.ge.s32.totalorder %s5260, 1
                %s5265 = sphi %s5243, %s5243
                %s5266 = sphi %s5251, %s5251
              $region55: #{tpu_custom_call.1} parent=51 // loop_header_branch
                %5263 = sbr.rel (%p5261) target = $region59
              $region56: #{tpu_custom_call.1} parent=51 // loop_body
                %v5267 = vld [vmem:[%s5265] sm:$0xff]
                %5268 = vst [vmem:[%s5266] sm:$0xff] %v5267
                %v5269 = vld [vmem:[%s5265 + $0x8] sm:$0xff]
                %5270 = vst [vmem:[%s5266 + $0x8] sm:$0xff] %v5269
                %v5271 = vld [vmem:[%s5265 + $0x10] sm:$0xff]
                %5272 = vst [vmem:[%s5266 + $0x10] sm:$0xff] %v5271
                %v5273 = vld [vmem:[%s5265 + $0x18] sm:$0xff]
                %5274 = vst [vmem:[%s5266 + $0x18] sm:$0xff] %v5273
                %v5275 = vld [vmem:[%s5265 + $0x20] sm:$0xff]
                %5276 = vst [vmem:[%s5266 + $0x20] sm:$0xff] %v5275
                %v5277 = vld [vmem:[%s5265 + $0x28] sm:$0xff]
                %5278 = vst [vmem:[%s5266 + $0x28] sm:$0xff] %v5277
                %v5279 = vld [vmem:[%s5265 + $0x30] sm:$0xff]
                %5280 = vst [vmem:[%s5266 + $0x30] sm:$0xff] %v5279
                %v5281 = vld [vmem:[%s5265 + $0x38] sm:$0xff]
                %5282 = vst [vmem:[%s5266 + $0x38] sm:$0xff] %v5281
                %v5283 = vld [vmem:[%s5265 + $0x40] sm:$0xff]
                %5284 = vst [vmem:[%s5266 + $0x40] sm:$0xff] %v5283
                %v5285 = vld [vmem:[%s5265 + $0x48] sm:$0xff]
                %5286 = vst [vmem:[%s5266 + $0x48] sm:$0xff] %v5285
                %v5287 = vld [vmem:[%s5265 + $0x50] sm:$0xff]
                %5288 = vst [vmem:[%s5266 + $0x50] sm:$0xff] %v5287
                %v5289 = vld [vmem:[%s5265 + $0x58] sm:$0xff]
                %5290 = vst [vmem:[%s5266 + $0x58] sm:$0xff] %v5289
                %v5291 = vld [vmem:[%s5265 + $0x60] sm:$0xff]
                %5292 = vst [vmem:[%s5266 + $0x60] sm:$0xff] %v5291
                %v5293 = vld [vmem:[%s5265 + $0x68] sm:$0xff]
                %5294 = vst [vmem:[%s5266 + $0x68] sm:$0xff] %v5293
                %v5295 = vld [vmem:[%s5265 + $0x70] sm:$0xff]
                %5296 = vst [vmem:[%s5266 + $0x70] sm:$0xff] %v5295
                %v5297 = vld [vmem:[%s5265 + $0x78] sm:$0xff]
                %5298 = vst [vmem:[%s5266 + $0x78] sm:$0xff] %v5297
                %v5299 = vld [vmem:[%s5265 + $0x80] sm:$0xff]
                %5300 = vst [vmem:[%s5266 + $0x80] sm:$0xff] %v5299
                %v5301 = vld [vmem:[%s5265 + $0x88] sm:$0xff]
                %5302 = vst [vmem:[%s5266 + $0x88] sm:$0xff] %v5301
                %v5303 = vld [vmem:[%s5265 + $0x90] sm:$0xff]
                %5304 = vst [vmem:[%s5266 + $0x120] sm:$0xff] %v5303
                %v5305 = vld [vmem:[%s5265 + $0x98] sm:$0xff]
                %5306 = vst [vmem:[%s5266 + $0x128] sm:$0xff] %v5305
                %v5307 = vld [vmem:[%s5265 + $0xa0] sm:$0xff]
                %5308 = vst [vmem:[%s5266 + $0x130] sm:$0xff] %v5307
                %v5309 = vld [vmem:[%s5265 + $0xa8] sm:$0xff]
                %5310 = vst [vmem:[%s5266 + $0x138] sm:$0xff] %v5309
                %v5311 = vld [vmem:[%s5265 + $0xb0] sm:$0xff]
                %5312 = vst [vmem:[%s5266 + $0x140] sm:$0xff] %v5311
                %v5313 = vld [vmem:[%s5265 + $0xb8] sm:$0xff]
                %5314 = vst [vmem:[%s5266 + $0x148] sm:$0xff] %v5313
                %v5315 = vld [vmem:[%s5265 + $0xc0] sm:$0xff]
                %5316 = vst [vmem:[%s5266 + $0x150] sm:$0xff] %v5315
                %v5317 = vld [vmem:[%s5265 + $0xc8] sm:$0xff]
                %5318 = vst [vmem:[%s5266 + $0x158] sm:$0xff] %v5317
                %v5319 = vld [vmem:[%s5265 + $0xd0] sm:$0xff]
                %5320 = vst [vmem:[%s5266 + $0x160] sm:$0xff] %v5319
                %v5321 = vld [vmem:[%s5265 + $0xd8] sm:$0xff]
                %5322 = vst [vmem:[%s5266 + $0x168] sm:$0xff] %v5321
                %v5323 = vld [vmem:[%s5265 + $0xe0] sm:$0xff]
                %5324 = vst [vmem:[%s5266 + $0x170] sm:$0xff] %v5323
                %v5325 = vld [vmem:[%s5265 + $0xe8] sm:$0xff]
                %5326 = vst [vmem:[%s5266 + $0x178] sm:$0xff] %v5325
                %v5327 = vld [vmem:[%s5265 + $0xf0] sm:$0xff]
                %5328 = vst [vmem:[%s5266 + $0x180] sm:$0xff] %v5327
                %v5329 = vld [vmem:[%s5265 + $0xf8] sm:$0xff]
                %5330 = vst [vmem:[%s5266 + $0x188] sm:$0xff] %v5329
                %v5331 = vld [vmem:[%s5265 + $0x100] sm:$0xff]
                %5332 = vst [vmem:[%s5266 + $0x190] sm:$0xff] %v5331
                %v5333 = vld [vmem:[%s5265 + $0x108] sm:$0xff]
                %5334 = vst [vmem:[%s5266 + $0x198] sm:$0xff] %v5333
                %v5335 = vld [vmem:[%s5265 + $0x110] sm:$0xff]
                %5336 = vst [vmem:[%s5266 + $0x1a0] sm:$0xff] %v5335
                %v5337 = vld [vmem:[%s5265 + $0x118] sm:$0xff]
                %5338 = vst [vmem:[%s5266 + $0x1a8] sm:$0xff] %v5337
                %v5339 = vld [vmem:[%s5265 + $0x120] sm:$0xff]
                %5340 = vst [vmem:[%s5266 + $0x240] sm:$0xff] %v5339
                %v5341 = vld [vmem:[%s5265 + $0x128] sm:$0xff]
                %5342 = vst [vmem:[%s5266 + $0x248] sm:$0xff] %v5341
                %v5343 = vld [vmem:[%s5265 + $0x130] sm:$0xff]
                %5344 = vst [vmem:[%s5266 + $0x250] sm:$0xff] %v5343
                %v5345 = vld [vmem:[%s5265 + $0x138] sm:$0xff]
                %5346 = vst [vmem:[%s5266 + $0x258] sm:$0xff] %v5345
                %v5347 = vld [vmem:[%s5265 + $0x140] sm:$0xff]
                %5348 = vst [vmem:[%s5266 + $0x260] sm:$0xff] %v5347
                %v5349 = vld [vmem:[%s5265 + $0x148] sm:$0xff]
                %5350 = vst [vmem:[%s5266 + $0x268] sm:$0xff] %v5349
                %v5351 = vld [vmem:[%s5265 + $0x150] sm:$0xff]
                %5352 = vst [vmem:[%s5266 + $0x270] sm:$0xff] %v5351
                %v5353 = vld [vmem:[%s5265 + $0x158] sm:$0xff]
                %5354 = vst [vmem:[%s5266 + $0x278] sm:$0xff] %v5353
                %v5355 = vld [vmem:[%s5265 + $0x160] sm:$0xff]
                %5356 = vst [vmem:[%s5266 + $0x280] sm:$0xff] %v5355
                %v5357 = vld [vmem:[%s5265 + $0x168] sm:$0xff]
                %5358 = vst [vmem:[%s5266 + $0x288] sm:$0xff] %v5357
                %v5359 = vld [vmem:[%s5265 + $0x170] sm:$0xff]
                %5360 = vst [vmem:[%s5266 + $0x290] sm:$0xff] %v5359
                %v5361 = vld [vmem:[%s5265 + $0x178] sm:$0xff]
                %5362 = vst [vmem:[%s5266 + $0x298] sm:$0xff] %v5361
                %v5363 = vld [vmem:[%s5265 + $0x180] sm:$0xff]
                %5364 = vst [vmem:[%s5266 + $0x2a0] sm:$0xff] %v5363
                %v5365 = vld [vmem:[%s5265 + $0x188] sm:$0xff]
                %5366 = vst [vmem:[%s5266 + $0x2a8] sm:$0xff] %v5365
                %v5367 = vld [vmem:[%s5265 + $0x190] sm:$0xff]
                %5368 = vst [vmem:[%s5266 + $0x2b0] sm:$0xff] %v5367
                %v5369 = vld [vmem:[%s5265 + $0x198] sm:$0xff]
                %5370 = vst [vmem:[%s5266 + $0x2b8] sm:$0xff] %v5369
                %v5371 = vld [vmem:[%s5265 + $0x1a0] sm:$0xff]
                %5372 = vst [vmem:[%s5266 + $0x2c0] sm:$0xff] %v5371
                %v5373 = vld [vmem:[%s5265 + $0x1a8] sm:$0xff]
                %5374 = vst [vmem:[%s5266 + $0x2c8] sm:$0xff] %v5373
                %v5375 = vld [vmem:[%s5265 + $0x1b0] sm:$0xff]
                %5376 = vst [vmem:[%s5266 + $0x360] sm:$0xff] %v5375
                %v5377 = vld [vmem:[%s5265 + $0x1b8] sm:$0xff]
                %5378 = vst [vmem:[%s5266 + $0x368] sm:$0xff] %v5377
                %v5379 = vld [vmem:[%s5265 + $0x1c0] sm:$0xff]
                %5380 = vst [vmem:[%s5266 + $0x370] sm:$0xff] %v5379
                %v5381 = vld [vmem:[%s5265 + $0x1c8] sm:$0xff]
                %5382 = vst [vmem:[%s5266 + $0x378] sm:$0xff] %v5381
                %v5383 = vld [vmem:[%s5265 + $0x1d0] sm:$0xff]
                %5384 = vst [vmem:[%s5266 + $0x380] sm:$0xff] %v5383
                %v5385 = vld [vmem:[%s5265 + $0x1d8] sm:$0xff]
                %5386 = vst [vmem:[%s5266 + $0x388] sm:$0xff] %v5385
                %v5387 = vld [vmem:[%s5265 + $0x1e0] sm:$0xff]
                %5388 = vst [vmem:[%s5266 + $0x390] sm:$0xff] %v5387
                %v5389 = vld [vmem:[%s5265 + $0x1e8] sm:$0xff]
                %5390 = vst [vmem:[%s5266 + $0x398] sm:$0xff] %v5389
                %v5391 = vld [vmem:[%s5265 + $0x1f0] sm:$0xff]
                %5392 = vst [vmem:[%s5266 + $0x3a0] sm:$0xff] %v5391
                %v5393 = vld [vmem:[%s5265 + $0x1f8] sm:$0xff]
                %5394 = vst [vmem:[%s5266 + $0x3a8] sm:$0xff] %v5393
                %v5395 = vld [vmem:[%s5265 + $0x200] sm:$0xff]
                %5396 = vst [vmem:[%s5266 + $0x3b0] sm:$0xff] %v5395
                %v5397 = vld [vmem:[%s5265 + $0x208] sm:$0xff]
                %5398 = vst [vmem:[%s5266 + $0x3b8] sm:$0xff] %v5397
                %v5399 = vld [vmem:[%s5265 + $0x210] sm:$0xff]
                %5400 = vst [vmem:[%s5266 + $0x3c0] sm:$0xff] %v5399
                %v5401 = vld [vmem:[%s5265 + $0x218] sm:$0xff]
                %5402 = vst [vmem:[%s5266 + $0x3c8] sm:$0xff] %v5401
                %v5403 = vld [vmem:[%s5265 + $0x220] sm:$0xff]
                %5404 = vst [vmem:[%s5266 + $0x3d0] sm:$0xff] %v5403
                %v5405 = vld [vmem:[%s5265 + $0x228] sm:$0xff]
                %5406 = vst [vmem:[%s5266 + $0x3d8] sm:$0xff] %v5405
                %v5407 = vld [vmem:[%s5265 + $0x230] sm:$0xff]
                %5408 = vst [vmem:[%s5266 + $0x3e0] sm:$0xff] %v5407
                %v5409 = vld [vmem:[%s5265 + $0x238] sm:$0xff]
                %5410 = vst [vmem:[%s5266 + $0x3e8] sm:$0xff] %v5409
              $region57: #{tpu_custom_call.1} parent=51 // loop_footer
                %s5264 = sadd.s32 1, %s5260
              $region58: #{tpu_custom_call.1} parent=51 // loop_footer_branch
                %5259 = sbr.rel target = $region54
              $region59: #{tpu_custom_call.1} parent=51 // loop_exit
                _
            $region52: #{tpu_custom_call.1} parent=43 // pred_fallthru
              _
          $region44: #{tpu_custom_call.1} parent=39 // pred_fallthru
            _
          %5567 = vnop
        $region40: #{tpu_custom_call.1} parent=31 // pred_fallthru
          _
      $region32: #{tpu_custom_call.1} parent=5 // pred_fallthru
        _
      %p5568 = scmp.le.s32.totalorder 2, %s10
      // Predicated region
      $region75: #{tpu_custom_call.1} parent=5 // pred_check
        %p5569 = pneg %p5568
      $region76: #{tpu_custom_call.1} parent=5 // pred_check_branch
        %5571 = sbr.rel (%p5569) target = $region78
      $region77: #{tpu_custom_call.1} parent=5 // pred_region
        %s5572 = ssub.s32 %s10, 2
        // Predicated region
        $region79: #{tpu_custom_call.1} parent=77 // pred_check
          %p5573 = pneg %p123
        $region80: #{tpu_custom_call.1} parent=77 // pred_check_branch
          %5575 = sbr.rel (%p5573) target = $region82
        $region81: #{tpu_custom_call.1} parent=77 // pred_region
          %s5576 = sand.u32 %s108, 1
          %s5577 = sand.u32 %s108, 1
          %s5578 = smul.addr %s5577, 576
          %s5579 = scalar_lea.vmem [#allocation5], %s5578
        $region82: #{tpu_custom_call.1} parent=77 // pred_fallthru
          _
      $region78: #{tpu_custom_call.1} parent=5 // pred_fallthru
        _
    $region6: #{tpu_custom_call.1} parent=1 // loop_footer
      %s14 = sadd.s32 1, %s10
    $region7: #{tpu_custom_call.1} parent=1 // loop_footer_branch
      %9 = sbr.rel target = $region3
    $region8: #{tpu_custom_call.1} parent=1 // loop_exit
      _
    %5580 = vsyncpa [#allocation4], 1
    %s5581 = scalar_lea.sflag [#allocation4], 1
    %5582 = vsyncpa %s5581, 1

</llo_original>
